<compile_context>
chip_gen: v6e
topology: v6e:2x2x1
jax: 0.10.0
libtpu: 0.0.40
codegen_flags: <defaults>
</compile_context>

<pallas_src>
import math

import jax
import jax.numpy as jnp
from jax.experimental import pallas as pl
from jax.experimental.pallas import tpu as pltpu


def _decoder_gru_fc_kernel(x_ref, wih_ref, whh_ref, bih_ref, bhhn_ref,
                           w1_ref, b1_ref, w2_ref, b2_ref, out_ref):
    """Fused GRU + fc1/ReLU/fc2 forward (eval mode).

    x_ref    : (S*Bp, D)  bf16, time-major rows (row = t*Bp + b), batch padded to Bp
    wih_ref  : (D, 3H)    bf16, transposed weight_ih  (gate order r|z|n)
    whh_ref  : (H, 3H)    bf16, transposed weight_hh
    bih_ref  : (1, 3H)    f32, b_ih with b_hh(r), b_hh(z) folded in
    bhhn_ref : (1, H)     f32, b_hh(n) only
    w1_ref   : (H, F)     bf16, transposed fc1 weight
    b1_ref   : (1, F)     f32, fc1 bias
    w2_ref   : (1, F)     f32, fc2 weight (single output row)
    b2_ref   : (1, 1)     f32, fc2 bias
    out_ref  : (Bp, 1)    f32
    """
    Bp = out_ref.shape[0]
    S = x_ref.shape[0] // Bp
    H = whh_ref.shape[0]

    # Hoist constant loads out of the recurrence loop.
    wih = wih_ref[...]
    whh = whh_ref[...]
    bih = bih_ref[...]
    bhh_n = bhhn_ref[...]

    # --- Input projection ---------------------------------------------------
    # t=0 rows first (small matmul), then the remaining (S-1)*Bp rows in one
    # lane-dense (3H = 768) matmul, so step 0 of the serial recurrence does not
    # have to wait for the whole projection to drain.
    gi0 = jnp.dot(x_ref[0:Bp, :], wih, preferred_element_type=jnp.float32) + bih
    if S > 1:
        gi_rest = jnp.dot(x_ref[Bp:, :], wih,
                          preferred_element_type=jnp.float32) + bih          # ((S-1)*Bp, 3H)

    # --- t = 0 : h0 == 0, so gh == 0 -> skip the h @ W_hh matmul -------------
    r = jax.nn.sigmoid(gi0[:, 0:H])                 # b_hh(r) already folded into bih
    z = jax.nn.sigmoid(gi0[:, H:2 * H])             # b_hh(z) already folded into bih
    n = jnp.tanh(gi0[:, 2 * H:3 * H] + r * bhh_n)
    h = (1.0 - z) * n                               # + z * h0, h0 == 0

    # --- Sequential GRU recurrence (statically unrolled; S is small) ---------
    for t in range(1, S):
        gi = gi_rest[(t - 1) * Bp:t * Bp, :]                                  # (Bp, 3H), tile-aligned
        gh = jnp.dot(h.astype(jnp.bfloat16), whh,
                     preferred_element_type=jnp.float32)                      # (Bp, 3H), no bias
        r = jax.nn.sigmoid(gi[:, 0:H] + gh[:, 0:H])
        z = jax.nn.sigmoid(gi[:, H:2 * H] + gh[:, H:2 * H])
        n = jnp.tanh(gi[:, 2 * H:3 * H] + r * (gh[:, 2 * H:3 * H] + bhh_n))
        h = (1.0 - z) * n + z * h

    # --- fc1 + ReLU -----------------------------------------------------------
    y1 = jnp.dot(h.astype(jnp.bfloat16), w1_ref[...],
                 preferred_element_type=jnp.float32) + b1_ref[...]
    y1 = jnp.maximum(y1, 0.0)

    # F.dropout(p, training=False) is the identity in eval mode.
    # TODO(synk): training-mode dropout would need pltpu.prng_seed/prng_random_bits mask.

    # --- fc2: output width 1 -> VPU mul + lane reduce (no 1-wide MXU matmul) --
    y2 = jnp.sum(y1 * w2_ref[...], axis=-1, keepdims=True) + b2_ref[...]      # (Bp, 1)
    out_ref[...] = y2.astype(out_ref.dtype)


def decoder_gru_forward(x, params):
    """x: (B, S, D) float32. Returns (B, 1), matching DecoderGRU.forward (eval)."""
    B, S, D = x.shape
    H = params["w_hh"].shape[1]

    # Pad batch so every per-timestep slab is (16,128)-bf16 / (8,128)-f32 aligned.
    Bp = max(16, ((B + 15) // 16) * 16)
    x_p = jnp.pad(x, ((0, Bp - B), (0, 0), (0, 0)))

    # Layout plumbing on the XLA side (free): time-major rows so each timestep's
    # slice of the precomputed input projection is a contiguous, tile-aligned
    # sublane block; transposed + bf16-cast weights so every matmul is lane-dense
    # and runs in native bf16 on the MXU (accumulation stays f32 in the kernel).
    x2d = jnp.transpose(x_p, (1, 0, 2)).reshape(S * Bp, D).astype(jnp.bfloat16)
    wih_t = params["w_ih"].T.astype(jnp.bfloat16)                 # (D, 3H)
    whh_t = params["w_hh"].T.astype(jnp.bfloat16)                 # (H, 3H)

    # Fold b_hh(r), b_hh(z) into b_ih; keep b_hh(n) separate (PyTorch n-gate form).
    bih = params["b_ih"]
    bhh = params["b_hh"]
    bih_folded = (bih.at[:2 * H].add(bhh[:2 * H])).reshape(1, 3 * H).astype(jnp.float32)
    bhh_n = bhh[2 * H:].reshape(1, H).astype(jnp.float32)

    w1_t = params["fc1_w"].T.astype(jnp.bfloat16)                 # (H, F)
    b1 = params["fc1_b"].reshape(1, -1).astype(jnp.float32)       # (1, F)
    w2 = params["fc2_w"].reshape(1, -1).astype(jnp.float32)       # (1, F)
    b2 = params["fc2_b"].reshape(1, 1).astype(jnp.float32)        # (1, 1)

    out_p = pl.pallas_call(
        _decoder_gru_fc_kernel,
        out_shape=jax.ShapeDtypeStruct((Bp, 1), jnp.float32),
        # No grid: every operand is a single whole-array block resident in VMEM
        # (~1 MiB total in bf16 at the default module dims), so there is no
        # per-step pipeline overhead and weights are loaded exactly once.
        compiler_params=pltpu.CompilerParams(vmem_limit_bytes=32 * 1024 * 1024),
    )(x2d, wih_t, whh_t, bih_folded, bhh_n, w1_t, b1, w2, b2)

    return out_p[:B].astype(x.dtype)


def decoder_gru_reference(x, params):
    """Pure-JAX f32 reference matching torch.nn.GRU(batch_first) + fc1/ReLU/fc2 (eval)."""
    B, S, D = x.shape
    H = params["w_hh"].shape[1]
    h = jnp.zeros((B, H), jnp.float32)
    for t in range(S):
        gi = x[:, t, :] @ params["w_ih"].T + params["b_ih"]
        gh = h @ params["w_hh"].T + params["b_hh"]
        r = jax.nn.sigmoid(gi[:, 0:H] + gh[:, 0:H])
        z = jax.nn.sigmoid(gi[:, H:2 * H] + gh[:, H:2 * H])
        n = jnp.tanh(gi[:, 2 * H:3 * H] + r * gh[:, 2 * H:3 * H])
        h = (1.0 - z) * n + z * h
    y = jnp.maximum(h @ params["fc1_w"].T + params["fc1_b"], 0.0)
    return y @ params["fc2_w"].T + params["fc2_b"]


if __name__ == "__main__":
    # Small shapes consistent with the module defaults:
    # CNN_embed_dim=256, h_RNN=256, h_FC_dim=128; batch=2, seq=8.
    B, S = 2, 8
    D, H, F_DIM = 256, 256, 128

    key = jax.random.PRNGKey(0)
    ks = jax.random.split(key, 9)
    bg = 1.0 / math.sqrt(H)       # PyTorch GRU / fc1 init bound
    bf = 1.0 / math.sqrt(F_DIM)   # fc2 init bound
    params = {
        "w_ih": jax.random.uniform(ks[0], (3 * H, D), jnp.float32, -bg, bg),
        "w_hh": jax.random.uniform(ks[1], (3 * H, H), jnp.float32, -bg, bg),
        "b_ih": jax.random.uniform(ks[2], (3 * H,), jnp.float32, -bg, bg),
        "b_hh": jax.random.uniform(ks[3], (3 * H,), jnp.float32, -bg, bg),
        "fc1_w": jax.random.uniform(ks[4], (F_DIM, H), jnp.float32, -bg, bg),
        "fc1_b": jax.random.uniform(ks[5], (F_DIM,), jnp.float32, -bg, bg),
        "fc2_w": jax.random.uniform(ks[6], (1, F_DIM), jnp.float32, -bf, bf),
        "fc2_b": jax.random.uniform(ks[7], (1,), jnp.float32, -bf, bf),
    }
    x = jax.random.normal(ks[8], (B, S, D), dtype=jnp.float32)

    out = decoder_gru_forward(x, params)
    out = jax.block_until_ready(out)

    ref = decoder_gru_reference(x, params)
    assert out.shape == (B, 1)
    max_err = jnp.max(jnp.abs(out - ref))
    assert jnp.allclose(out, ref, atol=1e-2, rtol=1e-2), \
        f"mismatch vs reference: max abs err {max_err}"

    print("KERNEL_OK")
</pallas_src>

<mosaic_0001>
module attributes {stable_mosaic.version = 11 : i64} {
  func.func @_decoder_gru_fc_kernel(%arg0: memref<128x256xbf16, #tpu.memory_space<vmem>>, %arg1: memref<256x768xbf16, #tpu.memory_space<vmem>>, %arg2: memref<256x768xbf16, #tpu.memory_space<vmem>>, %arg3: memref<1x768xf32, #tpu.memory_space<vmem>>, %arg4: memref<1x256xf32, #tpu.memory_space<vmem>>, %arg5: memref<256x128xbf16, #tpu.memory_space<vmem>>, %arg6: memref<1x128xf32, #tpu.memory_space<vmem>>, %arg7: memref<1x128xf32, #tpu.memory_space<vmem>>, %arg8: memref<1x1xf32, #tpu.memory_space<vmem>>, %arg9: memref<16x1xf32, #tpu.memory_space<vmem>>) attributes {dimension_semantics = [], scalar_prefetch = 0 : i64, scratch_operands = 0 : i64, tpu.core_type = #tpu.core_type<tc>} {
    %c0 = arith.constant 0 : index
    %c0_0 = arith.constant 0 : index
    %0 = vector.load %arg1[%c0, %c0_0] : memref<256x768xbf16, #tpu.memory_space<vmem>>, vector<256x768xbf16>
    %c0_1 = arith.constant 0 : index
    %c0_2 = arith.constant 0 : index
    %1 = vector.load %arg2[%c0_1, %c0_2] : memref<256x768xbf16, #tpu.memory_space<vmem>>, vector<256x768xbf16>
    %c0_3 = arith.constant 0 : index
    %c0_4 = arith.constant 0 : index
    %2 = vector.load %arg3[%c0_3, %c0_4] : memref<1x768xf32, #tpu.memory_space<vmem>>, vector<1x768xf32>
    %c0_5 = arith.constant 0 : index
    %c0_6 = arith.constant 0 : index
    %3 = vector.load %arg4[%c0_5, %c0_6] : memref<1x256xf32, #tpu.memory_space<vmem>>, vector<1x256xf32>
    %c0_7 = arith.constant 0 : index
    %c0_8 = arith.constant 0 : index
    %4 = vector.load %arg0[%c0_7, %c0_8] : memref<128x256xbf16, #tpu.memory_space<vmem>>, vector<16x256xbf16>
    %cst = arith.constant dense<0.000000e+00> : vector<16x768xf32>
    %5 = tpu.matmul %4, %0, %cst {dimension_numbers = #tpu.dot_dimension_numbers<[1], [0], [0], [1], [0, 0, 1, 1], [], []>} : vector<16x256xbf16>, vector<256x768xbf16>, vector<16x768xf32> -> vector<16x768xf32>
    %6 = vector.broadcast %2 : vector<1x768xf32> to vector<16x768xf32>
    %7 = arith.addf %5, %6 : vector<16x768xf32>
    %c16 = arith.constant 16 : index
    %c0_9 = arith.constant 0 : index
    %8 = vector.load %arg0[%c16, %c0_9] : memref<128x256xbf16, #tpu.memory_space<vmem>>, vector<112x256xbf16>
    %cst_10 = arith.constant dense<0.000000e+00> : vector<112x768xf32>
    %9 = tpu.matmul %8, %0, %cst_10 {dimension_numbers = #tpu.dot_dimension_numbers<[1], [0], [0], [1], [0, 0, 1, 1], [], []>} : vector<112x256xbf16>, vector<256x768xbf16>, vector<112x768xf32> -> vector<112x768xf32>
    %10 = vector.broadcast %2 : vector<1x768xf32> to vector<112x768xf32>
    %11 = arith.addf %9, %10 : vector<112x768xf32>
    %12 = vector.extract_strided_slice %7 {offsets = [0, 0], sizes = [16, 256], strides = [1, 1]} : vector<16x768xf32> to vector<16x256xf32>
    %13 = arith.negf %12 : vector<16x256xf32>
    %14 = math.exp %13 : vector<16x256xf32>
    %cst_11 = arith.constant 1.000000e+00 : f32
    %15 = vector.broadcast %cst_11 : f32 to vector<16x256xf32>
    %16 = arith.addf %15, %14 : vector<16x256xf32>
    %17 = arith.divf %15, %16 : vector<16x256xf32>
    %18 = vector.extract_strided_slice %7 {offsets = [0, 256], sizes = [16, 256], strides = [1, 1]} : vector<16x768xf32> to vector<16x256xf32>
    %19 = arith.negf %18 : vector<16x256xf32>
    %20 = math.exp %19 : vector<16x256xf32>
    %cst_12 = arith.constant 1.000000e+00 : f32
    %21 = vector.broadcast %cst_12 : f32 to vector<16x256xf32>
    %22 = arith.addf %21, %20 : vector<16x256xf32>
    %23 = arith.divf %21, %22 : vector<16x256xf32>
    %24 = vector.extract_strided_slice %7 {offsets = [0, 512], sizes = [16, 256], strides = [1, 1]} : vector<16x768xf32> to vector<16x256xf32>
    %25 = vector.broadcast %3 : vector<1x256xf32> to vector<16x256xf32>
    %26 = arith.mulf %17, %25 : vector<16x256xf32>
    %27 = arith.addf %24, %26 : vector<16x256xf32>
    %28 = math.tanh %27 : vector<16x256xf32>
    %cst_13 = arith.constant 1.000000e+00 : f32
    %29 = vector.broadcast %cst_13 : f32 to vector<16x256xf32>
    %30 = arith.subf %29, %23 : vector<16x256xf32>
    %31 = arith.mulf %30, %28 : vector<16x256xf32>
    %32 = vector.extract_strided_slice %11 {offsets = [0, 0], sizes = [16, 768], strides = [1, 1]} : vector<112x768xf32> to vector<16x768xf32>
    %33 = arith.truncf %31 : vector<16x256xf32> to vector<16x256xbf16>
    %cst_14 = arith.constant dense<0.000000e+00> : vector<16x768xf32>
    %34 = tpu.matmul %33, %1, %cst_14 {dimension_numbers = #tpu.dot_dimension_numbers<[1], [0], [0], [1], [0, 0, 1, 1], [], []>} : vector<16x256xbf16>, vector<256x768xbf16>, vector<16x768xf32> -> vector<16x768xf32>
    %35 = vector.extract_strided_slice %32 {offsets = [0, 0], sizes = [16, 256], strides = [1, 1]} : vector<16x768xf32> to vector<16x256xf32>
    %36 = vector.extract_strided_slice %34 {offsets = [0, 0], sizes = [16, 256], strides = [1, 1]} : vector<16x768xf32> to vector<16x256xf32>
    %37 = arith.addf %35, %36 : vector<16x256xf32>
    %38 = arith.negf %37 : vector<16x256xf32>
    %39 = math.exp %38 : vector<16x256xf32>
    %cst_15 = arith.constant 1.000000e+00 : f32
    %40 = vector.broadcast %cst_15 : f32 to vector<16x256xf32>
    %41 = arith.addf %40, %39 : vector<16x256xf32>
    %42 = arith.divf %40, %41 : vector<16x256xf32>
    %43 = vector.extract_strided_slice %32 {offsets = [0, 256], sizes = [16, 256], strides = [1, 1]} : vector<16x768xf32> to vector<16x256xf32>
    %44 = vector.extract_strided_slice %34 {offsets = [0, 256], sizes = [16, 256], strides = [1, 1]} : vector<16x768xf32> to vector<16x256xf32>
    %45 = arith.addf %43, %44 : vector<16x256xf32>
    %46 = arith.negf %45 : vector<16x256xf32>
    %47 = math.exp %46 : vector<16x256xf32>
    %cst_16 = arith.constant 1.000000e+00 : f32
    %48 = vector.broadcast %cst_16 : f32 to vector<16x256xf32>
    %49 = arith.addf %48, %47 : vector<16x256xf32>
    %50 = arith.divf %48, %49 : vector<16x256xf32>
    %51 = vector.extract_strided_slice %32 {offsets = [0, 512], sizes = [16, 256], strides = [1, 1]} : vector<16x768xf32> to vector<16x256xf32>
    %52 = vector.extract_strided_slice %34 {offsets = [0, 512], sizes = [16, 256], strides = [1, 1]} : vector<16x768xf32> to vector<16x256xf32>
    %53 = vector.broadcast %3 : vector<1x256xf32> to vector<16x256xf32>
    %54 = arith.addf %52, %53 : vector<16x256xf32>
    %55 = arith.mulf %42, %54 : vector<16x256xf32>
    %56 = arith.addf %51, %55 : vector<16x256xf32>
    %57 = math.tanh %56 : vector<16x256xf32>
    %cst_17 = arith.constant 1.000000e+00 : f32
    %58 = vector.broadcast %cst_17 : f32 to vector<16x256xf32>
    %59 = arith.subf %58, %50 : vector<16x256xf32>
    %60 = arith.mulf %59, %57 : vector<16x256xf32>
    %61 = arith.mulf %50, %31 : vector<16x256xf32>
    %62 = arith.addf %60, %61 : vector<16x256xf32>
    %63 = vector.extract_strided_slice %11 {offsets = [16, 0], sizes = [16, 768], strides = [1, 1]} : vector<112x768xf32> to vector<16x768xf32>
    %64 = arith.truncf %62 : vector<16x256xf32> to vector<16x256xbf16>
    %cst_18 = arith.constant dense<0.000000e+00> : vector<16x768xf32>
    %65 = tpu.matmul %64, %1, %cst_18 {dimension_numbers = #tpu.dot_dimension_numbers<[1], [0], [0], [1], [0, 0, 1, 1], [], []>} : vector<16x256xbf16>, vector<256x768xbf16>, vector<16x768xf32> -> vector<16x768xf32>
    %66 = vector.extract_strided_slice %63 {offsets = [0, 0], sizes = [16, 256], strides = [1, 1]} : vector<16x768xf32> to vector<16x256xf32>
    %67 = vector.extract_strided_slice %65 {offsets = [0, 0], sizes = [16, 256], strides = [1, 1]} : vector<16x768xf32> to vector<16x256xf32>
    %68 = arith.addf %66, %67 : vector<16x256xf32>
    %69 = arith.negf %68 : vector<16x256xf32>
    %70 = math.exp %69 : vector<16x256xf32>
    %cst_19 = arith.constant 1.000000e+00 : f32
    %71 = vector.broadcast %cst_19 : f32 to vector<16x256xf32>
    %72 = arith.addf %71, %70 : vector<16x256xf32>
    %73 = arith.divf %71, %72 : vector<16x256xf32>
    %74 = vector.extract_strided_slice %63 {offsets = [0, 256], sizes = [16, 256], strides = [1, 1]} : vector<16x768xf32> to vector<16x256xf32>
    %75 = vector.extract_strided_slice %65 {offsets = [0, 256], sizes = [16, 256], strides = [1, 1]} : vector<16x768xf32> to vector<16x256xf32>
    %76 = arith.addf %74, %75 : vector<16x256xf32>
    %77 = arith.negf %76 : vector<16x256xf32>
    %78 = math.exp %77 : vector<16x256xf32>
    %cst_20 = arith.constant 1.000000e+00 : f32
    %79 = vector.broadcast %cst_20 : f32 to vector<16x256xf32>
    %80 = arith.addf %79, %78 : vector<16x256xf32>
    %81 = arith.divf %79, %80 : vector<16x256xf32>
    %82 = vector.extract_strided_slice %63 {offsets = [0, 512], sizes = [16, 256], strides = [1, 1]} : vector<16x768xf32> to vector<16x256xf32>
    %83 = vector.extract_strided_slice %65 {offsets = [0, 512], sizes = [16, 256], strides = [1, 1]} : vector<16x768xf32> to vector<16x256xf32>
    %84 = vector.broadcast %3 : vector<1x256xf32> to vector<16x256xf32>
    %85 = arith.addf %83, %84 : vector<16x256xf32>
    %86 = arith.mulf %73, %85 : vector<16x256xf32>
    %87 = arith.addf %82, %86 : vector<16x256xf32>
    %88 = math.tanh %87 : vector<16x256xf32>
    %cst_21 = arith.constant 1.000000e+00 : f32
    %89 = vector.broadcast %cst_21 : f32 to vector<16x256xf32>
    %90 = arith.subf %89, %81 : vector<16x256xf32>
    %91 = arith.mulf %90, %88 : vector<16x256xf32>
    %92 = arith.mulf %81, %62 : vector<16x256xf32>
    %93 = arith.addf %91, %92 : vector<16x256xf32>
    %94 = vector.extract_strided_slice %11 {offsets = [32, 0], sizes = [16, 768], strides = [1, 1]} : vector<112x768xf32> to vector<16x768xf32>
    %95 = arith.truncf %93 : vector<16x256xf32> to vector<16x256xbf16>
    %cst_22 = arith.constant dense<0.000000e+00> : vector<16x768xf32>
    %96 = tpu.matmul %95, %1, %cst_22 {dimension_numbers = #tpu.dot_dimension_numbers<[1], [0], [0], [1], [0, 0, 1, 1], [], []>} : vector<16x256xbf16>, vector<256x768xbf16>, vector<16x768xf32> -> vector<16x768xf32>
    %97 = vector.extract_strided_slice %94 {offsets = [0, 0], sizes = [16, 256], strides = [1, 1]} : vector<16x768xf32> to vector<16x256xf32>
    %98 = vector.extract_strided_slice %96 {offsets = [0, 0], sizes = [16, 256], strides = [1, 1]} : vector<16x768xf32> to vector<16x256xf32>
    %99 = arith.addf %97, %98 : vector<16x256xf32>
    %100 = arith.negf %99 : vector<16x256xf32>
    %101 = math.exp %100 : vector<16x256xf32>
    %cst_23 = arith.constant 1.000000e+00 : f32
    %102 = vector.broadcast %cst_23 : f32 to vector<16x256xf32>
    %103 = arith.addf %102, %101 : vector<16x256xf32>
    %104 = arith.divf %102, %103 : vector<16x256xf32>
    %105 = vector.extract_strided_slice %94 {offsets = [0, 256], sizes = [16, 256], strides = [1, 1]} : vector<16x768xf32> to vector<16x256xf32>
    %106 = vector.extract_strided_slice %96 {offsets = [0, 256], sizes = [16, 256], strides = [1, 1]} : vector<16x768xf32> to vector<16x256xf32>
    %107 = arith.addf %105, %106 : vector<16x256xf32>
    %108 = arith.negf %107 : vector<16x256xf32>
    %109 = math.exp %108 : vector<16x256xf32>
    %cst_24 = arith.constant 1.000000e+00 : f32
    %110 = vector.broadcast %cst_24 : f32 to vector<16x256xf32>
    %111 = arith.addf %110, %109 : vector<16x256xf32>
    %112 = arith.divf %110, %111 : vector<16x256xf32>
    %113 = vector.extract_strided_slice %94 {offsets = [0, 512], sizes = [16, 256], strides = [1, 1]} : vector<16x768xf32> to vector<16x256xf32>
    %114 = vector.extract_strided_slice %96 {offsets = [0, 512], sizes = [16, 256], strides = [1, 1]} : vector<16x768xf32> to vector<16x256xf32>
    %115 = vector.broadcast %3 : vector<1x256xf32> to vector<16x256xf32>
    %116 = arith.addf %114, %115 : vector<16x256xf32>
    %117 = arith.mulf %104, %116 : vector<16x256xf32>
    %118 = arith.addf %113, %117 : vector<16x256xf32>
    %119 = math.tanh %118 : vector<16x256xf32>
    %cst_25 = arith.constant 1.000000e+00 : f32
    %120 = vector.broadcast %cst_25 : f32 to vector<16x256xf32>
    %121 = arith.subf %120, %112 : vector<16x256xf32>
    %122 = arith.mulf %121, %119 : vector<16x256xf32>
    %123 = arith.mulf %112, %93 : vector<16x256xf32>
    %124 = arith.addf %122, %123 : vector<16x256xf32>
    %125 = vector.extract_strided_slice %11 {offsets = [48, 0], sizes = [16, 768], strides = [1, 1]} : vector<112x768xf32> to vector<16x768xf32>
    %126 = arith.truncf %124 : vector<16x256xf32> to vector<16x256xbf16>
    %cst_26 = arith.constant dense<0.000000e+00> : vector<16x768xf32>
    %127 = tpu.matmul %126, %1, %cst_26 {dimension_numbers = #tpu.dot_dimension_numbers<[1], [0], [0], [1], [0, 0, 1, 1], [], []>} : vector<16x256xbf16>, vector<256x768xbf16>, vector<16x768xf32> -> vector<16x768xf32>
    %128 = vector.extract_strided_slice %125 {offsets = [0, 0], sizes = [16, 256], strides = [1, 1]} : vector<16x768xf32> to vector<16x256xf32>
    %129 = vector.extract_strided_slice %127 {offsets = [0, 0], sizes = [16, 256], strides = [1, 1]} : vector<16x768xf32> to vector<16x256xf32>
    %130 = arith.addf %128, %129 : vector<16x256xf32>
    %131 = arith.negf %130 : vector<16x256xf32>
    %132 = math.exp %131 : vector<16x256xf32>
    %cst_27 = arith.constant 1.000000e+00 : f32
    %133 = vector.broadcast %cst_27 : f32 to vector<16x256xf32>
    %134 = arith.addf %133, %132 : vector<16x256xf32>
    %135 = arith.divf %133, %134 : vector<16x256xf32>
    %136 = vector.extract_strided_slice %125 {offsets = [0, 256], sizes = [16, 256], strides = [1, 1]} : vector<16x768xf32> to vector<16x256xf32>
    %137 = vector.extract_strided_slice %127 {offsets = [0, 256], sizes = [16, 256], strides = [1, 1]} : vector<16x768xf32> to vector<16x256xf32>
    %138 = arith.addf %136, %137 : vector<16x256xf32>
    %139 = arith.negf %138 : vector<16x256xf32>
    %140 = math.exp %139 : vector<16x256xf32>
    %cst_28 = arith.constant 1.000000e+00 : f32
    %141 = vector.broadcast %cst_28 : f32 to vector<16x256xf32>
    %142 = arith.addf %141, %140 : vector<16x256xf32>
    %143 = arith.divf %141, %142 : vector<16x256xf32>
    %144 = vector.extract_strided_slice %125 {offsets = [0, 512], sizes = [16, 256], strides = [1, 1]} : vector<16x768xf32> to vector<16x256xf32>
    %145 = vector.extract_strided_slice %127 {offsets = [0, 512], sizes = [16, 256], strides = [1, 1]} : vector<16x768xf32> to vector<16x256xf32>
    %146 = vector.broadcast %3 : vector<1x256xf32> to vector<16x256xf32>
    %147 = arith.addf %145, %146 : vector<16x256xf32>
    %148 = arith.mulf %135, %147 : vector<16x256xf32>
    %149 = arith.addf %144, %148 : vector<16x256xf32>
    %150 = math.tanh %149 : vector<16x256xf32>
    %cst_29 = arith.constant 1.000000e+00 : f32
    %151 = vector.broadcast %cst_29 : f32 to vector<16x256xf32>
    %152 = arith.subf %151, %143 : vector<16x256xf32>
    %153 = arith.mulf %152, %150 : vector<16x256xf32>
    %154 = arith.mulf %143, %124 : vector<16x256xf32>
    %155 = arith.addf %153, %154 : vector<16x256xf32>
    %156 = vector.extract_strided_slice %11 {offsets = [64, 0], sizes = [16, 768], strides = [1, 1]} : vector<112x768xf32> to vector<16x768xf32>
    %157 = arith.truncf %155 : vector<16x256xf32> to vector<16x256xbf16>
    %cst_30 = arith.constant dense<0.000000e+00> : vector<16x768xf32>
    %158 = tpu.matmul %157, %1, %cst_30 {dimension_numbers = #tpu.dot_dimension_numbers<[1], [0], [0], [1], [0, 0, 1, 1], [], []>} : vector<16x256xbf16>, vector<256x768xbf16>, vector<16x768xf32> -> vector<16x768xf32>
    %159 = vector.extract_strided_slice %156 {offsets = [0, 0], sizes = [16, 256], strides = [1, 1]} : vector<16x768xf32> to vector<16x256xf32>
    %160 = vector.extract_strided_slice %158 {offsets = [0, 0], sizes = [16, 256], strides = [1, 1]} : vector<16x768xf32> to vector<16x256xf32>
    %161 = arith.addf %159, %160 : vector<16x256xf32>
    %162 = arith.negf %161 : vector<16x256xf32>
    %163 = math.exp %162 : vector<16x256xf32>
    %cst_31 = arith.constant 1.000000e+00 : f32
    %164 = vector.broadcast %cst_31 : f32 to vector<16x256xf32>
    %165 = arith.addf %164, %163 : vector<16x256xf32>
    %166 = arith.divf %164, %165 : vector<16x256xf32>
    %167 = vector.extract_strided_slice %156 {offsets = [0, 256], sizes = [16, 256], strides = [1, 1]} : vector<16x768xf32> to vector<16x256xf32>
    %168 = vector.extract_strided_slice %158 {offsets = [0, 256], sizes = [16, 256], strides = [1, 1]} : vector<16x768xf32> to vector<16x256xf32>
    %169 = arith.addf %167, %168 : vector<16x256xf32>
    %170 = arith.negf %169 : vector<16x256xf32>
    %171 = math.exp %170 : vector<16x256xf32>
    %cst_32 = arith.constant 1.000000e+00 : f32
    %172 = vector.broadcast %cst_32 : f32 to vector<16x256xf32>
    %173 = arith.addf %172, %171 : vector<16x256xf32>
    %174 = arith.divf %172, %173 : vector<16x256xf32>
    %175 = vector.extract_strided_slice %156 {offsets = [0, 512], sizes = [16, 256], strides = [1, 1]} : vector<16x768xf32> to vector<16x256xf32>
    %176 = vector.extract_strided_slice %158 {offsets = [0, 512], sizes = [16, 256], strides = [1, 1]} : vector<16x768xf32> to vector<16x256xf32>
    %177 = vector.broadcast %3 : vector<1x256xf32> to vector<16x256xf32>
    %178 = arith.addf %176, %177 : vector<16x256xf32>
    %179 = arith.mulf %166, %178 : vector<16x256xf32>
    %180 = arith.addf %175, %179 : vector<16x256xf32>
    %181 = math.tanh %180 : vector<16x256xf32>
    %cst_33 = arith.constant 1.000000e+00 : f32
    %182 = vector.broadcast %cst_33 : f32 to vector<16x256xf32>
    %183 = arith.subf %182, %174 : vector<16x256xf32>
    %184 = arith.mulf %183, %181 : vector<16x256xf32>
    %185 = arith.mulf %174, %155 : vector<16x256xf32>
    %186 = arith.addf %184, %185 : vector<16x256xf32>
    %187 = vector.extract_strided_slice %11 {offsets = [80, 0], sizes = [16, 768], strides = [1, 1]} : vector<112x768xf32> to vector<16x768xf32>
    %188 = arith.truncf %186 : vector<16x256xf32> to vector<16x256xbf16>
    %cst_34 = arith.constant dense<0.000000e+00> : vector<16x768xf32>
    %189 = tpu.matmul %188, %1, %cst_34 {dimension_numbers = #tpu.dot_dimension_numbers<[1], [0], [0], [1], [0, 0, 1, 1], [], []>} : vector<16x256xbf16>, vector<256x768xbf16>, vector<16x768xf32> -> vector<16x768xf32>
    %190 = vector.extract_strided_slice %187 {offsets = [0, 0], sizes = [16, 256], strides = [1, 1]} : vector<16x768xf32> to vector<16x256xf32>
    %191 = vector.extract_strided_slice %189 {offsets = [0, 0], sizes = [16, 256], strides = [1, 1]} : vector<16x768xf32> to vector<16x256xf32>
    %192 = arith.addf %190, %191 : vector<16x256xf32>
    %193 = arith.negf %192 : vector<16x256xf32>
    %194 = math.exp %193 : vector<16x256xf32>
    %cst_35 = arith.constant 1.000000e+00 : f32
    %195 = vector.broadcast %cst_35 : f32 to vector<16x256xf32>
    %196 = arith.addf %195, %194 : vector<16x256xf32>
    %197 = arith.divf %195, %196 : vector<16x256xf32>
    %198 = vector.extract_strided_slice %187 {offsets = [0, 256], sizes = [16, 256], strides = [1, 1]} : vector<16x768xf32> to vector<16x256xf32>
    %199 = vector.extract_strided_slice %189 {offsets = [0, 256], sizes = [16, 256], strides = [1, 1]} : vector<16x768xf32> to vector<16x256xf32>
    %200 = arith.addf %198, %199 : vector<16x256xf32>
    %201 = arith.negf %200 : vector<16x256xf32>
    %202 = math.exp %201 : vector<16x256xf32>
    %cst_36 = arith.constant 1.000000e+00 : f32
    %203 = vector.broadcast %cst_36 : f32 to vector<16x256xf32>
    %204 = arith.addf %203, %202 : vector<16x256xf32>
    %205 = arith.divf %203, %204 : vector<16x256xf32>
    %206 = vector.extract_strided_slice %187 {offsets = [0, 512], sizes = [16, 256], strides = [1, 1]} : vector<16x768xf32> to vector<16x256xf32>
    %207 = vector.extract_strided_slice %189 {offsets = [0, 512], sizes = [16, 256], strides = [1, 1]} : vector<16x768xf32> to vector<16x256xf32>
    %208 = vector.broadcast %3 : vector<1x256xf32> to vector<16x256xf32>
    %209 = arith.addf %207, %208 : vector<16x256xf32>
    %210 = arith.mulf %197, %209 : vector<16x256xf32>
    %211 = arith.addf %206, %210 : vector<16x256xf32>
    %212 = math.tanh %211 : vector<16x256xf32>
    %cst_37 = arith.constant 1.000000e+00 : f32
    %213 = vector.broadcast %cst_37 : f32 to vector<16x256xf32>
    %214 = arith.subf %213, %205 : vector<16x256xf32>
    %215 = arith.mulf %214, %212 : vector<16x256xf32>
    %216 = arith.mulf %205, %186 : vector<16x256xf32>
    %217 = arith.addf %215, %216 : vector<16x256xf32>
    %218 = vector.extract_strided_slice %11 {offsets = [96, 0], sizes = [16, 768], strides = [1, 1]} : vector<112x768xf32> to vector<16x768xf32>
    %219 = arith.truncf %217 : vector<16x256xf32> to vector<16x256xbf16>
    %cst_38 = arith.constant dense<0.000000e+00> : vector<16x768xf32>
    %220 = tpu.matmul %219, %1, %cst_38 {dimension_numbers = #tpu.dot_dimension_numbers<[1], [0], [0], [1], [0, 0, 1, 1], [], []>} : vector<16x256xbf16>, vector<256x768xbf16>, vector<16x768xf32> -> vector<16x768xf32>
    %221 = vector.extract_strided_slice %218 {offsets = [0, 0], sizes = [16, 256], strides = [1, 1]} : vector<16x768xf32> to vector<16x256xf32>
    %222 = vector.extract_strided_slice %220 {offsets = [0, 0], sizes = [16, 256], strides = [1, 1]} : vector<16x768xf32> to vector<16x256xf32>
    %223 = arith.addf %221, %222 : vector<16x256xf32>
    %224 = arith.negf %223 : vector<16x256xf32>
    %225 = math.exp %224 : vector<16x256xf32>
    %cst_39 = arith.constant 1.000000e+00 : f32
    %226 = vector.broadcast %cst_39 : f32 to vector<16x256xf32>
    %227 = arith.addf %226, %225 : vector<16x256xf32>
    %228 = arith.divf %226, %227 : vector<16x256xf32>
    %229 = vector.extract_strided_slice %218 {offsets = [0, 256], sizes = [16, 256], strides = [1, 1]} : vector<16x768xf32> to vector<16x256xf32>
    %230 = vector.extract_strided_slice %220 {offsets = [0, 256], sizes = [16, 256], strides = [1, 1]} : vector<16x768xf32> to vector<16x256xf32>
    %231 = arith.addf %229, %230 : vector<16x256xf32>
    %232 = arith.negf %231 : vector<16x256xf32>
    %233 = math.exp %232 : vector<16x256xf32>
    %cst_40 = arith.constant 1.000000e+00 : f32
    %234 = vector.broadcast %cst_40 : f32 to vector<16x256xf32>
    %235 = arith.addf %234, %233 : vector<16x256xf32>
    %236 = arith.divf %234, %235 : vector<16x256xf32>
    %237 = vector.extract_strided_slice %218 {offsets = [0, 512], sizes = [16, 256], strides = [1, 1]} : vector<16x768xf32> to vector<16x256xf32>
    %238 = vector.extract_strided_slice %220 {offsets = [0, 512], sizes = [16, 256], strides = [1, 1]} : vector<16x768xf32> to vector<16x256xf32>
    %239 = vector.broadcast %3 : vector<1x256xf32> to vector<16x256xf32>
    %240 = arith.addf %238, %239 : vector<16x256xf32>
    %241 = arith.mulf %228, %240 : vector<16x256xf32>
    %242 = arith.addf %237, %241 : vector<16x256xf32>
    %243 = math.tanh %242 : vector<16x256xf32>
    %cst_41 = arith.constant 1.000000e+00 : f32
    %244 = vector.broadcast %cst_41 : f32 to vector<16x256xf32>
    %245 = arith.subf %244, %236 : vector<16x256xf32>
    %246 = arith.mulf %245, %243 : vector<16x256xf32>
    %247 = arith.mulf %236, %217 : vector<16x256xf32>
    %248 = arith.addf %246, %247 : vector<16x256xf32>
    %249 = arith.truncf %248 : vector<16x256xf32> to vector<16x256xbf16>
    %c0_42 = arith.constant 0 : index
    %c0_43 = arith.constant 0 : index
    %250 = vector.load %arg5[%c0_42, %c0_43] : memref<256x128xbf16, #tpu.memory_space<vmem>>, vector<256x128xbf16>
    %cst_44 = arith.constant dense<0.000000e+00> : vector<16x128xf32>
    %251 = tpu.matmul %249, %250, %cst_44 {dimension_numbers = #tpu.dot_dimension_numbers<[1], [0], [0], [1], [0, 0, 1, 1], [], []>} : vector<16x256xbf16>, vector<256x128xbf16>, vector<16x128xf32> -> vector<16x128xf32>
    %c0_45 = arith.constant 0 : index
    %c0_46 = arith.constant 0 : index
    %252 = vector.load %arg6[%c0_45, %c0_46] : memref<1x128xf32, #tpu.memory_space<vmem>>, vector<1x128xf32>
    %253 = vector.broadcast %252 : vector<1x128xf32> to vector<16x128xf32>
    %254 = arith.addf %251, %253 : vector<16x128xf32>
    %cst_47 = arith.constant 0.000000e+00 : f32
    %255 = vector.broadcast %cst_47 : f32 to vector<16x128xf32>
    %256 = arith.maximumf %254, %255 : vector<16x128xf32>
    %c0_48 = arith.constant 0 : index
    %c0_49 = arith.constant 0 : index
    %257 = vector.load %arg7[%c0_48, %c0_49] : memref<1x128xf32, #tpu.memory_space<vmem>>, vector<1x128xf32>
    %258 = vector.broadcast %257 : vector<1x128xf32> to vector<16x128xf32>
    %259 = arith.mulf %256, %258 : vector<16x128xf32>
    %cst_50 = arith.constant dense<0.000000e+00> : vector<16xf32>
    %260 = vector.multi_reduction <add>, %259, %cst_50 [1] : vector<16x128xf32> to vector<16xf32>
    %261 = vector.shape_cast %260 : vector<16xf32> to vector<16x1xf32>
    %c0_51 = arith.constant 0 : index
    %c0_52 = arith.constant 0 : index
    %262 = vector.load %arg8[%c0_51, %c0_52] : memref<1x1xf32, #tpu.memory_space<vmem>>, vector<1x1xf32>
    %263 = vector.broadcast %262 : vector<1x1xf32> to vector<16x1xf32>
    %264 = arith.addf %261, %263 : vector<16x1xf32>
    %c0_53 = arith.constant 0 : index
    %c0_54 = arith.constant 0 : index
    %265 = vector.load %arg9[%c0_53, %c0_54] : memref<16x1xf32, #tpu.memory_space<vmem>>, vector<16x1xf32>
    tpu.vector_store %arg9[%c0_53, %c0_54], %264 {strides = array<i32>} : memref<16x1xf32, #tpu.memory_space<vmem>>, vector<16x1xf32>,
    return
  }
}

</mosaic_0001>

<llo_original>
// kernel: tpu_custom_call.1
$region0: #{tpu_custom_call.1}
  #allocation0 [shape = 'u32[]', space=smem, size = 0x4, offset = 0x4, fixed_abs, tag = 'smem constant byte address 0x4 - core index']
  #allocation1 [shape = 'u32[144,128]{1,0:T(1,128)}', space=vmem, size = 0x12000, scoped, tag = 'internal scratch']
  #allocation2 [shape = 'f32[1,1]{1,0:T(1,128)S(1)}', space=vmem, size = 0x200, scoped, tag = 'scoped memory for tpu_custom_call.1']
  %s0 = inlined_call_operand.hbm [shape: bf16[128,256], index: 0, kind: input, shape index: {}]
  %s1 = inlined_call_operand.hbm [shape: bf16[256,768], index: 1, kind: input, shape index: {}]
  %s2 = inlined_call_operand.hbm [shape: bf16[256,768], index: 2, kind: input, shape index: {}]
  %s3 = inlined_call_operand.vmem [shape: f32[1,768], index: 3, kind: input, shape index: {}]
  %s4 = inlined_call_operand.vmem [shape: f32[1,256], index: 4, kind: input, shape index: {}]
  %s5 = inlined_call_operand.hbm [shape: bf16[256,128], index: 5, kind: input, shape index: {}]
  %s6 = inlined_call_operand.vmem [shape: f32[1,128], index: 6, kind: input, shape index: {}]
  %s7 = inlined_call_operand.vmem [shape: f32[1,128], index: 7, kind: input, shape index: {}]
  %s8 = inlined_call_operand.<no memory space> [shape: f32[1,1], index: 8, kind: input, shape index: {}]
  %s9 = inlined_call_operand.vmem [shape: f32[16,1], index: 9, kind: output, shape index: {}]
  %s10 = sld [smem:[#allocation0]]
  $region62: #{tpu_custom_call.1} parent=0
    _
  %s12 = ssub.s32 1, %s10
  %s13 = scalar_select 0, %s12, %s10
  %v14 = vstv %s8
  %15 = vst [vmem:[#allocation2] sm:$0x1] %v14
  $region1: #{tpu_custom_call.1} parent=0
    #allocation3 [shape = 'u8[65536]{0}', space=vmem, size = 0x10000, scoped, tag = 'input window, operand 0, single buffered']
    #allocation4 [shape = 's32[1]{0}', space=sflag, size = 0x4, scoped, tag = 'scoped memory for tpu_custom_call.1']
    #allocation5 [shape = 'u8[393216]{0}', space=vmem, size = 0x60000, scoped, tag = 'input window, operand 1, single buffered']
    #allocation6 [shape = 's32[1]{0}', space=sflag, size = 0x4, scoped, tag = 'scoped memory for tpu_custom_call.1']
    #allocation7 [shape = 'u8[393216]{0}', space=vmem, size = 0x60000, scoped, tag = 'input window, operand 2, single buffered']
    #allocation8 [shape = 'u8[65536]{0}', space=vmem, size = 0x10000, scoped, tag = 'input window, operand 5, single buffered']
    #allocation9 [shape = 's32[1]{0}', space=sflag, size = 0x4, scoped, tag = 'scoped memory for tpu_custom_call.1']
    %16 = vsyncpa [#allocation4], 0
    %17 = vsyncpa [#allocation6], 0
    %18 = vsyncpa [#allocation9], 0
    // Predicated region
    $region2: #{tpu_custom_call.1} parent=1 // pred_check
      _
    $region3: #{tpu_custom_call.1} parent=1 // pred_check_branch
      %20 = sbr.rel (0) target = $region5
    $region4: #{tpu_custom_call.1} parent=1 // pred_region
      %s22 = ssub.s32 2048, 2048
      %23 = vsyncadd [#allocation4], %s22
      %s24 = sshll.u32 [#allocation3], 4
      %s25 = int_to_ptr.vmem [resolvable:$true] %s24
      %30 = dma.hbm_to_vmem [thread:$0]  %s0, 2048, %s25, [#allocation4], 128, 128, 8
    $region5: #{tpu_custom_call.1} parent=1 // pred_fallthru
      _
    // Predicated region
    $region6: #{tpu_custom_call.1} parent=1 // pred_check
      _
    $region7: #{tpu_custom_call.1} parent=1 // pred_check_branch
      %32 = sbr.rel (0) target = $region9
    $region8: #{tpu_custom_call.1} parent=1 // pred_region
      %s34 = ssub.s32 12288, 12288
      %35 = vsyncadd [#allocation6], %s34
      %s36 = sshll.u32 [#allocation5], 4
      %s37 = int_to_ptr.vmem [resolvable:$true] %s36
      %42 = dma.hbm_to_vmem [thread:$0]  %s1, 12288, %s37, [#allocation6], 384, 384, 24
    $region9: #{tpu_custom_call.1} parent=1 // pred_fallthru
      _
    // Predicated region
    $region10: #{tpu_custom_call.1} parent=1 // pred_check
      _
    $region11: #{tpu_custom_call.1} parent=1 // pred_check_branch
      %44 = sbr.rel (0) target = $region13
    $region12: #{tpu_custom_call.1} parent=1 // pred_region
      %s46 = ssub.s32 12288, 12288
      %47 = vsyncadd [#allocation6], %s46
      %s48 = sshll.u32 [#allocation7], 4
      %s49 = int_to_ptr.vmem [resolvable:$true] %s48
      %54 = dma.hbm_to_vmem [thread:$0]  %s2, 12288, %s49, [#allocation6], 384, 384, 24
    $region13: #{tpu_custom_call.1} parent=1 // pred_fallthru
      _
    // Predicated region
    $region14: #{tpu_custom_call.1} parent=1 // pred_check
      _
    $region15: #{tpu_custom_call.1} parent=1 // pred_check_branch
      %56 = sbr.rel (0) target = $region17
    $region16: #{tpu_custom_call.1} parent=1 // pred_region
      _
    $region17: #{tpu_custom_call.1} parent=1 // pred_fallthru
      _
    // Predicated region
    $region18: #{tpu_custom_call.1} parent=1 // pred_check
      _
    $region19: #{tpu_custom_call.1} parent=1 // pred_check_branch
      %58 = sbr.rel (0) target = $region21
    $region20: #{tpu_custom_call.1} parent=1 // pred_region
      _
    $region21: #{tpu_custom_call.1} parent=1 // pred_fallthru
      _
    // Predicated region
    $region22: #{tpu_custom_call.1} parent=1 // pred_check
      _
    $region23: #{tpu_custom_call.1} parent=1 // pred_check_branch
      %60 = sbr.rel (0) target = $region25
    $region24: #{tpu_custom_call.1} parent=1 // pred_region
      %s62 = ssub.s32 2048, 2048
      %63 = vsyncadd [#allocation9], %s62
      %s64 = sshll.u32 [#allocation8], 4
      %s65 = int_to_ptr.vmem [resolvable:$true] %s64
      %70 = dma.hbm_to_vmem [thread:$0]  %s5, 2048, %s65, [#allocation9], 64, 64, 4
    $region25: #{tpu_custom_call.1} parent=1 // pred_fallthru
      _
    // Predicated region
    $region26: #{tpu_custom_call.1} parent=1 // pred_check
      _
    $region27: #{tpu_custom_call.1} parent=1 // pred_check_branch
      %72 = sbr.rel (0) target = $region29
    $region28: #{tpu_custom_call.1} parent=1 // pred_region
      _
    $region29: #{tpu_custom_call.1} parent=1 // pred_fallthru
      _
    // Predicated region
    $region30: #{tpu_custom_call.1} parent=1 // pred_check
      _
    $region31: #{tpu_custom_call.1} parent=1 // pred_check_branch
      %74 = sbr.rel (0) target = $region33
    $region32: #{tpu_custom_call.1} parent=1 // pred_region
      _
    $region33: #{tpu_custom_call.1} parent=1 // pred_fallthru
      _
    // Predicated region
    $region34: #{tpu_custom_call.1} parent=1 // pred_check
      _
    $region35: #{tpu_custom_call.1} parent=1 // pred_check_branch
      %76 = sbr.rel (0) target = $region37
    $region36: #{tpu_custom_call.1} parent=1 // pred_region
      _
    $region37: #{tpu_custom_call.1} parent=1 // pred_fallthru
      _
    // Predicated region
    $region38: #{tpu_custom_call.1} parent=1 // pred_check
      _
    $region39: #{tpu_custom_call.1} parent=1 // pred_check_branch
      %78 = sbr.rel (0) target = $region41
    $region40: #{tpu_custom_call.1} parent=1 // pred_region
      %79 = dma.done [#allocation4], 2048
    $region41: #{tpu_custom_call.1} parent=1 // pred_fallthru
      _
    // Predicated region
    $region42: #{tpu_custom_call.1} parent=1 // pred_check
      _
    $region43: #{tpu_custom_call.1} parent=1 // pred_check_branch
      %81 = sbr.rel (0) target = $region45
    $region44: #{tpu_custom_call.1} parent=1 // pred_region
      %82 = dma.done [#allocation6], 12288
    $region45: #{tpu_custom_call.1} parent=1 // pred_fallthru
      _
    // Predicated region
    $region46: #{tpu_custom_call.1} parent=1 // pred_check
      _
    $region47: #{tpu_custom_call.1} parent=1 // pred_check_branch
      %84 = sbr.rel (0) target = $region49
    $region48: #{tpu_custom_call.1} parent=1 // pred_region
      %85 = dma.done [#allocation6], 12288
    $region49: #{tpu_custom_call.1} parent=1 // pred_fallthru
      _
    // Predicated region
    $region50: #{tpu_custom_call.1} parent=1 // pred_check
      _
    $region51: #{tpu_custom_call.1} parent=1 // pred_check_branch
      %87 = sbr.rel (0) target = $region53
    $region52: #{tpu_custom_call.1} parent=1 // pred_region
      %88 = dma.done [#allocation9], 2048
    $region53: #{tpu_custom_call.1} parent=1 // pred_fallthru
      _
    %v90 = vld [vmem:[#allocation5] sm:$0xff]
    %v91 = vld [vmem:[#allocation5 + $0x8] sm:$0xff]
    %v92 = vld [vmem:[#allocation5 + $0x10] sm:$0xff]
    %v93 = vld [vmem:[#allocation5 + $0x18] sm:$0xff]
    %v94 = vld [vmem:[#allocation5 + $0x20] sm:$0xff]
    %v95 = vld [vmem:[#allocation5 + $0x28] sm:$0xff]
    %v96 = vld [vmem:[#allocation5 + $0x30] sm:$0xff]
    %v97 = vld [vmem:[#allocation5 + $0x38] sm:$0xff]
    %v98 = vld [vmem:[#allocation5 + $0x40] sm:$0xff]
    %v99 = vld [vmem:[#allocation5 + $0x48] sm:$0xff]
    %v100 = vld [vmem:[#allocation5 + $0x50] sm:$0xff]
    %v101 = vld [vmem:[#allocation5 + $0x58] sm:$0xff]
    %v102 = vld [vmem:[#allocation5 + $0x60] sm:$0xff]
    %v103 = vld [vmem:[#allocation5 + $0x68] sm:$0xff]
    %v104 = vld [vmem:[#allocation5 + $0x70] sm:$0xff]
    %v105 = vld [vmem:[#allocation5 + $0x78] sm:$0xff]
    %v106 = vld [vmem:[#allocation5 + $0x80] sm:$0xff]
    %v107 = vld [vmem:[#allocation5 + $0x88] sm:$0xff]
    %v108 = vld [vmem:[#allocation5 + $0x90] sm:$0xff]
    %v109 = vld [vmem:[#allocation5 + $0x98] sm:$0xff]
    %v110 = vld [vmem:[#allocation5 + $0xa0] sm:$0xff]
    %v111 = vld [vmem:[#allocation5 + $0xa8] sm:$0xff]
    %v112 = vld [vmem:[#allocation5 + $0xb0] sm:$0xff]
    %v113 = vld [vmem:[#allocation5 + $0xb8] sm:$0xff]
    %v114 = vld [vmem:[#allocation5 + $0xc0] sm:$0xff]
    %v115 = vld [vmem:[#allocation5 + $0xc8] sm:$0xff]
    %v116 = vld [vmem:[#allocation5 + $0xd0] sm:$0xff]
    %v117 = vld [vmem:[#allocation5 + $0xd8] sm:$0xff]
    %v118 = vld [vmem:[#allocation5 + $0xe0] sm:$0xff]
    %v119 = vld [vmem:[#allocation5 + $0xe8] sm:$0xff]
    %v120 = vld [vmem:[#allocation5 + $0xf0] sm:$0xff]
    %v121 = vld [vmem:[#allocation5 + $0xf8] sm:$0xff]
    %v122 = vld [vmem:[#allocation5 + $0x100] sm:$0xff]
    %v123 = vld [vmem:[#allocation5 + $0x108] sm:$0xff]
    %v124 = vld [vmem:[#allocation5 + $0x110] sm:$0xff]
    %v125 = vld [vmem:[#allocation5 + $0x118] sm:$0xff]
    %v126 = vld [vmem:[#allocation5 + $0x120] sm:$0xff]
    %v127 = vld [vmem:[#allocation5 + $0x128] sm:$0xff]
    %v128 = vld [vmem:[#allocation5 + $0x130] sm:$0xff]
    %v129 = vld [vmem:[#allocation5 + $0x138] sm:$0xff]
    %v130 = vld [vmem:[#allocation5 + $0x140] sm:$0xff]
    %v131 = vld [vmem:[#allocation5 + $0x148] sm:$0xff]
    %v132 = vld [vmem:[#allocation5 + $0x150] sm:$0xff]
    %v133 = vld [vmem:[#allocation5 + $0x158] sm:$0xff]
    %v134 = vld [vmem:[#allocation5 + $0x160] sm:$0xff]
    %v135 = vld [vmem:[#allocation5 + $0x168] sm:$0xff]
    %v136 = vld [vmem:[#allocation5 + $0x170] sm:$0xff]
    %v137 = vld [vmem:[#allocation5 + $0x178] sm:$0xff]
    %v138 = vld [vmem:[#allocation5 + $0x180] sm:$0xff]
    %v139 = vld [vmem:[#allocation5 + $0x188] sm:$0xff]
    %v140 = vld [vmem:[#allocation5 + $0x190] sm:$0xff]
    %v141 = vld [vmem:[#allocation5 + $0x198] sm:$0xff]
    %v142 = vld [vmem:[#allocation5 + $0x1a0] sm:$0xff]
    %v143 = vld [vmem:[#allocation5 + $0x1a8] sm:$0xff]
    %v144 = vld [vmem:[#allocation5 + $0x1b0] sm:$0xff]
    %v145 = vld [vmem:[#allocation5 + $0x1b8] sm:$0xff]
    %v146 = vld [vmem:[#allocation5 + $0x1c0] sm:$0xff]
    %v147 = vld [vmem:[#allocation5 + $0x1c8] sm:$0xff]
    %v148 = vld [vmem:[#allocation5 + $0x1d0] sm:$0xff]
    %v149 = vld [vmem:[#allocation5 + $0x1d8] sm:$0xff]
    %v150 = vld [vmem:[#allocation5 + $0x1e0] sm:$0xff]
    %v151 = vld [vmem:[#allocation5 + $0x1e8] sm:$0xff]
    %v152 = vld [vmem:[#allocation5 + $0x1f0] sm:$0xff]
    %v153 = vld [vmem:[#allocation5 + $0x1f8] sm:$0xff]
    %v154 = vld [vmem:[#allocation5 + $0x200] sm:$0xff]
    %v155 = vld [vmem:[#allocation5 + $0x208] sm:$0xff]
    %v156 = vld [vmem:[#allocation5 + $0x210] sm:$0xff]
    %v157 = vld [vmem:[#allocation5 + $0x218] sm:$0xff]
    %v158 = vld [vmem:[#allocation5 + $0x220] sm:$0xff]
    %v159 = vld [vmem:[#allocation5 + $0x228] sm:$0xff]
    %v160 = vld [vmem:[#allocation5 + $0x230] sm:$0xff]
    %v161 = vld [vmem:[#allocation5 + $0x238] sm:$0xff]
    %v162 = vld [vmem:[#allocation5 + $0x240] sm:$0xff]
    %v163 = vld [vmem:[#allocation5 + $0x248] sm:$0xff]
    %v164 = vld [vmem:[#allocation5 + $0x250] sm:$0xff]
    %v165 = vld [vmem:[#allocation5 + $0x258] sm:$0xff]
    %v166 = vld [vmem:[#allocation5 + $0x260] sm:$0xff]
    %v167 = vld [vmem:[#allocation5 + $0x268] sm:$0xff]
    %v168 = vld [vmem:[#allocation5 + $0x270] sm:$0xff]
    %v169 = vld [vmem:[#allocation5 + $0x278] sm:$0xff]
    %v170 = vld [vmem:[#allocation5 + $0x280] sm:$0xff]
    %v171 = vld [vmem:[#allocation5 + $0x288] sm:$0xff]
    %v172 = vld [vmem:[#allocation5 + $0x290] sm:$0xff]
    %v173 = vld [vmem:[#allocation5 + $0x298] sm:$0xff]
    %v174 = vld [vmem:[#allocation5 + $0x2a0] sm:$0xff]
    %v175 = vld [vmem:[#allocation5 + $0x2a8] sm:$0xff]
    %v176 = vld [vmem:[#allocation5 + $0x2b0] sm:$0xff]
    %v177 = vld [vmem:[#allocation5 + $0x2b8] sm:$0xff]
    %v178 = vld [vmem:[#allocation5 + $0x2c0] sm:$0xff]
    %v179 = vld [vmem:[#allocation5 + $0x2c8] sm:$0xff]
    %v180 = vld [vmem:[#allocation5 + $0x2d0] sm:$0xff]
    %v181 = vld [vmem:[#allocation5 + $0x2d8] sm:$0xff]
    %v182 = vld [vmem:[#allocation5 + $0x2e0] sm:$0xff]
    %v183 = vld [vmem:[#allocation5 + $0x2e8] sm:$0xff]
    %v184 = vld [vmem:[#allocation5 + $0x2f0] sm:$0xff]
    %v185 = vld [vmem:[#allocation5 + $0x2f8] sm:$0xff]
    %v186 = vld [vmem:[#allocation7] sm:$0xff]
    %v187 = vld [vmem:[#allocation7 + $0x8] sm:$0xff]
    %v188 = vld [vmem:[#allocation7 + $0x10] sm:$0xff]
    %v189 = vld [vmem:[#allocation7 + $0x18] sm:$0xff]
    %v190 = vld [vmem:[#allocation7 + $0x20] sm:$0xff]
    %v191 = vld [vmem:[#allocation7 + $0x28] sm:$0xff]
    %v192 = vld [vmem:[#allocation7 + $0x30] sm:$0xff]
    %v193 = vld [vmem:[#allocation7 + $0x38] sm:$0xff]
    %v194 = vld [vmem:[#allocation7 + $0x40] sm:$0xff]
    %v195 = vld [vmem:[#allocation7 + $0x48] sm:$0xff]
    %v196 = vld [vmem:[#allocation7 + $0x50] sm:$0xff]
    %v197 = vld [vmem:[#allocation7 + $0x58] sm:$0xff]
    %v198 = vld [vmem:[#allocation7 + $0x60] sm:$0xff]
    %v199 = vld [vmem:[#allocation7 + $0x68] sm:$0xff]
    %v200 = vld [vmem:[#allocation7 + $0x70] sm:$0xff]
    %v201 = vld [vmem:[#allocation7 + $0x78] sm:$0xff]
    %v202 = vld [vmem:[#allocation7 + $0x80] sm:$0xff]
    %v203 = vld [vmem:[#allocation7 + $0x88] sm:$0xff]
    %v204 = vld [vmem:[#allocation7 + $0x90] sm:$0xff]
    %v205 = vld [vmem:[#allocation7 + $0x98] sm:$0xff]
    %v206 = vld [vmem:[#allocation7 + $0xa0] sm:$0xff]
    %v207 = vld [vmem:[#allocation7 + $0xa8] sm:$0xff]
    %v208 = vld [vmem:[#allocation7 + $0xb0] sm:$0xff]
    %v209 = vld [vmem:[#allocation7 + $0xb8] sm:$0xff]
    %v210 = vld [vmem:[#allocation7 + $0xc0] sm:$0xff]
    %v211 = vld [vmem:[#allocation7 + $0xc8] sm:$0xff]
    %v212 = vld [vmem:[#allocation7 + $0xd0] sm:$0xff]
    %v213 = vld [vmem:[#allocation7 + $0xd8] sm:$0xff]
    %v214 = vld [vmem:[#allocation7 + $0xe0] sm:$0xff]
    %v215 = vld [vmem:[#allocation7 + $0xe8] sm:$0xff]
    %v216 = vld [vmem:[#allocation7 + $0xf0] sm:$0xff]
    %v217 = vld [vmem:[#allocation7 + $0xf8] sm:$0xff]
    %v218 = vld [vmem:[#allocation7 + $0x100] sm:$0xff]
    %v219 = vld [vmem:[#allocation7 + $0x108] sm:$0xff]
    %v220 = vld [vmem:[#allocation7 + $0x110] sm:$0xff]
    %v221 = vld [vmem:[#allocation7 + $0x118] sm:$0xff]
    %v222 = vld [vmem:[#allocation7 + $0x120] sm:$0xff]
    %v223 = vld [vmem:[#allocation7 + $0x128] sm:$0xff]
    %v224 = vld [vmem:[#allocation7 + $0x130] sm:$0xff]
    %v225 = vld [vmem:[#allocation7 + $0x138] sm:$0xff]
    %v226 = vld [vmem:[#allocation7 + $0x140] sm:$0xff]
    %v227 = vld [vmem:[#allocation7 + $0x148] sm:$0xff]
    %v228 = vld [vmem:[#allocation7 + $0x150] sm:$0xff]
    %v229 = vld [vmem:[#allocation7 + $0x158] sm:$0xff]
    %v230 = vld [vmem:[#allocation7 + $0x160] sm:$0xff]
    %v231 = vld [vmem:[#allocation7 + $0x168] sm:$0xff]
    %v232 = vld [vmem:[#allocation7 + $0x170] sm:$0xff]
    %v233 = vld [vmem:[#allocation7 + $0x178] sm:$0xff]
    %v234 = vld [vmem:[#allocation7 + $0x180] sm:$0xff]
    %v235 = vld [vmem:[#allocation7 + $0x188] sm:$0xff]
    %v236 = vld [vmem:[#allocation7 + $0x190] sm:$0xff]
    %v237 = vld [vmem:[#allocation7 + $0x198] sm:$0xff]
    %v238 = vld [vmem:[#allocation7 + $0x1a0] sm:$0xff]
    %v239 = vld [vmem:[#allocation7 + $0x1a8] sm:$0xff]
    %v240 = vld [vmem:[#allocation7 + $0x1b0] sm:$0xff]
    %v241 = vld [vmem:[#allocation7 + $0x1b8] sm:$0xff]
    %v242 = vld [vmem:[#allocation7 + $0x1c0] sm:$0xff]
    %v243 = vld [vmem:[#allocation7 + $0x1c8] sm:$0xff]
    %v244 = vld [vmem:[#allocation7 + $0x1d0] sm:$0xff]
    %v245 = vld [vmem:[#allocation7 + $0x1d8] sm:$0xff]
    %v246 = vld [vmem:[#allocation7 + $0x1e0] sm:$0xff]
    %v247 = vld [vmem:[#allocation7 + $0x1e8] sm:$0xff]
    %v248 = vld [vmem:[#allocation7 + $0x1f0] sm:$0xff]
    %v249 = vld [vmem:[#allocation7 + $0x1f8] sm:$0xff]
    %v250 = vld [vmem:[#allocation7 + $0x200] sm:$0xff]
    %v251 = vld [vmem:[#allocation7 + $0x208] sm:$0xff]
    %v252 = vld [vmem:[#allocation7 + $0x210] sm:$0xff]
    %v253 = vld [vmem:[#allocation7 + $0x218] sm:$0xff]
    %v254 = vld [vmem:[#allocation7 + $0x220] sm:$0xff]
    %v255 = vld [vmem:[#allocation7 + $0x228] sm:$0xff]
    %v256 = vld [vmem:[#allocation7 + $0x230] sm:$0xff]
    %v257 = vld [vmem:[#allocation7 + $0x238] sm:$0xff]
    %v258 = vld [vmem:[#allocation7 + $0x240] sm:$0xff]
    %v259 = vld [vmem:[#allocation7 + $0x248] sm:$0xff]
    %v260 = vld [vmem:[#allocation7 + $0x250] sm:$0xff]
    %v261 = vld [vmem:[#allocation7 + $0x258] sm:$0xff]
    %v262 = vld [vmem:[#allocation7 + $0x260] sm:$0xff]
    %v263 = vld [vmem:[#allocation7 + $0x268] sm:$0xff]
    %v264 = vld [vmem:[#allocation7 + $0x270] sm:$0xff]
    %v265 = vld [vmem:[#allocation7 + $0x278] sm:$0xff]
    %v266 = vld [vmem:[#allocation7 + $0x280] sm:$0xff]
    %v267 = vld [vmem:[#allocation7 + $0x288] sm:$0xff]
    %v268 = vld [vmem:[#allocation7 + $0x290] sm:$0xff]
    %v269 = vld [vmem:[#allocation7 + $0x298] sm:$0xff]
    %v270 = vld [vmem:[#allocation7 + $0x2a0] sm:$0xff]
    %v271 = vld [vmem:[#allocation7 + $0x2a8] sm:$0xff]
    %v272 = vld [vmem:[#allocation7 + $0x2b0] sm:$0xff]
    %v273 = vld [vmem:[#allocation7 + $0x2b8] sm:$0xff]
    %v274 = vld [vmem:[#allocation7 + $0x2c0] sm:$0xff]
    %v275 = vld [vmem:[#allocation7 + $0x2c8] sm:$0xff]
    %v276 = vld [vmem:[#allocation7 + $0x2d0] sm:$0xff]
    %v277 = vld [vmem:[#allocation7 + $0x2d8] sm:$0xff]
    %v278 = vld [vmem:[#allocation7 + $0x2e0] sm:$0xff]
    %v279 = vld [vmem:[#allocation7 + $0x2e8] sm:$0xff]
    %v280 = vld [vmem:[#allocation7 + $0x2f0] sm:$0xff]
    %v281 = vld [vmem:[#allocation7 + $0x2f8] sm:$0xff]
    %v282 = vld [vmem:[%s3] sm:$0x3f]
    %v283 = vld [vmem:[%s4] sm:$0x3]
    %v284 = vld [vmem:[#allocation3] sm:$0xff]
    %v285 = vld [vmem:[#allocation3 + $0x8] sm:$0xff]
    %v287 = vlaneseq
    %v288 = vshrl.u32 %v287, 7
    %v289 = vsub.s32 0, %v288
    %v290 = vrot.slane %v282, %v289
    %v291 = vlaneseq
    %v292 = vshrl.u32 %v291, 7
    %v293 = vsub.s32 1, %v292
    %v294 = vrot.slane %v282, %v293
    %v295 = vlaneseq
    %v296 = vshrl.u32 %v295, 7
    %v297 = vsub.s32 2, %v296
    %v298 = vrot.slane %v282, %v297
    %v299 = vlaneseq
    %v300 = vshrl.u32 %v299, 7
    %v301 = vsub.s32 3, %v300
    %v302 = vrot.slane %v282, %v301
    %v303 = vlaneseq
    %v304 = vshrl.u32 %v303, 7
    %v305 = vsub.s32 4, %v304
    %v306 = vrot.slane %v282, %v305
    %v307 = vlaneseq
    %v308 = vshrl.u32 %v307, 7
    %v309 = vsub.s32 5, %v308
    %v310 = vrot.slane %v282, %v309
    %v319 = vunpack.c.l.b16 %v284
    %v320 = vunpack.c.h.b16 %v284
    %v321 = vunpack.c.l.b16 %v285
    %v322 = vunpack.c.h.b16 %v285
    %v323 = vpack.c.b16 %v321, %v319
    %v324 = vpack.c.b16 %v322, %v320
    %v423 = vunpack.c.l.b16 %v90
    %v424 = vunpack.c.h.b16 %v90
    %v425 = vunpack.c.l.b16 %v91
    %v426 = vunpack.c.h.b16 %v91
    %v427 = vunpack.c.l.b16 %v92
    %v428 = vunpack.c.h.b16 %v92
    %v429 = vunpack.c.l.b16 %v93
    %v430 = vunpack.c.h.b16 %v93
    %v431 = vunpack.c.l.b16 %v94
    %v432 = vunpack.c.h.b16 %v94
    %v433 = vunpack.c.l.b16 %v95
    %v434 = vunpack.c.h.b16 %v95
    %v435 = vunpack.c.l.b16 %v96
    %v436 = vunpack.c.h.b16 %v96
    %v437 = vunpack.c.l.b16 %v97
    %v438 = vunpack.c.h.b16 %v97
    %v439 = vunpack.c.l.b16 %v98
    %v440 = vunpack.c.h.b16 %v98
    %v441 = vunpack.c.l.b16 %v99
    %v442 = vunpack.c.h.b16 %v99
    %v443 = vunpack.c.l.b16 %v100
    %v444 = vunpack.c.h.b16 %v100
    %v445 = vunpack.c.l.b16 %v101
    %v446 = vunpack.c.h.b16 %v101
    %v447 = vunpack.c.l.b16 %v102
    %v448 = vunpack.c.h.b16 %v102
    %v449 = vunpack.c.l.b16 %v103
    %v450 = vunpack.c.h.b16 %v103
    %v451 = vunpack.c.l.b16 %v104
    %v452 = vunpack.c.h.b16 %v104
    %v453 = vunpack.c.l.b16 %v105
    %v454 = vunpack.c.h.b16 %v105
    %v455 = vunpack.c.l.b16 %v106
    %v456 = vunpack.c.h.b16 %v106
    %v457 = vunpack.c.l.b16 %v107
    %v458 = vunpack.c.h.b16 %v107
    %v459 = vunpack.c.l.b16 %v108
    %v460 = vunpack.c.h.b16 %v108
    %v461 = vunpack.c.l.b16 %v109
    %v462 = vunpack.c.h.b16 %v109
    %v463 = vunpack.c.l.b16 %v110
    %v464 = vunpack.c.h.b16 %v110
    %v465 = vunpack.c.l.b16 %v111
    %v466 = vunpack.c.h.b16 %v111
    %v467 = vunpack.c.l.b16 %v112
    %v468 = vunpack.c.h.b16 %v112
    %v469 = vunpack.c.l.b16 %v113
    %v470 = vunpack.c.h.b16 %v113
    %v471 = vunpack.c.l.b16 %v114
    %v472 = vunpack.c.h.b16 %v114
    %v473 = vunpack.c.l.b16 %v115
    %v474 = vunpack.c.h.b16 %v115
    %v475 = vunpack.c.l.b16 %v116
    %v476 = vunpack.c.h.b16 %v116
    %v477 = vunpack.c.l.b16 %v117
    %v478 = vunpack.c.h.b16 %v117
    %v479 = vunpack.c.l.b16 %v118
    %v480 = vunpack.c.h.b16 %v118
    %v481 = vunpack.c.l.b16 %v119
    %v482 = vunpack.c.h.b16 %v119
    %v483 = vunpack.c.l.b16 %v120
    %v484 = vunpack.c.h.b16 %v120
    %v485 = vunpack.c.l.b16 %v121
    %v486 = vunpack.c.h.b16 %v121
    %v487 = vunpack.c.l.b16 %v122
    %v488 = vunpack.c.h.b16 %v122
    %v489 = vunpack.c.l.b16 %v123
    %v490 = vunpack.c.h.b16 %v123
    %v491 = vunpack.c.l.b16 %v124
    %v492 = vunpack.c.h.b16 %v124
    %v493 = vunpack.c.l.b16 %v125
    %v494 = vunpack.c.h.b16 %v125
    %v495 = vunpack.c.l.b16 %v126
    %v496 = vunpack.c.h.b16 %v126
    %v497 = vunpack.c.l.b16 %v127
    %v498 = vunpack.c.h.b16 %v127
    %v499 = vunpack.c.l.b16 %v128
    %v500 = vunpack.c.h.b16 %v128
    %v501 = vunpack.c.l.b16 %v129
    %v502 = vunpack.c.h.b16 %v129
    %v503 = vunpack.c.l.b16 %v130
    %v504 = vunpack.c.h.b16 %v130
    %v505 = vunpack.c.l.b16 %v131
    %v506 = vunpack.c.h.b16 %v131
    %v507 = vunpack.c.l.b16 %v132
    %v508 = vunpack.c.h.b16 %v132
    %v509 = vunpack.c.l.b16 %v133
    %v510 = vunpack.c.h.b16 %v133
    %v511 = vunpack.c.l.b16 %v134
    %v512 = vunpack.c.h.b16 %v134
    %v513 = vunpack.c.l.b16 %v135
    %v514 = vunpack.c.h.b16 %v135
    %v515 = vunpack.c.l.b16 %v136
    %v516 = vunpack.c.h.b16 %v136
    %v517 = vunpack.c.l.b16 %v137
    %v518 = vunpack.c.h.b16 %v137
    %v519 = vunpack.c.l.b16 %v138
    %v520 = vunpack.c.h.b16 %v138
    %v521 = vunpack.c.l.b16 %v139
    %v522 = vunpack.c.h.b16 %v139
    %v523 = vunpack.c.l.b16 %v140
    %v524 = vunpack.c.h.b16 %v140
    %v525 = vunpack.c.l.b16 %v141
    %v526 = vunpack.c.h.b16 %v141
    %v527 = vunpack.c.l.b16 %v142
    %v528 = vunpack.c.h.b16 %v142
    %v529 = vunpack.c.l.b16 %v143
    %v530 = vunpack.c.h.b16 %v143
    %v531 = vunpack.c.l.b16 %v144
    %v532 = vunpack.c.h.b16 %v144
    %v533 = vunpack.c.l.b16 %v145
    %v534 = vunpack.c.h.b16 %v145
    %v535 = vunpack.c.l.b16 %v146
    %v536 = vunpack.c.h.b16 %v146
    %v537 = vunpack.c.l.b16 %v147
    %v538 = vunpack.c.h.b16 %v147
    %v539 = vunpack.c.l.b16 %v148
    %v540 = vunpack.c.h.b16 %v148
    %v541 = vunpack.c.l.b16 %v149
    %v542 = vunpack.c.h.b16 %v149
    %v543 = vunpack.c.l.b16 %v150
    %v544 = vunpack.c.h.b16 %v150
    %v545 = vunpack.c.l.b16 %v151
    %v546 = vunpack.c.h.b16 %v151
    %v547 = vunpack.c.l.b16 %v152
    %v548 = vunpack.c.h.b16 %v152
    %v549 = vunpack.c.l.b16 %v153
    %v550 = vunpack.c.h.b16 %v153
    %v551 = vunpack.c.l.b16 %v154
    %v552 = vunpack.c.h.b16 %v154
    %v553 = vunpack.c.l.b16 %v155
    %v554 = vunpack.c.h.b16 %v155
    %v555 = vunpack.c.l.b16 %v156
    %v556 = vunpack.c.h.b16 %v156
    %v557 = vunpack.c.l.b16 %v157
    %v558 = vunpack.c.h.b16 %v157
    %v559 = vunpack.c.l.b16 %v158
    %v560 = vunpack.c.h.b16 %v158
    %v561 = vunpack.c.l.b16 %v159
    %v562 = vunpack.c.h.b16 %v159
    %v563 = vunpack.c.l.b16 %v160
    %v564 = vunpack.c.h.b16 %v160
    %v565 = vunpack.c.l.b16 %v161
    %v566 = vunpack.c.h.b16 %v161
    %v567 = vunpack.c.l.b16 %v162
    %v568 = vunpack.c.h.b16 %v162
    %v569 = vunpack.c.l.b16 %v163
    %v570 = vunpack.c.h.b16 %v163
    %v571 = vunpack.c.l.b16 %v164
    %v572 = vunpack.c.h.b16 %v164
    %v573 = vunpack.c.l.b16 %v165
    %v574 = vunpack.c.h.b16 %v165
    %v575 = vunpack.c.l.b16 %v166
    %v576 = vunpack.c.h.b16 %v166
    %v577 = vunpack.c.l.b16 %v167
    %v578 = vunpack.c.h.b16 %v167
    %v579 = vunpack.c.l.b16 %v168
    %v580 = vunpack.c.h.b16 %v168
    %v581 = vunpack.c.l.b16 %v169
    %v582 = vunpack.c.h.b16 %v169
    %v583 = vunpack.c.l.b16 %v170
    %v584 = vunpack.c.h.b16 %v170
    %v585 = vunpack.c.l.b16 %v171
    %v586 = vunpack.c.h.b16 %v171
    %v587 = vunpack.c.l.b16 %v172
    %v588 = vunpack.c.h.b16 %v172
    %v589 = vunpack.c.l.b16 %v173
    %v590 = vunpack.c.h.b16 %v173
    %v591 = vunpack.c.l.b16 %v174
    %v592 = vunpack.c.h.b16 %v174
    %v593 = vunpack.c.l.b16 %v175
    %v594 = vunpack.c.h.b16 %v175
    %v595 = vunpack.c.l.b16 %v176
    %v596 = vunpack.c.h.b16 %v176
    %v597 = vunpack.c.l.b16 %v177
    %v598 = vunpack.c.h.b16 %v177
    %v599 = vunpack.c.l.b16 %v178
    %v600 = vunpack.c.h.b16 %v178
    %v601 = vunpack.c.l.b16 %v179
    %v602 = vunpack.c.h.b16 %v179
    %v603 = vunpack.c.l.b16 %v180
    %v604 = vunpack.c.h.b16 %v180
    %v605 = vunpack.c.l.b16 %v181
    %v606 = vunpack.c.h.b16 %v181
    %v607 = vunpack.c.l.b16 %v182
    %v608 = vunpack.c.h.b16 %v182
    %v609 = vunpack.c.l.b16 %v183
    %v610 = vunpack.c.h.b16 %v183
    %v611 = vunpack.c.l.b16 %v184
    %v612 = vunpack.c.h.b16 %v184
    %v613 = vunpack.c.l.b16 %v185
    %v614 = vunpack.c.h.b16 %v185
    %v615 = vpack.c.b16 %v429, %v423
    %v616 = vpack.c.b16 %v430, %v424
    %v617 = vpack.c.b16 %v431, %v425
    %v618 = vpack.c.b16 %v432, %v426
    %v619 = vpack.c.b16 %v433, %v427
    %v620 = vpack.c.b16 %v434, %v428
    %v621 = vpack.c.b16 %v441, %v435
    %v622 = vpack.c.b16 %v442, %v436
    %v623 = vpack.c.b16 %v443, %v437
    %v624 = vpack.c.b16 %v444, %v438
    %v625 = vpack.c.b16 %v445, %v439
    %v626 = vpack.c.b16 %v446, %v440
    %v627 = vpack.c.b16 %v453, %v447
    %v628 = vpack.c.b16 %v454, %v448
    %v629 = vpack.c.b16 %v455, %v449
    %v630 = vpack.c.b16 %v456, %v450
    %v631 = vpack.c.b16 %v457, %v451
    %v632 = vpack.c.b16 %v458, %v452
    %v633 = vpack.c.b16 %v465, %v459
    %v634 = vpack.c.b16 %v466, %v460
    %v635 = vpack.c.b16 %v467, %v461
    %v636 = vpack.c.b16 %v468, %v462
    %v637 = vpack.c.b16 %v469, %v463
    %v638 = vpack.c.b16 %v470, %v464
    %v639 = vpack.c.b16 %v477, %v471
    %v640 = vpack.c.b16 %v478, %v472
    %v641 = vpack.c.b16 %v479, %v473
    %v642 = vpack.c.b16 %v480, %v474
    %v643 = vpack.c.b16 %v481, %v475
    %v644 = vpack.c.b16 %v482, %v476
    %v645 = vpack.c.b16 %v489, %v483
    %v646 = vpack.c.b16 %v490, %v484
    %v647 = vpack.c.b16 %v491, %v485
    %v648 = vpack.c.b16 %v492, %v486
    %v649 = vpack.c.b16 %v493, %v487
    %v650 = vpack.c.b16 %v494, %v488
    %v651 = vpack.c.b16 %v501, %v495
    %v652 = vpack.c.b16 %v502, %v496
    %v653 = vpack.c.b16 %v503, %v497
    %v654 = vpack.c.b16 %v504, %v498
    %v655 = vpack.c.b16 %v505, %v499
    %v656 = vpack.c.b16 %v506, %v500
    %v657 = vpack.c.b16 %v513, %v507
    %v658 = vpack.c.b16 %v514, %v508
    %v659 = vpack.c.b16 %v515, %v509
    %v660 = vpack.c.b16 %v516, %v510
    %v661 = vpack.c.b16 %v517, %v511
    %v662 = vpack.c.b16 %v518, %v512
    %v663 = vpack.c.b16 %v525, %v519
    %v664 = vpack.c.b16 %v526, %v520
    %v665 = vpack.c.b16 %v527, %v521
    %v666 = vpack.c.b16 %v528, %v522
    %v667 = vpack.c.b16 %v529, %v523
    %v668 = vpack.c.b16 %v530, %v524
    %v669 = vpack.c.b16 %v537, %v531
    %v670 = vpack.c.b16 %v538, %v532
    %v671 = vpack.c.b16 %v539, %v533
    %v672 = vpack.c.b16 %v540, %v534
    %v673 = vpack.c.b16 %v541, %v535
    %v674 = vpack.c.b16 %v542, %v536
    %v675 = vpack.c.b16 %v549, %v543
    %v676 = vpack.c.b16 %v550, %v544
    %v677 = vpack.c.b16 %v551, %v545
    %v678 = vpack.c.b16 %v552, %v546
    %v679 = vpack.c.b16 %v553, %v547
    %v680 = vpack.c.b16 %v554, %v548
    %v681 = vpack.c.b16 %v561, %v555
    %v682 = vpack.c.b16 %v562, %v556
    %v683 = vpack.c.b16 %v563, %v557
    %v684 = vpack.c.b16 %v564, %v558
    %v685 = vpack.c.b16 %v565, %v559
    %v686 = vpack.c.b16 %v566, %v560
    %v687 = vpack.c.b16 %v573, %v567
    %v688 = vpack.c.b16 %v574, %v568
    %v689 = vpack.c.b16 %v575, %v569
    %v690 = vpack.c.b16 %v576, %v570
    %v691 = vpack.c.b16 %v577, %v571
    %v692 = vpack.c.b16 %v578, %v572
    %v693 = vpack.c.b16 %v585, %v579
    %v694 = vpack.c.b16 %v586, %v580
    %v695 = vpack.c.b16 %v587, %v581
    %v696 = vpack.c.b16 %v588, %v582
    %v697 = vpack.c.b16 %v589, %v583
    %v698 = vpack.c.b16 %v590, %v584
    %v699 = vpack.c.b16 %v597, %v591
    %v700 = vpack.c.b16 %v598, %v592
    %v701 = vpack.c.b16 %v599, %v593
    %v702 = vpack.c.b16 %v600, %v594
    %v703 = vpack.c.b16 %v601, %v595
    %v704 = vpack.c.b16 %v602, %v596
    %v705 = vpack.c.b16 %v609, %v603
    %v706 = vpack.c.b16 %v610, %v604
    %v707 = vpack.c.b16 %v611, %v605
    %v708 = vpack.c.b16 %v612, %v606
    %v709 = vpack.c.b16 %v613, %v607
    %v710 = vpack.c.b16 %v614, %v608
    %807 = vmatprep.subr.bf16.mxu0 %v658
    %808 = vmatpush1.bf16.msra.mxu0 %v657
    %809 = vmatprep.subr.bf16.mxu0 %v652
    %810 = vmatpush1.bf16.msra.mxu0 %v651
    %811 = vmatprep.subr.bf16.mxu0 %v646
    %812 = vmatpush1.bf16.msra.mxu0 %v645
    %813 = vmatprep.subr.bf16.mxu0 %v640
    %814 = vmatpush1.bf16.msra.mxu0 %v639
    %815 = vmatprep.subr.bf16.mxu0 %v634
    %816 = vmatpush1.bf16.msra.mxu0 %v633
    %817 = vmatprep.subr.bf16.mxu0 %v628
    %818 = vmatpush1.bf16.msra.mxu0 %v627
    %819 = vmatprep.subr.bf16.mxu0 %v622
    %820 = vmatpush1.bf16.msra.mxu0 %v621
    %821 = vmatprep.subr.bf16.mxu0 %v616
    %822 = vmatpush1.bf16.msra.mxu0 %v615
    %823 = vmatprep.subr.bf16.mxu0 %v706
    %824 = vmatpush2.bf16.msra.mxu0 %v705
    %825 = vmatprep.subr.bf16.mxu0 %v700
    %826 = vmatpush2.bf16.msra.mxu0 %v699
    %827 = vmatprep.subr.bf16.mxu0 %v694
    %828 = vmatpush2.bf16.msra.mxu0 %v693
    %829 = vmatprep.subr.bf16.mxu0 %v688
    %830 = vmatpush2.bf16.msra.mxu0 %v687
    %831 = vmatprep.subr.bf16.mxu0 %v682
    %832 = vmatpush2.bf16.msra.mxu0 %v681
    %833 = vmatprep.subr.bf16.mxu0 %v676
    %834 = vmatpush2.bf16.msra.mxu0 %v675
    %835 = vmatprep.subr.bf16.mxu0 %v670
    %836 = vmatpush2.bf16.msra.mxu0 %v669
    %837 = vmatprep.subr.bf16.mxu0 %v664
    %838 = vmatpush2.bf16.msra.mxu0 %v663
    %839 = vmatprep.mubr.bf16.mxu0 %v324
    %840 = vmatmul.mubr.bf16.gmra.mxu0 %v323
    %v841 = vpop.f32.mrf.mxu0
    %v842 = vadd.f32 %v290, %v841
    %v843 = vpop.f32.mrf.mxu0
    %v844 = vadd.f32 %v294, %v843
    %v845 = vpop.f32.mrf.mxu0
    %v846 = vadd.f32 %v290, %v845
    %v847 = vpop.f32.mrf.mxu0
    %v848 = vadd.f32 %v294, %v847
    %849 = vdwg.mxu0
    %850 = vmatprep.subr.bf16.mxu0 %v660
    %851 = vmatpush1.bf16.msra.mxu0 %v659
    %852 = vmatprep.subr.bf16.mxu0 %v654
    %853 = vmatpush1.bf16.msra.mxu0 %v653
    %854 = vmatprep.subr.bf16.mxu0 %v648
    %855 = vmatpush1.bf16.msra.mxu0 %v647
    %856 = vmatprep.subr.bf16.mxu0 %v642
    %857 = vmatpush1.bf16.msra.mxu0 %v641
    %858 = vmatprep.subr.bf16.mxu0 %v636
    %859 = vmatpush1.bf16.msra.mxu0 %v635
    %860 = vmatprep.subr.bf16.mxu0 %v630
    %861 = vmatpush1.bf16.msra.mxu0 %v629
    %862 = vmatprep.subr.bf16.mxu0 %v624
    %863 = vmatpush1.bf16.msra.mxu0 %v623
    %864 = vmatprep.subr.bf16.mxu0 %v618
    %865 = vmatpush1.bf16.msra.mxu0 %v617
    %866 = vmatprep.subr.bf16.mxu0 %v708
    %867 = vmatpush2.bf16.msra.mxu0 %v707
    %868 = vmatprep.subr.bf16.mxu0 %v702
    %869 = vmatpush2.bf16.msra.mxu0 %v701
    %870 = vmatprep.subr.bf16.mxu0 %v696
    %871 = vmatpush2.bf16.msra.mxu0 %v695
    %872 = vmatprep.subr.bf16.mxu0 %v690
    %873 = vmatpush2.bf16.msra.mxu0 %v689
    %874 = vmatprep.subr.bf16.mxu0 %v684
    %875 = vmatpush2.bf16.msra.mxu0 %v683
    %876 = vmatprep.subr.bf16.mxu0 %v678
    %877 = vmatpush2.bf16.msra.mxu0 %v677
    %878 = vmatprep.subr.bf16.mxu0 %v672
    %879 = vmatpush2.bf16.msra.mxu0 %v671
    %880 = vmatprep.subr.bf16.mxu0 %v666
    %881 = vmatpush2.bf16.msra.mxu0 %v665
    %882 = vmatprep.mubr.bf16.mxu0 %v324
    %883 = vmatmul.mubr.bf16.gmra.mxu0 %v323
    %v884 = vpop.f32.mrf.mxu0
    %v885 = vadd.f32 %v298, %v884
    %v886 = vpop.f32.mrf.mxu0
    %v887 = vadd.f32 %v302, %v886
    %v888 = vpop.f32.mrf.mxu0
    %v889 = vadd.f32 %v298, %v888
    %v890 = vpop.f32.mrf.mxu0
    %v891 = vadd.f32 %v302, %v890
    %892 = vdwg.mxu0
    %893 = vmatprep.subr.bf16.mxu0 %v662
    %894 = vmatpush1.bf16.msra.mxu0 %v661
    %895 = vmatprep.subr.bf16.mxu0 %v656
    %896 = vmatpush1.bf16.msra.mxu0 %v655
    %897 = vmatprep.subr.bf16.mxu0 %v650
    %898 = vmatpush1.bf16.msra.mxu0 %v649
    %899 = vmatprep.subr.bf16.mxu0 %v644
    %900 = vmatpush1.bf16.msra.mxu0 %v643
    %901 = vmatprep.subr.bf16.mxu0 %v638
    %902 = vmatpush1.bf16.msra.mxu0 %v637
    %903 = vmatprep.subr.bf16.mxu0 %v632
    %904 = vmatpush1.bf16.msra.mxu0 %v631
    %905 = vmatprep.subr.bf16.mxu0 %v626
    %906 = vmatpush1.bf16.msra.mxu0 %v625
    %907 = vmatprep.subr.bf16.mxu0 %v620
    %908 = vmatpush1.bf16.msra.mxu0 %v619
    %909 = vmatprep.subr.bf16.mxu0 %v710
    %910 = vmatpush2.bf16.msra.mxu0 %v709
    %911 = vmatprep.subr.bf16.mxu0 %v704
    %912 = vmatpush2.bf16.msra.mxu0 %v703
    %913 = vmatprep.subr.bf16.mxu0 %v698
    %914 = vmatpush2.bf16.msra.mxu0 %v697
    %915 = vmatprep.subr.bf16.mxu0 %v692
    %916 = vmatpush2.bf16.msra.mxu0 %v691
    %917 = vmatprep.subr.bf16.mxu0 %v686
    %918 = vmatpush2.bf16.msra.mxu0 %v685
    %919 = vmatprep.subr.bf16.mxu0 %v680
    %920 = vmatpush2.bf16.msra.mxu0 %v679
    %921 = vmatprep.subr.bf16.mxu0 %v674
    %922 = vmatpush2.bf16.msra.mxu0 %v673
    %923 = vmatprep.subr.bf16.mxu0 %v668
    %924 = vmatpush2.bf16.msra.mxu0 %v667
    %925 = vmatprep.mubr.bf16.mxu0 %v324
    %926 = vmatmul.mubr.bf16.gmra.mxu0 %v323
    %v927 = vpop.f32.mrf.mxu0
    %v928 = vadd.f32 %v306, %v927
    %v929 = vpop.f32.mrf.mxu0
    %v930 = vadd.f32 %v310, %v929
    %v931 = vpop.f32.mrf.mxu0
    %v932 = vadd.f32 %v306, %v931
    %v933 = vpop.f32.mrf.mxu0
    %v934 = vadd.f32 %v310, %v933
    %935 = vdwg.mxu0
    %v936 = vld [vmem:[#allocation3 + $0x10] sm:$0xff]
    %v937 = vld [vmem:[#allocation3 + $0x18] sm:$0xff]
    %v938 = vld [vmem:[#allocation3 + $0x20] sm:$0xff]
    %v939 = vld [vmem:[#allocation3 + $0x28] sm:$0xff]
    %v940 = vld [vmem:[#allocation3 + $0x30] sm:$0xff]
    %v941 = vld [vmem:[#allocation3 + $0x38] sm:$0xff]
    %v942 = vld [vmem:[#allocation3 + $0x40] sm:$0xff]
    %v943 = vld [vmem:[#allocation3 + $0x48] sm:$0xff]
    %v944 = vld [vmem:[#allocation3 + $0x50] sm:$0xff]
    %v945 = vld [vmem:[#allocation3 + $0x58] sm:$0xff]
    %v946 = vld [vmem:[#allocation3 + $0x60] sm:$0xff]
    %v947 = vld [vmem:[#allocation3 + $0x68] sm:$0xff]
    %v948 = vld [vmem:[#allocation3 + $0x70] sm:$0xff]
    %v949 = vld [vmem:[#allocation3 + $0x78] sm:$0xff]
    %v964 = vunpack.c.l.b16 %v936
    %v965 = vunpack.c.h.b16 %v936
    %v966 = vunpack.c.l.b16 %v937
    %v967 = vunpack.c.h.b16 %v937
    %v968 = vunpack.c.l.b16 %v938
    %v969 = vunpack.c.h.b16 %v938
    %v970 = vunpack.c.l.b16 %v939
    %v971 = vunpack.c.h.b16 %v939
    %v972 = vunpack.c.l.b16 %v940
    %v973 = vunpack.c.h.b16 %v940
    %v974 = vunpack.c.l.b16 %v941
    %v975 = vunpack.c.h.b16 %v941
    %v976 = vunpack.c.l.b16 %v942
    %v977 = vunpack.c.h.b16 %v942
    %v978 = vunpack.c.l.b16 %v943
    %v979 = vunpack.c.h.b16 %v943
    %v980 = vunpack.c.l.b16 %v944
    %v981 = vunpack.c.h.b16 %v944
    %v982 = vunpack.c.l.b16 %v945
    %v983 = vunpack.c.h.b16 %v945
    %v984 = vunpack.c.l.b16 %v946
    %v985 = vunpack.c.h.b16 %v946
    %v986 = vunpack.c.l.b16 %v947
    %v987 = vunpack.c.h.b16 %v947
    %v988 = vunpack.c.l.b16 %v948
    %v989 = vunpack.c.h.b16 %v948
    %v990 = vunpack.c.l.b16 %v949
    %v991 = vunpack.c.h.b16 %v949
    %v992 = vpack.c.b16 %v966, %v964
    %v993 = vpack.c.b16 %v967, %v965
    %v994 = vpack.c.b16 %v970, %v968
    %v995 = vpack.c.b16 %v971, %v969
    %v996 = vpack.c.b16 %v974, %v972
    %v997 = vpack.c.b16 %v975, %v973
    %v998 = vpack.c.b16 %v978, %v976
    %v999 = vpack.c.b16 %v979, %v977
    %v1000 = vpack.c.b16 %v982, %v980
    %v1001 = vpack.c.b16 %v983, %v981
    %v1002 = vpack.c.b16 %v986, %v984
    %v1003 = vpack.c.b16 %v987, %v985
    %v1004 = vpack.c.b16 %v990, %v988
    %v1005 = vpack.c.b16 %v991, %v989
    %1020 = vmatprep.subr.bf16.mxu0 %v658
    %1021 = vmatpush1.bf16.msra.mxu0 %v657
    %1022 = vmatprep.subr.bf16.mxu0 %v652
    %1023 = vmatpush1.bf16.msra.mxu0 %v651
    %1024 = vmatprep.subr.bf16.mxu0 %v646
    %1025 = vmatpush1.bf16.msra.mxu0 %v645
    %1026 = vmatprep.subr.bf16.mxu0 %v640
    %1027 = vmatpush1.bf16.msra.mxu0 %v639
    %1028 = vmatprep.subr.bf16.mxu0 %v634
    %1029 = vmatpush1.bf16.msra.mxu0 %v633
    %1030 = vmatprep.subr.bf16.mxu0 %v628
    %1031 = vmatpush1.bf16.msra.mxu0 %v627
    %1032 = vmatprep.subr.bf16.mxu0 %v622
    %1033 = vmatpush1.bf16.msra.mxu0 %v621
    %1034 = vmatprep.subr.bf16.mxu0 %v616
    %1035 = vmatpush1.bf16.msra.mxu0 %v615
    %1036 = vmatprep.subr.bf16.mxu0 %v706
    %1037 = vmatpush2.bf16.msra.mxu0 %v705
    %1038 = vmatprep.subr.bf16.mxu0 %v700
    %1039 = vmatpush2.bf16.msra.mxu0 %v699
    %1040 = vmatprep.subr.bf16.mxu0 %v694
    %1041 = vmatpush2.bf16.msra.mxu0 %v693
    %1042 = vmatprep.subr.bf16.mxu0 %v688
    %1043 = vmatpush2.bf16.msra.mxu0 %v687
    %1044 = vmatprep.subr.bf16.mxu0 %v682
    %1045 = vmatpush2.bf16.msra.mxu0 %v681
    %1046 = vmatprep.subr.bf16.mxu0 %v676
    %1047 = vmatpush2.bf16.msra.mxu0 %v675
    %1048 = vmatprep.subr.bf16.mxu0 %v670
    %1049 = vmatpush2.bf16.msra.mxu0 %v669
    %1050 = vmatprep.subr.bf16.mxu0 %v664
    %1051 = vmatpush2.bf16.msra.mxu0 %v663
    %1052 = vmatprep.mubr.bf16.mxu0 %v993
    %1053 = vmatmul.mubr.bf16.gmra.mxu0 %v992
    %v1054 = vpop.f32.mrf.mxu0
    %v1055 = vadd.f32 %v290, %v1054
    %v1056 = vpop.f32.mrf.mxu0
    %v1057 = vadd.f32 %v294, %v1056
    %v1058 = vpop.f32.mrf.mxu0
    %v1059 = vadd.f32 %v290, %v1058
    %v1060 = vpop.f32.mrf.mxu0
    %v1061 = vadd.f32 %v294, %v1060
    %1062 = vmatprep.mubr.bf16.mxu0 %v995
    %1063 = vmatmul.mubr.bf16.gmra.mxu0 %v994
    %v1064 = vpop.f32.mrf.mxu0
    %v1065 = vadd.f32 %v290, %v1064
    %v1066 = vpop.f32.mrf.mxu0
    %v1067 = vadd.f32 %v294, %v1066
    %v1068 = vpop.f32.mrf.mxu0
    %v1069 = vadd.f32 %v290, %v1068
    %v1070 = vpop.f32.mrf.mxu0
    %v1071 = vadd.f32 %v294, %v1070
    %1072 = vmatprep.mubr.bf16.mxu0 %v997
    %1073 = vmatmul.mubr.bf16.gmra.mxu0 %v996
    %v1074 = vpop.f32.mrf.mxu0
    %v1075 = vadd.f32 %v290, %v1074
    %v1076 = vpop.f32.mrf.mxu0
    %v1077 = vadd.f32 %v294, %v1076
    %v1078 = vpop.f32.mrf.mxu0
    %v1079 = vadd.f32 %v290, %v1078
    %v1080 = vpop.f32.mrf.mxu0
    %v1081 = vadd.f32 %v294, %v1080
    %1082 = vmatprep.mubr.bf16.mxu0 %v999
    %1083 = vmatmul.mubr.bf16.gmra.mxu0 %v998
    %v1084 = vpop.f32.mrf.mxu0
    %v1085 = vadd.f32 %v290, %v1084
    %v1086 = vpop.f32.mrf.mxu0
    %v1087 = vadd.f32 %v294, %v1086
    %v1088 = vpop.f32.mrf.mxu0
    %v1089 = vadd.f32 %v290, %v1088
    %v1090 = vpop.f32.mrf.mxu0
    %v1091 = vadd.f32 %v294, %v1090
    %1092 = vmatprep.mubr.bf16.mxu0 %v1001
    %1093 = vmatmul.mubr.bf16.gmra.mxu0 %v1000
    %v1094 = vpop.f32.mrf.mxu0
    %v1095 = vadd.f32 %v290, %v1094
    %v1096 = vpop.f32.mrf.mxu0
    %v1097 = vadd.f32 %v294, %v1096
    %v1098 = vpop.f32.mrf.mxu0
    %v1099 = vadd.f32 %v290, %v1098
    %v1100 = vpop.f32.mrf.mxu0
    %v1101 = vadd.f32 %v294, %v1100
    %1102 = vmatprep.mubr.bf16.mxu0 %v1003
    %1103 = vmatmul.mubr.bf16.gmra.mxu0 %v1002
    %v1104 = vpop.f32.mrf.mxu0
    %v1105 = vadd.f32 %v290, %v1104
    %v1106 = vpop.f32.mrf.mxu0
    %v1107 = vadd.f32 %v294, %v1106
    %v1108 = vpop.f32.mrf.mxu0
    %v1109 = vadd.f32 %v290, %v1108
    %v1110 = vpop.f32.mrf.mxu0
    %v1111 = vadd.f32 %v294, %v1110
    %1112 = vmatprep.mubr.bf16.mxu0 %v1005
    %1113 = vmatmul.mubr.bf16.gmra.mxu0 %v1004
    %v1114 = vpop.f32.mrf.mxu0
    %v1115 = vadd.f32 %v290, %v1114
    %v1116 = vpop.f32.mrf.mxu0
    %v1117 = vadd.f32 %v294, %v1116
    %v1118 = vpop.f32.mrf.mxu0
    %v1119 = vadd.f32 %v290, %v1118
    %v1120 = vpop.f32.mrf.mxu0
    %v1121 = vadd.f32 %v294, %v1120
    %1122 = vdwg.mxu0
    %1123 = vmatprep.subr.bf16.mxu0 %v660
    %1124 = vmatpush1.bf16.msra.mxu0 %v659
    %1125 = vmatprep.subr.bf16.mxu0 %v654
    %1126 = vmatpush1.bf16.msra.mxu0 %v653
    %1127 = vmatprep.subr.bf16.mxu0 %v648
    %1128 = vmatpush1.bf16.msra.mxu0 %v647
    %1129 = vmatprep.subr.bf16.mxu0 %v642
    %1130 = vmatpush1.bf16.msra.mxu0 %v641
    %1131 = vmatprep.subr.bf16.mxu0 %v636
    %1132 = vmatpush1.bf16.msra.mxu0 %v635
    %1133 = vmatprep.subr.bf16.mxu0 %v630
    %1134 = vmatpush1.bf16.msra.mxu0 %v629
    %1135 = vmatprep.subr.bf16.mxu0 %v624
    %1136 = vmatpush1.bf16.msra.mxu0 %v623
    %1137 = vmatprep.subr.bf16.mxu0 %v618
    %1138 = vmatpush1.bf16.msra.mxu0 %v617
    %1139 = vmatprep.subr.bf16.mxu0 %v708
    %1140 = vmatpush2.bf16.msra.mxu0 %v707
    %1141 = vmatprep.subr.bf16.mxu0 %v702
    %1142 = vmatpush2.bf16.msra.mxu0 %v701
    %1143 = vmatprep.subr.bf16.mxu0 %v696
    %1144 = vmatpush2.bf16.msra.mxu0 %v695
    %1145 = vmatprep.subr.bf16.mxu0 %v690
    %1146 = vmatpush2.bf16.msra.mxu0 %v689
    %1147 = vmatprep.subr.bf16.mxu0 %v684
    %1148 = vmatpush2.bf16.msra.mxu0 %v683
    %1149 = vmatprep.subr.bf16.mxu0 %v678
    %1150 = vmatpush2.bf16.msra.mxu0 %v677
    %1151 = vmatprep.subr.bf16.mxu0 %v672
    %1152 = vmatpush2.bf16.msra.mxu0 %v671
    %1153 = vmatprep.subr.bf16.mxu0 %v666
    %1154 = vmatpush2.bf16.msra.mxu0 %v665
    %1155 = vmatprep.mubr.bf16.mxu0 %v993
    %1156 = vmatmul.mubr.bf16.gmra.mxu0 %v992
    %v1157 = vpop.f32.mrf.mxu0
    %v1158 = vadd.f32 %v298, %v1157
    %v1159 = vpop.f32.mrf.mxu0
    %v1160 = vadd.f32 %v302, %v1159
    %v1161 = vpop.f32.mrf.mxu0
    %v1162 = vadd.f32 %v298, %v1161
    %v1163 = vpop.f32.mrf.mxu0
    %v1164 = vadd.f32 %v302, %v1163
    %1165 = vmatprep.mubr.bf16.mxu0 %v995
    %1166 = vmatmul.mubr.bf16.gmra.mxu0 %v994
    %v1167 = vpop.f32.mrf.mxu0
    %v1168 = vadd.f32 %v298, %v1167
    %v1169 = vpop.f32.mrf.mxu0
    %v1170 = vadd.f32 %v302, %v1169
    %v1171 = vpop.f32.mrf.mxu0
    %v1172 = vadd.f32 %v298, %v1171
    %v1173 = vpop.f32.mrf.mxu0
    %v1174 = vadd.f32 %v302, %v1173
    %1175 = vmatprep.mubr.bf16.mxu0 %v997
    %1176 = vmatmul.mubr.bf16.gmra.mxu0 %v996
    %v1177 = vpop.f32.mrf.mxu0
    %v1178 = vadd.f32 %v298, %v1177
    %v1179 = vpop.f32.mrf.mxu0
    %v1180 = vadd.f32 %v302, %v1179
    %v1181 = vpop.f32.mrf.mxu0
    %v1182 = vadd.f32 %v298, %v1181
    %v1183 = vpop.f32.mrf.mxu0
    %v1184 = vadd.f32 %v302, %v1183
    %1185 = vmatprep.mubr.bf16.mxu0 %v999
    %1186 = vmatmul.mubr.bf16.gmra.mxu0 %v998
    %v1187 = vpop.f32.mrf.mxu0
    %v1188 = vadd.f32 %v298, %v1187
    %v1189 = vpop.f32.mrf.mxu0
    %v1190 = vadd.f32 %v302, %v1189
    %v1191 = vpop.f32.mrf.mxu0
    %v1192 = vadd.f32 %v298, %v1191
    %v1193 = vpop.f32.mrf.mxu0
    %v1194 = vadd.f32 %v302, %v1193
    %1195 = vmatprep.mubr.bf16.mxu0 %v1001
    %1196 = vmatmul.mubr.bf16.gmra.mxu0 %v1000
    %v1197 = vpop.f32.mrf.mxu0
    %v1198 = vadd.f32 %v298, %v1197
    %v1199 = vpop.f32.mrf.mxu0
    %v1200 = vadd.f32 %v302, %v1199
    %v1201 = vpop.f32.mrf.mxu0
    %v1202 = vadd.f32 %v298, %v1201
    %v1203 = vpop.f32.mrf.mxu0
    %v1204 = vadd.f32 %v302, %v1203
    %1205 = vmatprep.mubr.bf16.mxu0 %v1003
    %1206 = vmatmul.mubr.bf16.gmra.mxu0 %v1002
    %v1207 = vpop.f32.mrf.mxu0
    %v1208 = vadd.f32 %v298, %v1207
    %v1209 = vpop.f32.mrf.mxu0
    %v1210 = vadd.f32 %v302, %v1209
    %v1211 = vpop.f32.mrf.mxu0
    %v1212 = vadd.f32 %v298, %v1211
    %v1213 = vpop.f32.mrf.mxu0
    %v1214 = vadd.f32 %v302, %v1213
    %1215 = vmatprep.mubr.bf16.mxu0 %v1005
    %1216 = vmatmul.mubr.bf16.gmra.mxu0 %v1004
    %v1217 = vpop.f32.mrf.mxu0
    %v1218 = vadd.f32 %v298, %v1217
    %v1219 = vpop.f32.mrf.mxu0
    %v1220 = vadd.f32 %v302, %v1219
    %v1221 = vpop.f32.mrf.mxu0
    %v1222 = vadd.f32 %v298, %v1221
    %v1223 = vpop.f32.mrf.mxu0
    %v1224 = vadd.f32 %v302, %v1223
    %1225 = vdwg.mxu0
    %1226 = vmatprep.subr.bf16.mxu0 %v662
    %1227 = vmatpush1.bf16.msra.mxu0 %v661
    %1228 = vmatprep.subr.bf16.mxu0 %v656
    %1229 = vmatpush1.bf16.msra.mxu0 %v655
    %1230 = vmatprep.subr.bf16.mxu0 %v650
    %1231 = vmatpush1.bf16.msra.mxu0 %v649
    %1232 = vmatprep.subr.bf16.mxu0 %v644
    %1233 = vmatpush1.bf16.msra.mxu0 %v643
    %1234 = vmatprep.subr.bf16.mxu0 %v638
    %1235 = vmatpush1.bf16.msra.mxu0 %v637
    %1236 = vmatprep.subr.bf16.mxu0 %v632
    %1237 = vmatpush1.bf16.msra.mxu0 %v631
    %1238 = vmatprep.subr.bf16.mxu0 %v626
    %1239 = vmatpush1.bf16.msra.mxu0 %v625
    %1240 = vmatprep.subr.bf16.mxu0 %v620
    %1241 = vmatpush1.bf16.msra.mxu0 %v619
    %1242 = vmatprep.subr.bf16.mxu0 %v710
    %1243 = vmatpush2.bf16.msra.mxu0 %v709
    %1244 = vmatprep.subr.bf16.mxu0 %v704
    %1245 = vmatpush2.bf16.msra.mxu0 %v703
    %1246 = vmatprep.subr.bf16.mxu0 %v698
    %1247 = vmatpush2.bf16.msra.mxu0 %v697
    %1248 = vmatprep.subr.bf16.mxu0 %v692
    %1249 = vmatpush2.bf16.msra.mxu0 %v691
    %1250 = vmatprep.subr.bf16.mxu0 %v686
    %1251 = vmatpush2.bf16.msra.mxu0 %v685
    %1252 = vmatprep.subr.bf16.mxu0 %v680
    %1253 = vmatpush2.bf16.msra.mxu0 %v679
    %1254 = vmatprep.subr.bf16.mxu0 %v674
    %1255 = vmatpush2.bf16.msra.mxu0 %v673
    %1256 = vmatprep.subr.bf16.mxu0 %v668
    %1257 = vmatpush2.bf16.msra.mxu0 %v667
    %1258 = vmatprep.mubr.bf16.mxu0 %v993
    %1259 = vmatmul.mubr.bf16.gmra.mxu0 %v992
    %v1260 = vpop.f32.mrf.mxu0
    %v1261 = vadd.f32 %v306, %v1260
    %v1262 = vpop.f32.mrf.mxu0
    %v1263 = vadd.f32 %v310, %v1262
    %v1264 = vpop.f32.mrf.mxu0
    %v1265 = vadd.f32 %v306, %v1264
    %v1266 = vpop.f32.mrf.mxu0
    %v1267 = vadd.f32 %v310, %v1266
    %1268 = vmatprep.mubr.bf16.mxu0 %v995
    %1269 = vmatmul.mubr.bf16.gmra.mxu0 %v994
    %v1270 = vpop.f32.mrf.mxu0
    %v1271 = vadd.f32 %v306, %v1270
    %v1272 = vpop.f32.mrf.mxu0
    %v1273 = vadd.f32 %v310, %v1272
    %v1274 = vpop.f32.mrf.mxu0
    %v1275 = vadd.f32 %v306, %v1274
    %v1276 = vpop.f32.mrf.mxu0
    %v1277 = vadd.f32 %v310, %v1276
    %1278 = vmatprep.mubr.bf16.mxu0 %v997
    %1279 = vmatmul.mubr.bf16.gmra.mxu0 %v996
    %v1280 = vpop.f32.mrf.mxu0
    %v1281 = vadd.f32 %v306, %v1280
    %v1282 = vpop.f32.mrf.mxu0
    %v1283 = vadd.f32 %v310, %v1282
    %v1284 = vpop.f32.mrf.mxu0
    %v1285 = vadd.f32 %v306, %v1284
    %v1286 = vpop.f32.mrf.mxu0
    %v1287 = vadd.f32 %v310, %v1286
    %1288 = vmatprep.mubr.bf16.mxu0 %v999
    %1289 = vmatmul.mubr.bf16.gmra.mxu0 %v998
    %v1290 = vpop.f32.mrf.mxu0
    %v1291 = vadd.f32 %v306, %v1290
    %v1292 = vpop.f32.mrf.mxu0
    %v1293 = vadd.f32 %v310, %v1292
    %v1294 = vpop.f32.mrf.mxu0
    %v1295 = vadd.f32 %v306, %v1294
    %v1296 = vpop.f32.mrf.mxu0
    %v1297 = vadd.f32 %v310, %v1296
    %1298 = vmatprep.mubr.bf16.mxu0 %v1001
    %1299 = vmatmul.mubr.bf16.gmra.mxu0 %v1000
    %v1300 = vpop.f32.mrf.mxu0
    %v1301 = vadd.f32 %v306, %v1300
    %v1302 = vpop.f32.mrf.mxu0
    %v1303 = vadd.f32 %v310, %v1302
    %v1304 = vpop.f32.mrf.mxu0
    %v1305 = vadd.f32 %v306, %v1304
    %v1306 = vpop.f32.mrf.mxu0
    %v1307 = vadd.f32 %v310, %v1306
    %1308 = vmatprep.mubr.bf16.mxu0 %v1003
    %1309 = vmatmul.mubr.bf16.gmra.mxu0 %v1002
    %v1310 = vpop.f32.mrf.mxu0
    %v1311 = vadd.f32 %v306, %v1310
    %v1312 = vpop.f32.mrf.mxu0
    %v1313 = vadd.f32 %v310, %v1312
    %v1314 = vpop.f32.mrf.mxu0
    %v1315 = vadd.f32 %v306, %v1314
    %v1316 = vpop.f32.mrf.mxu0
    %v1317 = vadd.f32 %v310, %v1316
    %1318 = vmatprep.mubr.bf16.mxu0 %v1005
    %1319 = vmatmul.mubr.bf16.gmra.mxu0 %v1004
    %v1320 = vpop.f32.mrf.mxu0
    %v1321 = vadd.f32 %v306, %v1320
    %v1322 = vpop.f32.mrf.mxu0
    %v1323 = vadd.f32 %v310, %v1322
    %v1324 = vpop.f32.mrf.mxu0
    %v1325 = vadd.f32 %v306, %v1324
    %v1326 = vpop.f32.mrf.mxu0
    %v1327 = vadd.f32 %v310, %v1326
    %1328 = vdwg.mxu0
    %v1329 = vxor.u32 %v842, 2147483648
    %v1330 = vxor.u32 %v844, 2147483648
    %v1331 = vxor.u32 %v846, 2147483648
    %v1332 = vxor.u32 %v848, 2147483648
    %v1333 = vmul.f32 %v1329, 1.442695
    %v1334 = vpow.pop %v1333
    %v1335 = vmul.f32 %v1330, 1.442695
    %v1336 = vpow.pop %v1335
    %v1337 = vmul.f32 %v1331, 1.442695
    %v1338 = vpow.pop %v1337
    %v1339 = vmul.f32 %v1332, 1.442695
    %v1340 = vpow.pop %v1339
    %v1341 = vadd.f32 %v1334, 1.0
    %v1342 = vadd.f32 %v1336, 1.0
    %v1343 = vadd.f32 %v1338, 1.0
    %v1344 = vadd.f32 %v1340, 1.0
    %v1345 = vrcp.pop %v1341
    %v1346 = vmul.f32 1.0, %v1345
    %v1347 = vrcp.pop %v1342
    %v1348 = vmul.f32 1.0, %v1347
    %v1349 = vrcp.pop %v1343
    %v1350 = vmul.f32 1.0, %v1349
    %v1351 = vrcp.pop %v1344
    %v1352 = vmul.f32 1.0, %v1351
    %v1353 = vxor.u32 %v885, 2147483648
    %v1354 = vxor.u32 %v887, 2147483648
    %v1355 = vxor.u32 %v889, 2147483648
    %v1356 = vxor.u32 %v891, 2147483648
    %v1357 = vmul.f32 %v1353, 1.442695
    %v1358 = vpow.pop %v1357
    %v1359 = vmul.f32 %v1354, 1.442695
    %v1360 = vpow.pop %v1359
    %v1361 = vmul.f32 %v1355, 1.442695
    %v1362 = vpow.pop %v1361
    %v1363 = vmul.f32 %v1356, 1.442695
    %v1364 = vpow.pop %v1363
    %v1365 = vadd.f32 %v1358, 1.0
    %v1366 = vadd.f32 %v1360, 1.0
    %v1367 = vadd.f32 %v1362, 1.0
    %v1368 = vadd.f32 %v1364, 1.0
    %v1369 = vrcp.pop %v1365
    %v1370 = vmul.f32 1.0, %v1369
    %v1371 = vrcp.pop %v1366
    %v1372 = vmul.f32 1.0, %v1371
    %v1373 = vrcp.pop %v1367
    %v1374 = vmul.f32 1.0, %v1373
    %v1375 = vrcp.pop %v1368
    %v1376 = vmul.f32 1.0, %v1375
    %v1378 = vlaneseq
    %v1379 = vshrl.u32 %v1378, 7
    %v1380 = vsub.s32 0, %v1379
    %v1381 = vrot.slane %v283, %v1380
    %v1382 = vlaneseq
    %v1383 = vshrl.u32 %v1382, 7
    %v1384 = vsub.s32 1, %v1383
    %v1385 = vrot.slane %v283, %v1384
    %v1388 = vmul.f32 %v1346, %v1381
    %v1389 = vmul.f32 %v1348, %v1385
    %v1390 = vmul.f32 %v1350, %v1381
    %v1391 = vmul.f32 %v1352, %v1385
    %v1392 = vadd.f32 %v928, %v1388
    %v1393 = vadd.f32 %v930, %v1389
    %v1394 = vadd.f32 %v932, %v1390
    %v1395 = vadd.f32 %v934, %v1391
    %v1396 = vtanh.pop %v1392
    %v1397 = vtanh.pop %v1393
    %v1398 = vtanh.pop %v1394
    %v1399 = vtanh.pop %v1395
    %v1400 = vsub.f32 1.0, %v1370
    %v1401 = vsub.f32 1.0, %v1372
    %v1402 = vsub.f32 1.0, %v1374
    %v1403 = vsub.f32 1.0, %v1376
    %v1404 = vmul.f32 %v1400, %v1396
    %v1405 = vmul.f32 %v1401, %v1397
    %v1406 = vmul.f32 %v1402, %v1398
    %v1407 = vmul.f32 %v1403, %v1399
    %v1408 = vpack.c.bf16 %v1406, %v1404
    %v1409 = vpack.c.bf16 %v1407, %v1405
    %v1506 = vunpack.c.l.b16 %v186
    %v1507 = vunpack.c.h.b16 %v186
    %v1508 = vunpack.c.l.b16 %v187
    %v1509 = vunpack.c.h.b16 %v187
    %v1510 = vunpack.c.l.b16 %v188
    %v1511 = vunpack.c.h.b16 %v188
    %v1512 = vunpack.c.l.b16 %v189
    %v1513 = vunpack.c.h.b16 %v189
    %v1514 = vunpack.c.l.b16 %v190
    %v1515 = vunpack.c.h.b16 %v190
    %v1516 = vunpack.c.l.b16 %v191
    %v1517 = vunpack.c.h.b16 %v191
    %v1518 = vunpack.c.l.b16 %v192
    %v1519 = vunpack.c.h.b16 %v192
    %v1520 = vunpack.c.l.b16 %v193
    %v1521 = vunpack.c.h.b16 %v193
    %v1522 = vunpack.c.l.b16 %v194
    %v1523 = vunpack.c.h.b16 %v194
    %v1524 = vunpack.c.l.b16 %v195
    %v1525 = vunpack.c.h.b16 %v195
    %v1526 = vunpack.c.l.b16 %v196
    %v1527 = vunpack.c.h.b16 %v196
    %v1528 = vunpack.c.l.b16 %v197
    %v1529 = vunpack.c.h.b16 %v197
    %v1530 = vunpack.c.l.b16 %v198
    %v1531 = vunpack.c.h.b16 %v198
    %v1532 = vunpack.c.l.b16 %v199
    %v1533 = vunpack.c.h.b16 %v199
    %v1534 = vunpack.c.l.b16 %v200
    %v1535 = vunpack.c.h.b16 %v200
    %v1536 = vunpack.c.l.b16 %v201
    %v1537 = vunpack.c.h.b16 %v201
    %v1538 = vunpack.c.l.b16 %v202
    %v1539 = vunpack.c.h.b16 %v202
    %v1540 = vunpack.c.l.b16 %v203
    %v1541 = vunpack.c.h.b16 %v203
    %v1542 = vunpack.c.l.b16 %v204
    %v1543 = vunpack.c.h.b16 %v204
    %v1544 = vunpack.c.l.b16 %v205
    %v1545 = vunpack.c.h.b16 %v205
    %v1546 = vunpack.c.l.b16 %v206
    %v1547 = vunpack.c.h.b16 %v206
    %v1548 = vunpack.c.l.b16 %v207
    %v1549 = vunpack.c.h.b16 %v207
    %v1550 = vunpack.c.l.b16 %v208
    %v1551 = vunpack.c.h.b16 %v208
    %v1552 = vunpack.c.l.b16 %v209
    %v1553 = vunpack.c.h.b16 %v209
    %v1554 = vunpack.c.l.b16 %v210
    %v1555 = vunpack.c.h.b16 %v210
    %v1556 = vunpack.c.l.b16 %v211
    %v1557 = vunpack.c.h.b16 %v211
    %v1558 = vunpack.c.l.b16 %v212
    %v1559 = vunpack.c.h.b16 %v212
    %v1560 = vunpack.c.l.b16 %v213
    %v1561 = vunpack.c.h.b16 %v213
    %v1562 = vunpack.c.l.b16 %v214
    %v1563 = vunpack.c.h.b16 %v214
    %v1564 = vunpack.c.l.b16 %v215
    %v1565 = vunpack.c.h.b16 %v215
    %v1566 = vunpack.c.l.b16 %v216
    %v1567 = vunpack.c.h.b16 %v216
    %v1568 = vunpack.c.l.b16 %v217
    %v1569 = vunpack.c.h.b16 %v217
    %v1570 = vunpack.c.l.b16 %v218
    %v1571 = vunpack.c.h.b16 %v218
    %v1572 = vunpack.c.l.b16 %v219
    %v1573 = vunpack.c.h.b16 %v219
    %v1574 = vunpack.c.l.b16 %v220
    %v1575 = vunpack.c.h.b16 %v220
    %v1576 = vunpack.c.l.b16 %v221
    %v1577 = vunpack.c.h.b16 %v221
    %v1578 = vunpack.c.l.b16 %v222
    %v1579 = vunpack.c.h.b16 %v222
    %v1580 = vunpack.c.l.b16 %v223
    %v1581 = vunpack.c.h.b16 %v223
    %v1582 = vunpack.c.l.b16 %v224
    %v1583 = vunpack.c.h.b16 %v224
    %v1584 = vunpack.c.l.b16 %v225
    %v1585 = vunpack.c.h.b16 %v225
    %v1586 = vunpack.c.l.b16 %v226
    %v1587 = vunpack.c.h.b16 %v226
    %v1588 = vunpack.c.l.b16 %v227
    %v1589 = vunpack.c.h.b16 %v227
    %v1590 = vunpack.c.l.b16 %v228
    %v1591 = vunpack.c.h.b16 %v228
    %v1592 = vunpack.c.l.b16 %v229
    %v1593 = vunpack.c.h.b16 %v229
    %v1594 = vunpack.c.l.b16 %v230
    %v1595 = vunpack.c.h.b16 %v230
    %v1596 = vunpack.c.l.b16 %v231
    %v1597 = vunpack.c.h.b16 %v231
    %v1598 = vunpack.c.l.b16 %v232
    %v1599 = vunpack.c.h.b16 %v232
    %v1600 = vunpack.c.l.b16 %v233
    %v1601 = vunpack.c.h.b16 %v233
    %v1602 = vunpack.c.l.b16 %v234
    %v1603 = vunpack.c.h.b16 %v234
    %v1604 = vunpack.c.l.b16 %v235
    %v1605 = vunpack.c.h.b16 %v235
    %v1606 = vunpack.c.l.b16 %v236
    %v1607 = vunpack.c.h.b16 %v236
    %v1608 = vunpack.c.l.b16 %v237
    %v1609 = vunpack.c.h.b16 %v237
    %v1610 = vunpack.c.l.b16 %v238
    %v1611 = vunpack.c.h.b16 %v238
    %v1612 = vunpack.c.l.b16 %v239
    %v1613 = vunpack.c.h.b16 %v239
    %v1614 = vunpack.c.l.b16 %v240
    %v1615 = vunpack.c.h.b16 %v240
    %v1616 = vunpack.c.l.b16 %v241
    %v1617 = vunpack.c.h.b16 %v241
    %v1618 = vunpack.c.l.b16 %v242
    %v1619 = vunpack.c.h.b16 %v242
    %v1620 = vunpack.c.l.b16 %v243
    %v1621 = vunpack.c.h.b16 %v243
    %v1622 = vunpack.c.l.b16 %v244
    %v1623 = vunpack.c.h.b16 %v244
    %v1624 = vunpack.c.l.b16 %v245
    %v1625 = vunpack.c.h.b16 %v245
    %v1626 = vunpack.c.l.b16 %v246
    %v1627 = vunpack.c.h.b16 %v246
    %v1628 = vunpack.c.l.b16 %v247
    %v1629 = vunpack.c.h.b16 %v247
    %v1630 = vunpack.c.l.b16 %v248
    %v1631 = vunpack.c.h.b16 %v248
    %v1632 = vunpack.c.l.b16 %v249
    %v1633 = vunpack.c.h.b16 %v249
    %v1634 = vunpack.c.l.b16 %v250
    %v1635 = vunpack.c.h.b16 %v250
    %v1636 = vunpack.c.l.b16 %v251
    %v1637 = vunpack.c.h.b16 %v251
    %v1638 = vunpack.c.l.b16 %v252
    %v1639 = vunpack.c.h.b16 %v252
    %v1640 = vunpack.c.l.b16 %v253
    %v1641 = vunpack.c.h.b16 %v253
    %v1642 = vunpack.c.l.b16 %v254
    %v1643 = vunpack.c.h.b16 %v254
    %v1644 = vunpack.c.l.b16 %v255
    %v1645 = vunpack.c.h.b16 %v255
    %v1646 = vunpack.c.l.b16 %v256
    %v1647 = vunpack.c.h.b16 %v256
    %v1648 = vunpack.c.l.b16 %v257
    %v1649 = vunpack.c.h.b16 %v257
    %v1650 = vunpack.c.l.b16 %v258
    %v1651 = vunpack.c.h.b16 %v258
    %v1652 = vunpack.c.l.b16 %v259
    %v1653 = vunpack.c.h.b16 %v259
    %v1654 = vunpack.c.l.b16 %v260
    %v1655 = vunpack.c.h.b16 %v260
    %v1656 = vunpack.c.l.b16 %v261
    %v1657 = vunpack.c.h.b16 %v261
    %v1658 = vunpack.c.l.b16 %v262
    %v1659 = vunpack.c.h.b16 %v262
    %v1660 = vunpack.c.l.b16 %v263
    %v1661 = vunpack.c.h.b16 %v263
    %v1662 = vunpack.c.l.b16 %v264
    %v1663 = vunpack.c.h.b16 %v264
    %v1664 = vunpack.c.l.b16 %v265
    %v1665 = vunpack.c.h.b16 %v265
    %v1666 = vunpack.c.l.b16 %v266
    %v1667 = vunpack.c.h.b16 %v266
    %v1668 = vunpack.c.l.b16 %v267
    %v1669 = vunpack.c.h.b16 %v267
    %v1670 = vunpack.c.l.b16 %v268
    %v1671 = vunpack.c.h.b16 %v268
    %v1672 = vunpack.c.l.b16 %v269
    %v1673 = vunpack.c.h.b16 %v269
    %v1674 = vunpack.c.l.b16 %v270
    %v1675 = vunpack.c.h.b16 %v270
    %v1676 = vunpack.c.l.b16 %v271
    %v1677 = vunpack.c.h.b16 %v271
    %v1678 = vunpack.c.l.b16 %v272
    %v1679 = vunpack.c.h.b16 %v272
    %v1680 = vunpack.c.l.b16 %v273
    %v1681 = vunpack.c.h.b16 %v273
    %v1682 = vunpack.c.l.b16 %v274
    %v1683 = vunpack.c.h.b16 %v274
    %v1684 = vunpack.c.l.b16 %v275
    %v1685 = vunpack.c.h.b16 %v275
    %v1686 = vunpack.c.l.b16 %v276
    %v1687 = vunpack.c.h.b16 %v276
    %v1688 = vunpack.c.l.b16 %v277
    %v1689 = vunpack.c.h.b16 %v277
    %v1690 = vunpack.c.l.b16 %v278
    %v1691 = vunpack.c.h.b16 %v278
    %v1692 = vunpack.c.l.b16 %v279
    %v1693 = vunpack.c.h.b16 %v279
    %v1694 = vunpack.c.l.b16 %v280
    %v1695 = vunpack.c.h.b16 %v280
    %v1696 = vunpack.c.l.b16 %v281
    %v1697 = vunpack.c.h.b16 %v281
    %v1698 = vpack.c.b16 %v1512, %v1506
    %v1699 = vpack.c.b16 %v1513, %v1507
    %v1700 = vpack.c.b16 %v1514, %v1508
    %v1701 = vpack.c.b16 %v1515, %v1509
    %v1702 = vpack.c.b16 %v1516, %v1510
    %v1703 = vpack.c.b16 %v1517, %v1511
    %v1704 = vpack.c.b16 %v1524, %v1518
    %v1705 = vpack.c.b16 %v1525, %v1519
    %v1706 = vpack.c.b16 %v1526, %v1520
    %v1707 = vpack.c.b16 %v1527, %v1521
    %v1708 = vpack.c.b16 %v1528, %v1522
    %v1709 = vpack.c.b16 %v1529, %v1523
    %v1710 = vpack.c.b16 %v1536, %v1530
    %v1711 = vpack.c.b16 %v1537, %v1531
    %v1712 = vpack.c.b16 %v1538, %v1532
    %v1713 = vpack.c.b16 %v1539, %v1533
    %v1714 = vpack.c.b16 %v1540, %v1534
    %v1715 = vpack.c.b16 %v1541, %v1535
    %v1716 = vpack.c.b16 %v1548, %v1542
    %v1717 = vpack.c.b16 %v1549, %v1543
    %v1718 = vpack.c.b16 %v1550, %v1544
    %v1719 = vpack.c.b16 %v1551, %v1545
    %v1720 = vpack.c.b16 %v1552, %v1546
    %v1721 = vpack.c.b16 %v1553, %v1547
    %v1722 = vpack.c.b16 %v1560, %v1554
    %v1723 = vpack.c.b16 %v1561, %v1555
    %v1724 = vpack.c.b16 %v1562, %v1556
    %v1725 = vpack.c.b16 %v1563, %v1557
    %v1726 = vpack.c.b16 %v1564, %v1558
    %v1727 = vpack.c.b16 %v1565, %v1559
    %v1728 = vpack.c.b16 %v1572, %v1566
    %v1729 = vpack.c.b16 %v1573, %v1567
    %v1730 = vpack.c.b16 %v1574, %v1568
    %v1731 = vpack.c.b16 %v1575, %v1569
    %v1732 = vpack.c.b16 %v1576, %v1570
    %v1733 = vpack.c.b16 %v1577, %v1571
    %v1734 = vpack.c.b16 %v1584, %v1578
    %v1735 = vpack.c.b16 %v1585, %v1579
    %v1736 = vpack.c.b16 %v1586, %v1580
    %v1737 = vpack.c.b16 %v1587, %v1581
    %v1738 = vpack.c.b16 %v1588, %v1582
    %v1739 = vpack.c.b16 %v1589, %v1583
    %v1740 = vpack.c.b16 %v1596, %v1590
    %v1741 = vpack.c.b16 %v1597, %v1591
    %v1742 = vpack.c.b16 %v1598, %v1592
    %v1743 = vpack.c.b16 %v1599, %v1593
    %v1744 = vpack.c.b16 %v1600, %v1594
    %v1745 = vpack.c.b16 %v1601, %v1595
    %v1746 = vpack.c.b16 %v1608, %v1602
    %v1747 = vpack.c.b16 %v1609, %v1603
    %v1748 = vpack.c.b16 %v1610, %v1604
    %v1749 = vpack.c.b16 %v1611, %v1605
    %v1750 = vpack.c.b16 %v1612, %v1606
    %v1751 = vpack.c.b16 %v1613, %v1607
    %v1752 = vpack.c.b16 %v1620, %v1614
    %v1753 = vpack.c.b16 %v1621, %v1615
    %v1754 = vpack.c.b16 %v1622, %v1616
    %v1755 = vpack.c.b16 %v1623, %v1617
    %v1756 = vpack.c.b16 %v1624, %v1618
    %v1757 = vpack.c.b16 %v1625, %v1619
    %v1758 = vpack.c.b16 %v1632, %v1626
    %v1759 = vpack.c.b16 %v1633, %v1627
    %v1760 = vpack.c.b16 %v1634, %v1628
    %v1761 = vpack.c.b16 %v1635, %v1629
    %v1762 = vpack.c.b16 %v1636, %v1630
    %v1763 = vpack.c.b16 %v1637, %v1631
    %v1764 = vpack.c.b16 %v1644, %v1638
    %v1765 = vpack.c.b16 %v1645, %v1639
    %v1766 = vpack.c.b16 %v1646, %v1640
    %v1767 = vpack.c.b16 %v1647, %v1641
    %v1768 = vpack.c.b16 %v1648, %v1642
    %v1769 = vpack.c.b16 %v1649, %v1643
    %v1770 = vpack.c.b16 %v1656, %v1650
    %v1771 = vpack.c.b16 %v1657, %v1651
    %v1772 = vpack.c.b16 %v1658, %v1652
    %v1773 = vpack.c.b16 %v1659, %v1653
    %v1774 = vpack.c.b16 %v1660, %v1654
    %v1775 = vpack.c.b16 %v1661, %v1655
    %v1776 = vpack.c.b16 %v1668, %v1662
    %v1777 = vpack.c.b16 %v1669, %v1663
    %v1778 = vpack.c.b16 %v1670, %v1664
    %v1779 = vpack.c.b16 %v1671, %v1665
    %v1780 = vpack.c.b16 %v1672, %v1666
    %v1781 = vpack.c.b16 %v1673, %v1667
    %v1782 = vpack.c.b16 %v1680, %v1674
    %v1783 = vpack.c.b16 %v1681, %v1675
    %v1784 = vpack.c.b16 %v1682, %v1676
    %v1785 = vpack.c.b16 %v1683, %v1677
    %v1786 = vpack.c.b16 %v1684, %v1678
    %v1787 = vpack.c.b16 %v1685, %v1679
    %v1788 = vpack.c.b16 %v1692, %v1686
    %v1789 = vpack.c.b16 %v1693, %v1687
    %v1790 = vpack.c.b16 %v1694, %v1688
    %v1791 = vpack.c.b16 %v1695, %v1689
    %v1792 = vpack.c.b16 %v1696, %v1690
    %v1793 = vpack.c.b16 %v1697, %v1691
    %1890 = vmatprep.subr.bf16.mxu0 %v1741
    %1891 = vmatpush1.bf16.msra.mxu0 %v1740
    %1892 = vmatprep.subr.bf16.mxu0 %v1735
    %1893 = vmatpush1.bf16.msra.mxu0 %v1734
    %1894 = vmatprep.subr.bf16.mxu0 %v1729
    %1895 = vmatpush1.bf16.msra.mxu0 %v1728
    %1896 = vmatprep.subr.bf16.mxu0 %v1723
    %1897 = vmatpush1.bf16.msra.mxu0 %v1722
    %1898 = vmatprep.subr.bf16.mxu0 %v1717
    %1899 = vmatpush1.bf16.msra.mxu0 %v1716
    %1900 = vmatprep.subr.bf16.mxu0 %v1711
    %1901 = vmatpush1.bf16.msra.mxu0 %v1710
    %1902 = vmatprep.subr.bf16.mxu0 %v1705
    %1903 = vmatpush1.bf16.msra.mxu0 %v1704
    %1904 = vmatprep.subr.bf16.mxu0 %v1699
    %1905 = vmatpush1.bf16.msra.mxu0 %v1698
    %1906 = vmatprep.subr.bf16.mxu0 %v1789
    %1907 = vmatpush2.bf16.msra.mxu0 %v1788
    %1908 = vmatprep.subr.bf16.mxu0 %v1783
    %1909 = vmatpush2.bf16.msra.mxu0 %v1782
    %1910 = vmatprep.subr.bf16.mxu0 %v1777
    %1911 = vmatpush2.bf16.msra.mxu0 %v1776
    %1912 = vmatprep.subr.bf16.mxu0 %v1771
    %1913 = vmatpush2.bf16.msra.mxu0 %v1770
    %1914 = vmatprep.subr.bf16.mxu0 %v1765
    %1915 = vmatpush2.bf16.msra.mxu0 %v1764
    %1916 = vmatprep.subr.bf16.mxu0 %v1759
    %1917 = vmatpush2.bf16.msra.mxu0 %v1758
    %1918 = vmatprep.subr.bf16.mxu0 %v1753
    %1919 = vmatpush2.bf16.msra.mxu0 %v1752
    %1920 = vmatprep.subr.bf16.mxu0 %v1747
    %1921 = vmatpush2.bf16.msra.mxu0 %v1746
    %1922 = vmatprep.mubr.bf16.mxu0 %v1409
    %1923 = vmatmul.mubr.bf16.gmra.mxu0 %v1408
    %v1924 = vpop.f32.mrf.mxu0
    %v1925 = vadd.f32 0.0, %v1924
    %v1926 = vpop.f32.mrf.mxu0
    %v1927 = vadd.f32 0.0, %v1926
    %v1928 = vpop.f32.mrf.mxu0
    %v1929 = vadd.f32 0.0, %v1928
    %v1930 = vpop.f32.mrf.mxu0
    %v1931 = vadd.f32 0.0, %v1930
    %1932 = vdwg.mxu0
    %1933 = vmatprep.subr.bf16.mxu0 %v1743
    %1934 = vmatpush1.bf16.msra.mxu0 %v1742
    %1935 = vmatprep.subr.bf16.mxu0 %v1737
    %1936 = vmatpush1.bf16.msra.mxu0 %v1736
    %1937 = vmatprep.subr.bf16.mxu0 %v1731
    %1938 = vmatpush1.bf16.msra.mxu0 %v1730
    %1939 = vmatprep.subr.bf16.mxu0 %v1725
    %1940 = vmatpush1.bf16.msra.mxu0 %v1724
    %1941 = vmatprep.subr.bf16.mxu0 %v1719
    %1942 = vmatpush1.bf16.msra.mxu0 %v1718
    %1943 = vmatprep.subr.bf16.mxu0 %v1713
    %1944 = vmatpush1.bf16.msra.mxu0 %v1712
    %1945 = vmatprep.subr.bf16.mxu0 %v1707
    %1946 = vmatpush1.bf16.msra.mxu0 %v1706
    %1947 = vmatprep.subr.bf16.mxu0 %v1701
    %1948 = vmatpush1.bf16.msra.mxu0 %v1700
    %1949 = vmatprep.subr.bf16.mxu0 %v1791
    %1950 = vmatpush2.bf16.msra.mxu0 %v1790
    %1951 = vmatprep.subr.bf16.mxu0 %v1785
    %1952 = vmatpush2.bf16.msra.mxu0 %v1784
    %1953 = vmatprep.subr.bf16.mxu0 %v1779
    %1954 = vmatpush2.bf16.msra.mxu0 %v1778
    %1955 = vmatprep.subr.bf16.mxu0 %v1773
    %1956 = vmatpush2.bf16.msra.mxu0 %v1772
    %1957 = vmatprep.subr.bf16.mxu0 %v1767
    %1958 = vmatpush2.bf16.msra.mxu0 %v1766
    %1959 = vmatprep.subr.bf16.mxu0 %v1761
    %1960 = vmatpush2.bf16.msra.mxu0 %v1760
    %1961 = vmatprep.subr.bf16.mxu0 %v1755
    %1962 = vmatpush2.bf16.msra.mxu0 %v1754
    %1963 = vmatprep.subr.bf16.mxu0 %v1749
    %1964 = vmatpush2.bf16.msra.mxu0 %v1748
    %1965 = vmatprep.mubr.bf16.mxu0 %v1409
    %1966 = vmatmul.mubr.bf16.gmra.mxu0 %v1408
    %v1967 = vpop.f32.mrf.mxu0
    %v1968 = vadd.f32 0.0, %v1967
    %v1969 = vpop.f32.mrf.mxu0
    %v1970 = vadd.f32 0.0, %v1969
    %v1971 = vpop.f32.mrf.mxu0
    %v1972 = vadd.f32 0.0, %v1971
    %v1973 = vpop.f32.mrf.mxu0
    %v1974 = vadd.f32 0.0, %v1973
    %1975 = vdwg.mxu0
    %1976 = vmatprep.subr.bf16.mxu0 %v1745
    %1977 = vmatpush1.bf16.msra.mxu0 %v1744
    %1978 = vmatprep.subr.bf16.mxu0 %v1739
    %1979 = vmatpush1.bf16.msra.mxu0 %v1738
    %1980 = vmatprep.subr.bf16.mxu0 %v1733
    %1981 = vmatpush1.bf16.msra.mxu0 %v1732
    %1982 = vmatprep.subr.bf16.mxu0 %v1727
    %1983 = vmatpush1.bf16.msra.mxu0 %v1726
    %1984 = vmatprep.subr.bf16.mxu0 %v1721
    %1985 = vmatpush1.bf16.msra.mxu0 %v1720
    %1986 = vmatprep.subr.bf16.mxu0 %v1715
    %1987 = vmatpush1.bf16.msra.mxu0 %v1714
    %1988 = vmatprep.subr.bf16.mxu0 %v1709
    %1989 = vmatpush1.bf16.msra.mxu0 %v1708
    %1990 = vmatprep.subr.bf16.mxu0 %v1703
    %1991 = vmatpush1.bf16.msra.mxu0 %v1702
    %1992 = vmatprep.subr.bf16.mxu0 %v1793
    %1993 = vmatpush2.bf16.msra.mxu0 %v1792
    %1994 = vmatprep.subr.bf16.mxu0 %v1787
    %1995 = vmatpush2.bf16.msra.mxu0 %v1786
    %1996 = vmatprep.subr.bf16.mxu0 %v1781
    %1997 = vmatpush2.bf16.msra.mxu0 %v1780
    %1998 = vmatprep.subr.bf16.mxu0 %v1775
    %1999 = vmatpush2.bf16.msra.mxu0 %v1774
    %2000 = vmatprep.subr.bf16.mxu0 %v1769
    %2001 = vmatpush2.bf16.msra.mxu0 %v1768
    %2002 = vmatprep.subr.bf16.mxu0 %v1763
    %2003 = vmatpush2.bf16.msra.mxu0 %v1762
    %2004 = vmatprep.subr.bf16.mxu0 %v1757
    %2005 = vmatpush2.bf16.msra.mxu0 %v1756
    %2006 = vmatprep.subr.bf16.mxu0 %v1751
    %2007 = vmatpush2.bf16.msra.mxu0 %v1750
    %2008 = vmatprep.mubr.bf16.mxu0 %v1409
    %2009 = vmatmul.mubr.bf16.gmra.mxu0 %v1408
    %v2010 = vpop.f32.mrf.mxu0
    %v2011 = vadd.f32 0.0, %v2010
    %v2012 = vpop.f32.mrf.mxu0
    %v2013 = vadd.f32 0.0, %v2012
    %v2014 = vpop.f32.mrf.mxu0
    %v2015 = vadd.f32 0.0, %v2014
    %v2016 = vpop.f32.mrf.mxu0
    %v2017 = vadd.f32 0.0, %v2016
    %2018 = vdwg.mxu0
    %v2019 = vadd.f32 %v1055, %v1925
    %v2020 = vadd.f32 %v1057, %v1927
    %v2021 = vadd.f32 %v1059, %v1929
    %v2022 = vadd.f32 %v1061, %v1931
    %v2023 = vxor.u32 %v2019, 2147483648
    %v2024 = vxor.u32 %v2020, 2147483648
    %v2025 = vxor.u32 %v2021, 2147483648
    %v2026 = vxor.u32 %v2022, 2147483648
    %v2027 = vmul.f32 %v2023, 1.442695
    %v2028 = vpow.pop %v2027
    %v2029 = vmul.f32 %v2024, 1.442695
    %v2030 = vpow.pop %v2029
    %v2031 = vmul.f32 %v2025, 1.442695
    %v2032 = vpow.pop %v2031
    %v2033 = vmul.f32 %v2026, 1.442695
    %v2034 = vpow.pop %v2033
    %v2035 = vadd.f32 %v2028, 1.0
    %v2036 = vadd.f32 %v2030, 1.0
    %v2037 = vadd.f32 %v2032, 1.0
    %v2038 = vadd.f32 %v2034, 1.0
    %v2039 = vrcp.pop %v2035
    %v2040 = vmul.f32 1.0, %v2039
    %v2041 = vrcp.pop %v2036
    %v2042 = vmul.f32 1.0, %v2041
    %v2043 = vrcp.pop %v2037
    %v2044 = vmul.f32 1.0, %v2043
    %v2045 = vrcp.pop %v2038
    %v2046 = vmul.f32 1.0, %v2045
    %v2047 = vadd.f32 %v1158, %v1968
    %v2048 = vadd.f32 %v1160, %v1970
    %v2049 = vadd.f32 %v1162, %v1972
    %v2050 = vadd.f32 %v1164, %v1974
    %v2051 = vxor.u32 %v2047, 2147483648
    %v2052 = vxor.u32 %v2048, 2147483648
    %v2053 = vxor.u32 %v2049, 2147483648
    %v2054 = vxor.u32 %v2050, 2147483648
    %v2055 = vmul.f32 %v2051, 1.442695
    %v2056 = vpow.pop %v2055
    %v2057 = vmul.f32 %v2052, 1.442695
    %v2058 = vpow.pop %v2057
    %v2059 = vmul.f32 %v2053, 1.442695
    %v2060 = vpow.pop %v2059
    %v2061 = vmul.f32 %v2054, 1.442695
    %v2062 = vpow.pop %v2061
    %v2063 = vadd.f32 %v2056, 1.0
    %v2064 = vadd.f32 %v2058, 1.0
    %v2065 = vadd.f32 %v2060, 1.0
    %v2066 = vadd.f32 %v2062, 1.0
    %v2067 = vrcp.pop %v2063
    %v2068 = vmul.f32 1.0, %v2067
    %v2069 = vrcp.pop %v2064
    %v2070 = vmul.f32 1.0, %v2069
    %v2071 = vrcp.pop %v2065
    %v2072 = vmul.f32 1.0, %v2071
    %v2073 = vrcp.pop %v2066
    %v2074 = vmul.f32 1.0, %v2073
    %v2075 = vadd.f32 %v2011, %v1381
    %v2076 = vadd.f32 %v2013, %v1385
    %v2077 = vadd.f32 %v2015, %v1381
    %v2078 = vadd.f32 %v2017, %v1385
    %v2079 = vmul.f32 %v2040, %v2075
    %v2080 = vmul.f32 %v2042, %v2076
    %v2081 = vmul.f32 %v2044, %v2077
    %v2082 = vmul.f32 %v2046, %v2078
    %v2083 = vadd.f32 %v1261, %v2079
    %v2084 = vadd.f32 %v1263, %v2080
    %v2085 = vadd.f32 %v1265, %v2081
    %v2086 = vadd.f32 %v1267, %v2082
    %v2087 = vtanh.pop %v2083
    %v2088 = vtanh.pop %v2084
    %v2089 = vtanh.pop %v2085
    %v2090 = vtanh.pop %v2086
    %v2091 = vsub.f32 1.0, %v2068
    %v2092 = vsub.f32 1.0, %v2070
    %v2093 = vsub.f32 1.0, %v2072
    %v2094 = vsub.f32 1.0, %v2074
    %v2095 = vmul.f32 %v2091, %v2087
    %v2096 = vmul.f32 %v2092, %v2088
    %v2097 = vmul.f32 %v2093, %v2089
    %v2098 = vmul.f32 %v2094, %v2090
    %v2099 = vmul.f32 %v2068, %v1404
    %v2100 = vmul.f32 %v2070, %v1405
    %v2101 = vmul.f32 %v2072, %v1406
    %v2102 = vmul.f32 %v2074, %v1407
    %v2103 = vadd.f32 %v2095, %v2099
    %v2104 = vadd.f32 %v2096, %v2100
    %v2105 = vadd.f32 %v2097, %v2101
    %v2106 = vadd.f32 %v2098, %v2102
    %v2107 = vpack.c.bf16 %v2105, %v2103
    %v2108 = vpack.c.bf16 %v2106, %v2104
    %2109 = vmatprep.subr.bf16.mxu0 %v1741
    %2110 = vmatpush1.bf16.msra.mxu0 %v1740
    %2111 = vmatprep.subr.bf16.mxu0 %v1735
    %2112 = vmatpush1.bf16.msra.mxu0 %v1734
    %2113 = vmatprep.subr.bf16.mxu0 %v1729
    %2114 = vmatpush1.bf16.msra.mxu0 %v1728
    %2115 = vmatprep.subr.bf16.mxu0 %v1723
    %2116 = vmatpush1.bf16.msra.mxu0 %v1722
    %2117 = vmatprep.subr.bf16.mxu0 %v1717
    %2118 = vmatpush1.bf16.msra.mxu0 %v1716
    %2119 = vmatprep.subr.bf16.mxu0 %v1711
    %2120 = vmatpush1.bf16.msra.mxu0 %v1710
    %2121 = vmatprep.subr.bf16.mxu0 %v1705
    %2122 = vmatpush1.bf16.msra.mxu0 %v1704
    %2123 = vmatprep.subr.bf16.mxu0 %v1699
    %2124 = vmatpush1.bf16.msra.mxu0 %v1698
    %2125 = vmatprep.subr.bf16.mxu0 %v1789
    %2126 = vmatpush2.bf16.msra.mxu0 %v1788
    %2127 = vmatprep.subr.bf16.mxu0 %v1783
    %2128 = vmatpush2.bf16.msra.mxu0 %v1782
    %2129 = vmatprep.subr.bf16.mxu0 %v1777
    %2130 = vmatpush2.bf16.msra.mxu0 %v1776
    %2131 = vmatprep.subr.bf16.mxu0 %v1771
    %2132 = vmatpush2.bf16.msra.mxu0 %v1770
    %2133 = vmatprep.subr.bf16.mxu0 %v1765
    %2134 = vmatpush2.bf16.msra.mxu0 %v1764
    %2135 = vmatprep.subr.bf16.mxu0 %v1759
    %2136 = vmatpush2.bf16.msra.mxu0 %v1758
    %2137 = vmatprep.subr.bf16.mxu0 %v1753
    %2138 = vmatpush2.bf16.msra.mxu0 %v1752
    %2139 = vmatprep.subr.bf16.mxu0 %v1747
    %2140 = vmatpush2.bf16.msra.mxu0 %v1746
    %2141 = vmatprep.mubr.bf16.mxu0 %v2108
    %2142 = vmatmul.mubr.bf16.gmra.mxu0 %v2107
    %v2143 = vpop.f32.mrf.mxu0
    %v2144 = vadd.f32 0.0, %v2143
    %v2145 = vpop.f32.mrf.mxu0
    %v2146 = vadd.f32 0.0, %v2145
    %v2147 = vpop.f32.mrf.mxu0
    %v2148 = vadd.f32 0.0, %v2147
    %v2149 = vpop.f32.mrf.mxu0
    %v2150 = vadd.f32 0.0, %v2149
    %2151 = vdwg.mxu0
    %2152 = vmatprep.subr.bf16.mxu0 %v1743
    %2153 = vmatpush1.bf16.msra.mxu0 %v1742
    %2154 = vmatprep.subr.bf16.mxu0 %v1737
    %2155 = vmatpush1.bf16.msra.mxu0 %v1736
    %2156 = vmatprep.subr.bf16.mxu0 %v1731
    %2157 = vmatpush1.bf16.msra.mxu0 %v1730
    %2158 = vmatprep.subr.bf16.mxu0 %v1725
    %2159 = vmatpush1.bf16.msra.mxu0 %v1724
    %2160 = vmatprep.subr.bf16.mxu0 %v1719
    %2161 = vmatpush1.bf16.msra.mxu0 %v1718
    %2162 = vmatprep.subr.bf16.mxu0 %v1713
    %2163 = vmatpush1.bf16.msra.mxu0 %v1712
    %2164 = vmatprep.subr.bf16.mxu0 %v1707
    %2165 = vmatpush1.bf16.msra.mxu0 %v1706
    %2166 = vmatprep.subr.bf16.mxu0 %v1701
    %2167 = vmatpush1.bf16.msra.mxu0 %v1700
    %2168 = vmatprep.subr.bf16.mxu0 %v1791
    %2169 = vmatpush2.bf16.msra.mxu0 %v1790
    %2170 = vmatprep.subr.bf16.mxu0 %v1785
    %2171 = vmatpush2.bf16.msra.mxu0 %v1784
    %2172 = vmatprep.subr.bf16.mxu0 %v1779
    %2173 = vmatpush2.bf16.msra.mxu0 %v1778
    %2174 = vmatprep.subr.bf16.mxu0 %v1773
    %2175 = vmatpush2.bf16.msra.mxu0 %v1772
    %2176 = vmatprep.subr.bf16.mxu0 %v1767
    %2177 = vmatpush2.bf16.msra.mxu0 %v1766
    %2178 = vmatprep.subr.bf16.mxu0 %v1761
    %2179 = vmatpush2.bf16.msra.mxu0 %v1760
    %2180 = vmatprep.subr.bf16.mxu0 %v1755
    %2181 = vmatpush2.bf16.msra.mxu0 %v1754
    %2182 = vmatprep.subr.bf16.mxu0 %v1749
    %2183 = vmatpush2.bf16.msra.mxu0 %v1748
    %2184 = vmatprep.mubr.bf16.mxu0 %v2108
    %2185 = vmatmul.mubr.bf16.gmra.mxu0 %v2107
    %v2186 = vpop.f32.mrf.mxu0
    %v2187 = vadd.f32 0.0, %v2186
    %v2188 = vpop.f32.mrf.mxu0
    %v2189 = vadd.f32 0.0, %v2188
    %v2190 = vpop.f32.mrf.mxu0
    %v2191 = vadd.f32 0.0, %v2190
    %v2192 = vpop.f32.mrf.mxu0
    %v2193 = vadd.f32 0.0, %v2192
    %2194 = vdwg.mxu0
    %2195 = vmatprep.subr.bf16.mxu0 %v1745
    %2196 = vmatpush1.bf16.msra.mxu0 %v1744
    %2197 = vmatprep.subr.bf16.mxu0 %v1739
    %2198 = vmatpush1.bf16.msra.mxu0 %v1738
    %2199 = vmatprep.subr.bf16.mxu0 %v1733
    %2200 = vmatpush1.bf16.msra.mxu0 %v1732
    %2201 = vmatprep.subr.bf16.mxu0 %v1727
    %2202 = vmatpush1.bf16.msra.mxu0 %v1726
    %2203 = vmatprep.subr.bf16.mxu0 %v1721
    %2204 = vmatpush1.bf16.msra.mxu0 %v1720
    %2205 = vmatprep.subr.bf16.mxu0 %v1715
    %2206 = vmatpush1.bf16.msra.mxu0 %v1714
    %2207 = vmatprep.subr.bf16.mxu0 %v1709
    %2208 = vmatpush1.bf16.msra.mxu0 %v1708
    %2209 = vmatprep.subr.bf16.mxu0 %v1703
    %2210 = vmatpush1.bf16.msra.mxu0 %v1702
    %2211 = vmatprep.subr.bf16.mxu0 %v1793
    %2212 = vmatpush2.bf16.msra.mxu0 %v1792
    %2213 = vmatprep.subr.bf16.mxu0 %v1787
    %2214 = vmatpush2.bf16.msra.mxu0 %v1786
    %2215 = vmatprep.subr.bf16.mxu0 %v1781
    %2216 = vmatpush2.bf16.msra.mxu0 %v1780
    %2217 = vmatprep.subr.bf16.mxu0 %v1775
    %2218 = vmatpush2.bf16.msra.mxu0 %v1774
    %2219 = vmatprep.subr.bf16.mxu0 %v1769
    %2220 = vmatpush2.bf16.msra.mxu0 %v1768
    %2221 = vmatprep.subr.bf16.mxu0 %v1763
    %2222 = vmatpush2.bf16.msra.mxu0 %v1762
    %2223 = vmatprep.subr.bf16.mxu0 %v1757
    %2224 = vmatpush2.bf16.msra.mxu0 %v1756
    %2225 = vmatprep.subr.bf16.mxu0 %v1751
    %2226 = vmatpush2.bf16.msra.mxu0 %v1750
    %2227 = vmatprep.mubr.bf16.mxu0 %v2108
    %2228 = vmatmul.mubr.bf16.gmra.mxu0 %v2107
    %v2229 = vpop.f32.mrf.mxu0
    %v2230 = vadd.f32 0.0, %v2229
    %v2231 = vpop.f32.mrf.mxu0
    %v2232 = vadd.f32 0.0, %v2231
    %v2233 = vpop.f32.mrf.mxu0
    %v2234 = vadd.f32 0.0, %v2233
    %v2235 = vpop.f32.mrf.mxu0
    %v2236 = vadd.f32 0.0, %v2235
    %2237 = vdwg.mxu0
    %v2238 = vadd.f32 %v1065, %v2144
    %v2239 = vadd.f32 %v1067, %v2146
    %v2240 = vadd.f32 %v1069, %v2148
    %v2241 = vadd.f32 %v1071, %v2150
    %v2242 = vxor.u32 %v2238, 2147483648
    %v2243 = vxor.u32 %v2239, 2147483648
    %v2244 = vxor.u32 %v2240, 2147483648
    %v2245 = vxor.u32 %v2241, 2147483648
    %v2246 = vmul.f32 %v2242, 1.442695
    %v2247 = vpow.pop %v2246
    %v2248 = vmul.f32 %v2243, 1.442695
    %v2249 = vpow.pop %v2248
    %v2250 = vmul.f32 %v2244, 1.442695
    %v2251 = vpow.pop %v2250
    %v2252 = vmul.f32 %v2245, 1.442695
    %v2253 = vpow.pop %v2252
    %v2254 = vadd.f32 %v2247, 1.0
    %v2255 = vadd.f32 %v2249, 1.0
    %v2256 = vadd.f32 %v2251, 1.0
    %v2257 = vadd.f32 %v2253, 1.0
    %v2258 = vrcp.pop %v2254
    %v2259 = vmul.f32 1.0, %v2258
    %v2260 = vrcp.pop %v2255
    %v2261 = vmul.f32 1.0, %v2260
    %v2262 = vrcp.pop %v2256
    %v2263 = vmul.f32 1.0, %v2262
    %v2264 = vrcp.pop %v2257
    %v2265 = vmul.f32 1.0, %v2264
    %v2266 = vadd.f32 %v1168, %v2187
    %v2267 = vadd.f32 %v1170, %v2189
    %v2268 = vadd.f32 %v1172, %v2191
    %v2269 = vadd.f32 %v1174, %v2193
    %v2270 = vxor.u32 %v2266, 2147483648
    %v2271 = vxor.u32 %v2267, 2147483648
    %v2272 = vxor.u32 %v2268, 2147483648
    %v2273 = vxor.u32 %v2269, 2147483648
    %v2274 = vmul.f32 %v2270, 1.442695
    %v2275 = vpow.pop %v2274
    %v2276 = vmul.f32 %v2271, 1.442695
    %v2277 = vpow.pop %v2276
    %v2278 = vmul.f32 %v2272, 1.442695
    %v2279 = vpow.pop %v2278
    %v2280 = vmul.f32 %v2273, 1.442695
    %v2281 = vpow.pop %v2280
    %v2282 = vadd.f32 %v2275, 1.0
    %v2283 = vadd.f32 %v2277, 1.0
    %v2284 = vadd.f32 %v2279, 1.0
    %v2285 = vadd.f32 %v2281, 1.0
    %v2286 = vrcp.pop %v2282
    %v2287 = vmul.f32 1.0, %v2286
    %v2288 = vrcp.pop %v2283
    %v2289 = vmul.f32 1.0, %v2288
    %v2290 = vrcp.pop %v2284
    %v2291 = vmul.f32 1.0, %v2290
    %v2292 = vrcp.pop %v2285
    %v2293 = vmul.f32 1.0, %v2292
    %v2294 = vadd.f32 %v2230, %v1381
    %v2295 = vadd.f32 %v2232, %v1385
    %v2296 = vadd.f32 %v2234, %v1381
    %v2297 = vadd.f32 %v2236, %v1385
    %v2298 = vmul.f32 %v2259, %v2294
    %v2299 = vmul.f32 %v2261, %v2295
    %v2300 = vmul.f32 %v2263, %v2296
    %v2301 = vmul.f32 %v2265, %v2297
    %v2302 = vadd.f32 %v1271, %v2298
    %v2303 = vadd.f32 %v1273, %v2299
    %v2304 = vadd.f32 %v1275, %v2300
    %v2305 = vadd.f32 %v1277, %v2301
    %v2306 = vtanh.pop %v2302
    %v2307 = vtanh.pop %v2303
    %v2308 = vtanh.pop %v2304
    %v2309 = vtanh.pop %v2305
    %v2310 = vsub.f32 1.0, %v2287
    %v2311 = vsub.f32 1.0, %v2289
    %v2312 = vsub.f32 1.0, %v2291
    %v2313 = vsub.f32 1.0, %v2293
    %v2314 = vmul.f32 %v2310, %v2306
    %v2315 = vmul.f32 %v2311, %v2307
    %v2316 = vmul.f32 %v2312, %v2308
    %v2317 = vmul.f32 %v2313, %v2309
    %v2318 = vmul.f32 %v2287, %v2103
    %v2319 = vmul.f32 %v2289, %v2104
    %v2320 = vmul.f32 %v2291, %v2105
    %v2321 = vmul.f32 %v2293, %v2106
    %v2322 = vadd.f32 %v2314, %v2318
    %v2323 = vadd.f32 %v2315, %v2319
    %v2324 = vadd.f32 %v2316, %v2320
    %v2325 = vadd.f32 %v2317, %v2321
    %v2326 = vpack.c.bf16 %v2324, %v2322
    %v2327 = vpack.c.bf16 %v2325, %v2323
    %2328 = vmatprep.subr.bf16.mxu0 %v1741
    %2329 = vmatpush1.bf16.msra.mxu0 %v1740
    %2330 = vmatprep.subr.bf16.mxu0 %v1735
    %2331 = vmatpush1.bf16.msra.mxu0 %v1734
    %2332 = vmatprep.subr.bf16.mxu0 %v1729
    %2333 = vmatpush1.bf16.msra.mxu0 %v1728
    %2334 = vmatprep.subr.bf16.mxu0 %v1723
    %2335 = vmatpush1.bf16.msra.mxu0 %v1722
    %2336 = vmatprep.subr.bf16.mxu0 %v1717
    %2337 = vmatpush1.bf16.msra.mxu0 %v1716
    %2338 = vmatprep.subr.bf16.mxu0 %v1711
    %2339 = vmatpush1.bf16.msra.mxu0 %v1710
    %2340 = vmatprep.subr.bf16.mxu0 %v1705
    %2341 = vmatpush1.bf16.msra.mxu0 %v1704
    %2342 = vmatprep.subr.bf16.mxu0 %v1699
    %2343 = vmatpush1.bf16.msra.mxu0 %v1698
    %2344 = vmatprep.subr.bf16.mxu0 %v1789
    %2345 = vmatpush2.bf16.msra.mxu0 %v1788
    %2346 = vmatprep.subr.bf16.mxu0 %v1783
    %2347 = vmatpush2.bf16.msra.mxu0 %v1782
    %2348 = vmatprep.subr.bf16.mxu0 %v1777
    %2349 = vmatpush2.bf16.msra.mxu0 %v1776
    %2350 = vmatprep.subr.bf16.mxu0 %v1771
    %2351 = vmatpush2.bf16.msra.mxu0 %v1770
    %2352 = vmatprep.subr.bf16.mxu0 %v1765
    %2353 = vmatpush2.bf16.msra.mxu0 %v1764
    %2354 = vmatprep.subr.bf16.mxu0 %v1759
    %2355 = vmatpush2.bf16.msra.mxu0 %v1758
    %2356 = vmatprep.subr.bf16.mxu0 %v1753
    %2357 = vmatpush2.bf16.msra.mxu0 %v1752
    %2358 = vmatprep.subr.bf16.mxu0 %v1747
    %2359 = vmatpush2.bf16.msra.mxu0 %v1746
    %2360 = vmatprep.mubr.bf16.mxu0 %v2327
    %2361 = vmatmul.mubr.bf16.gmra.mxu0 %v2326
    %v2362 = vpop.f32.mrf.mxu0
    %v2363 = vadd.f32 0.0, %v2362
    %v2364 = vpop.f32.mrf.mxu0
    %v2365 = vadd.f32 0.0, %v2364
    %v2366 = vpop.f32.mrf.mxu0
    %v2367 = vadd.f32 0.0, %v2366
    %v2368 = vpop.f32.mrf.mxu0
    %v2369 = vadd.f32 0.0, %v2368
    %2370 = vdwg.mxu0
    %2371 = vmatprep.subr.bf16.mxu0 %v1743
    %2372 = vmatpush1.bf16.msra.mxu0 %v1742
    %2373 = vmatprep.subr.bf16.mxu0 %v1737
    %2374 = vmatpush1.bf16.msra.mxu0 %v1736
    %2375 = vmatprep.subr.bf16.mxu0 %v1731
    %2376 = vmatpush1.bf16.msra.mxu0 %v1730
    %2377 = vmatprep.subr.bf16.mxu0 %v1725
    %2378 = vmatpush1.bf16.msra.mxu0 %v1724
    %2379 = vmatprep.subr.bf16.mxu0 %v1719
    %2380 = vmatpush1.bf16.msra.mxu0 %v1718
    %2381 = vmatprep.subr.bf16.mxu0 %v1713
    %2382 = vmatpush1.bf16.msra.mxu0 %v1712
    %2383 = vmatprep.subr.bf16.mxu0 %v1707
    %2384 = vmatpush1.bf16.msra.mxu0 %v1706
    %2385 = vmatprep.subr.bf16.mxu0 %v1701
    %2386 = vmatpush1.bf16.msra.mxu0 %v1700
    %2387 = vmatprep.subr.bf16.mxu0 %v1791
    %2388 = vmatpush2.bf16.msra.mxu0 %v1790
    %2389 = vmatprep.subr.bf16.mxu0 %v1785
    %2390 = vmatpush2.bf16.msra.mxu0 %v1784
    %2391 = vmatprep.subr.bf16.mxu0 %v1779
    %2392 = vmatpush2.bf16.msra.mxu0 %v1778
    %2393 = vmatprep.subr.bf16.mxu0 %v1773
    %2394 = vmatpush2.bf16.msra.mxu0 %v1772
    %2395 = vmatprep.subr.bf16.mxu0 %v1767
    %2396 = vmatpush2.bf16.msra.mxu0 %v1766
    %2397 = vmatprep.subr.bf16.mxu0 %v1761
    %2398 = vmatpush2.bf16.msra.mxu0 %v1760
    %2399 = vmatprep.subr.bf16.mxu0 %v1755
    %2400 = vmatpush2.bf16.msra.mxu0 %v1754
    %2401 = vmatprep.subr.bf16.mxu0 %v1749
    %2402 = vmatpush2.bf16.msra.mxu0 %v1748
    %2403 = vmatprep.mubr.bf16.mxu0 %v2327
    %2404 = vmatmul.mubr.bf16.gmra.mxu0 %v2326
    %v2405 = vpop.f32.mrf.mxu0
    %v2406 = vadd.f32 0.0, %v2405
    %v2407 = vpop.f32.mrf.mxu0
    %v2408 = vadd.f32 0.0, %v2407
    %v2409 = vpop.f32.mrf.mxu0
    %v2410 = vadd.f32 0.0, %v2409
    %v2411 = vpop.f32.mrf.mxu0
    %v2412 = vadd.f32 0.0, %v2411
    %2413 = vdwg.mxu0
    %2414 = vmatprep.subr.bf16.mxu0 %v1745
    %2415 = vmatpush1.bf16.msra.mxu0 %v1744
    %2416 = vmatprep.subr.bf16.mxu0 %v1739
    %2417 = vmatpush1.bf16.msra.mxu0 %v1738
    %2418 = vmatprep.subr.bf16.mxu0 %v1733
    %2419 = vmatpush1.bf16.msra.mxu0 %v1732
    %2420 = vmatprep.subr.bf16.mxu0 %v1727
    %2421 = vmatpush1.bf16.msra.mxu0 %v1726
    %2422 = vmatprep.subr.bf16.mxu0 %v1721
    %2423 = vmatpush1.bf16.msra.mxu0 %v1720
    %2424 = vmatprep.subr.bf16.mxu0 %v1715
    %2425 = vmatpush1.bf16.msra.mxu0 %v1714
    %2426 = vmatprep.subr.bf16.mxu0 %v1709
    %2427 = vmatpush1.bf16.msra.mxu0 %v1708
    %2428 = vmatprep.subr.bf16.mxu0 %v1703
    %2429 = vmatpush1.bf16.msra.mxu0 %v1702
    %2430 = vmatprep.subr.bf16.mxu0 %v1793
    %2431 = vmatpush2.bf16.msra.mxu0 %v1792
    %2432 = vmatprep.subr.bf16.mxu0 %v1787
    %2433 = vmatpush2.bf16.msra.mxu0 %v1786
    %2434 = vmatprep.subr.bf16.mxu0 %v1781
    %2435 = vmatpush2.bf16.msra.mxu0 %v1780
    %2436 = vmatprep.subr.bf16.mxu0 %v1775
    %2437 = vmatpush2.bf16.msra.mxu0 %v1774
    %2438 = vmatprep.subr.bf16.mxu0 %v1769
    %2439 = vmatpush2.bf16.msra.mxu0 %v1768
    %2440 = vmatprep.subr.bf16.mxu0 %v1763
    %2441 = vmatpush2.bf16.msra.mxu0 %v1762
    %2442 = vmatprep.subr.bf16.mxu0 %v1757
    %2443 = vmatpush2.bf16.msra.mxu0 %v1756
    %2444 = vmatprep.subr.bf16.mxu0 %v1751
    %2445 = vmatpush2.bf16.msra.mxu0 %v1750
    %2446 = vmatprep.mubr.bf16.mxu0 %v2327
    %2447 = vmatmul.mubr.bf16.gmra.mxu0 %v2326
    %v2448 = vpop.f32.mrf.mxu0
    %v2449 = vadd.f32 0.0, %v2448
    %v2450 = vpop.f32.mrf.mxu0
    %v2451 = vadd.f32 0.0, %v2450
    %v2452 = vpop.f32.mrf.mxu0
    %v2453 = vadd.f32 0.0, %v2452
    %v2454 = vpop.f32.mrf.mxu0
    %v2455 = vadd.f32 0.0, %v2454
    %2456 = vdwg.mxu0
    %v2457 = vadd.f32 %v1075, %v2363
    %v2458 = vadd.f32 %v1077, %v2365
    %v2459 = vadd.f32 %v1079, %v2367
    %v2460 = vadd.f32 %v1081, %v2369
    %v2461 = vxor.u32 %v2457, 2147483648
    %v2462 = vxor.u32 %v2458, 2147483648
    %v2463 = vxor.u32 %v2459, 2147483648
    %v2464 = vxor.u32 %v2460, 2147483648
    %v2465 = vmul.f32 %v2461, 1.442695
    %v2466 = vpow.pop %v2465
    %v2467 = vmul.f32 %v2462, 1.442695
    %v2468 = vpow.pop %v2467
    %v2469 = vmul.f32 %v2463, 1.442695
    %v2470 = vpow.pop %v2469
    %v2471 = vmul.f32 %v2464, 1.442695
    %v2472 = vpow.pop %v2471
    %v2473 = vadd.f32 %v2466, 1.0
    %v2474 = vadd.f32 %v2468, 1.0
    %v2475 = vadd.f32 %v2470, 1.0
    %v2476 = vadd.f32 %v2472, 1.0
    %v2477 = vrcp.pop %v2473
    %v2478 = vmul.f32 1.0, %v2477
    %v2479 = vrcp.pop %v2474
    %v2480 = vmul.f32 1.0, %v2479
    %v2481 = vrcp.pop %v2475
    %v2482 = vmul.f32 1.0, %v2481
    %v2483 = vrcp.pop %v2476
    %v2484 = vmul.f32 1.0, %v2483
    %v2485 = vadd.f32 %v1178, %v2406
    %v2486 = vadd.f32 %v1180, %v2408
    %v2487 = vadd.f32 %v1182, %v2410
    %v2488 = vadd.f32 %v1184, %v2412
    %v2489 = vxor.u32 %v2485, 2147483648
    %v2490 = vxor.u32 %v2486, 2147483648
    %v2491 = vxor.u32 %v2487, 2147483648
    %v2492 = vxor.u32 %v2488, 2147483648
    %v2493 = vmul.f32 %v2489, 1.442695
    %v2494 = vpow.pop %v2493
    %v2495 = vmul.f32 %v2490, 1.442695
    %v2496 = vpow.pop %v2495
    %v2497 = vmul.f32 %v2491, 1.442695
    %v2498 = vpow.pop %v2497
    %v2499 = vmul.f32 %v2492, 1.442695
    %v2500 = vpow.pop %v2499
    %v2501 = vadd.f32 %v2494, 1.0
    %v2502 = vadd.f32 %v2496, 1.0
    %v2503 = vadd.f32 %v2498, 1.0
    %v2504 = vadd.f32 %v2500, 1.0
    %v2505 = vrcp.pop %v2501
    %v2506 = vmul.f32 1.0, %v2505
    %v2507 = vrcp.pop %v2502
    %v2508 = vmul.f32 1.0, %v2507
    %v2509 = vrcp.pop %v2503
    %v2510 = vmul.f32 1.0, %v2509
    %v2511 = vrcp.pop %v2504
    %v2512 = vmul.f32 1.0, %v2511
    %v2513 = vadd.f32 %v2449, %v1381
    %v2514 = vadd.f32 %v2451, %v1385
    %v2515 = vadd.f32 %v2453, %v1381
    %v2516 = vadd.f32 %v2455, %v1385
    %v2517 = vmul.f32 %v2478, %v2513
    %v2518 = vmul.f32 %v2480, %v2514
    %v2519 = vmul.f32 %v2482, %v2515
    %v2520 = vmul.f32 %v2484, %v2516
    %v2521 = vadd.f32 %v1281, %v2517
    %v2522 = vadd.f32 %v1283, %v2518
    %v2523 = vadd.f32 %v1285, %v2519
    %v2524 = vadd.f32 %v1287, %v2520
    %v2525 = vtanh.pop %v2521
    %v2526 = vtanh.pop %v2522
    %v2527 = vtanh.pop %v2523
    %v2528 = vtanh.pop %v2524
    %v2529 = vsub.f32 1.0, %v2506
    %v2530 = vsub.f32 1.0, %v2508
    %v2531 = vsub.f32 1.0, %v2510
    %v2532 = vsub.f32 1.0, %v2512
    %v2533 = vmul.f32 %v2529, %v2525
    %v2534 = vmul.f32 %v2530, %v2526
    %v2535 = vmul.f32 %v2531, %v2527
    %v2536 = vmul.f32 %v2532, %v2528
    %v2537 = vmul.f32 %v2506, %v2322
    %v2538 = vmul.f32 %v2508, %v2323
    %v2539 = vmul.f32 %v2510, %v2324
    %v2540 = vmul.f32 %v2512, %v2325
    %v2541 = vadd.f32 %v2533, %v2537
    %v2542 = vadd.f32 %v2534, %v2538
    %v2543 = vadd.f32 %v2535, %v2539
    %v2544 = vadd.f32 %v2536, %v2540
    %v2545 = vpack.c.bf16 %v2543, %v2541
    %v2546 = vpack.c.bf16 %v2544, %v2542
    %2547 = vmatprep.subr.bf16.mxu0 %v1741
    %2548 = vmatpush1.bf16.msra.mxu0 %v1740
    %2549 = vmatprep.subr.bf16.mxu0 %v1735
    %2550 = vmatpush1.bf16.msra.mxu0 %v1734
    %2551 = vmatprep.subr.bf16.mxu0 %v1729
    %2552 = vmatpush1.bf16.msra.mxu0 %v1728
    %2553 = vmatprep.subr.bf16.mxu0 %v1723
    %2554 = vmatpush1.bf16.msra.mxu0 %v1722
    %2555 = vmatprep.subr.bf16.mxu0 %v1717
    %2556 = vmatpush1.bf16.msra.mxu0 %v1716
    %2557 = vmatprep.subr.bf16.mxu0 %v1711
    %2558 = vmatpush1.bf16.msra.mxu0 %v1710
    %2559 = vmatprep.subr.bf16.mxu0 %v1705
    %2560 = vmatpush1.bf16.msra.mxu0 %v1704
    %2561 = vmatprep.subr.bf16.mxu0 %v1699
    %2562 = vmatpush1.bf16.msra.mxu0 %v1698
    %2563 = vmatprep.subr.bf16.mxu0 %v1789
    %2564 = vmatpush2.bf16.msra.mxu0 %v1788
    %2565 = vmatprep.subr.bf16.mxu0 %v1783
    %2566 = vmatpush2.bf16.msra.mxu0 %v1782
    %2567 = vmatprep.subr.bf16.mxu0 %v1777
    %2568 = vmatpush2.bf16.msra.mxu0 %v1776
    %2569 = vmatprep.subr.bf16.mxu0 %v1771
    %2570 = vmatpush2.bf16.msra.mxu0 %v1770
    %2571 = vmatprep.subr.bf16.mxu0 %v1765
    %2572 = vmatpush2.bf16.msra.mxu0 %v1764
    %2573 = vmatprep.subr.bf16.mxu0 %v1759
    %2574 = vmatpush2.bf16.msra.mxu0 %v1758
    %2575 = vmatprep.subr.bf16.mxu0 %v1753
    %2576 = vmatpush2.bf16.msra.mxu0 %v1752
    %2577 = vmatprep.subr.bf16.mxu0 %v1747
    %2578 = vmatpush2.bf16.msra.mxu0 %v1746
    %2579 = vmatprep.mubr.bf16.mxu0 %v2546
    %2580 = vmatmul.mubr.bf16.gmra.mxu0 %v2545
    %v2581 = vpop.f32.mrf.mxu0
    %v2582 = vadd.f32 0.0, %v2581
    %v2583 = vpop.f32.mrf.mxu0
    %v2584 = vadd.f32 0.0, %v2583
    %v2585 = vpop.f32.mrf.mxu0
    %v2586 = vadd.f32 0.0, %v2585
    %v2587 = vpop.f32.mrf.mxu0
    %v2588 = vadd.f32 0.0, %v2587
    %2589 = vdwg.mxu0
    %2590 = vmatprep.subr.bf16.mxu0 %v1743
    %2591 = vmatpush1.bf16.msra.mxu0 %v1742
    %2592 = vmatprep.subr.bf16.mxu0 %v1737
    %2593 = vmatpush1.bf16.msra.mxu0 %v1736
    %2594 = vmatprep.subr.bf16.mxu0 %v1731
    %2595 = vmatpush1.bf16.msra.mxu0 %v1730
    %2596 = vmatprep.subr.bf16.mxu0 %v1725
    %2597 = vmatpush1.bf16.msra.mxu0 %v1724
    %2598 = vmatprep.subr.bf16.mxu0 %v1719
    %2599 = vmatpush1.bf16.msra.mxu0 %v1718
    %2600 = vmatprep.subr.bf16.mxu0 %v1713
    %2601 = vmatpush1.bf16.msra.mxu0 %v1712
    %2602 = vmatprep.subr.bf16.mxu0 %v1707
    %2603 = vmatpush1.bf16.msra.mxu0 %v1706
    %2604 = vmatprep.subr.bf16.mxu0 %v1701
    %2605 = vmatpush1.bf16.msra.mxu0 %v1700
    %2606 = vmatprep.subr.bf16.mxu0 %v1791
    %2607 = vmatpush2.bf16.msra.mxu0 %v1790
    %2608 = vmatprep.subr.bf16.mxu0 %v1785
    %2609 = vmatpush2.bf16.msra.mxu0 %v1784
    %2610 = vmatprep.subr.bf16.mxu0 %v1779
    %2611 = vmatpush2.bf16.msra.mxu0 %v1778
    %2612 = vmatprep.subr.bf16.mxu0 %v1773
    %2613 = vmatpush2.bf16.msra.mxu0 %v1772
    %2614 = vmatprep.subr.bf16.mxu0 %v1767
    %2615 = vmatpush2.bf16.msra.mxu0 %v1766
    %2616 = vmatprep.subr.bf16.mxu0 %v1761
    %2617 = vmatpush2.bf16.msra.mxu0 %v1760
    %2618 = vmatprep.subr.bf16.mxu0 %v1755
    %2619 = vmatpush2.bf16.msra.mxu0 %v1754
    %2620 = vmatprep.subr.bf16.mxu0 %v1749
    %2621 = vmatpush2.bf16.msra.mxu0 %v1748
    %2622 = vmatprep.mubr.bf16.mxu0 %v2546
    %2623 = vmatmul.mubr.bf16.gmra.mxu0 %v2545
    %v2624 = vpop.f32.mrf.mxu0
    %v2625 = vadd.f32 0.0, %v2624
    %v2626 = vpop.f32.mrf.mxu0
    %v2627 = vadd.f32 0.0, %v2626
    %v2628 = vpop.f32.mrf.mxu0
    %v2629 = vadd.f32 0.0, %v2628
    %v2630 = vpop.f32.mrf.mxu0
    %v2631 = vadd.f32 0.0, %v2630
    %2632 = vdwg.mxu0
    %2633 = vmatprep.subr.bf16.mxu0 %v1745
    %2634 = vmatpush1.bf16.msra.mxu0 %v1744
    %2635 = vmatprep.subr.bf16.mxu0 %v1739
    %2636 = vmatpush1.bf16.msra.mxu0 %v1738
    %2637 = vmatprep.subr.bf16.mxu0 %v1733
    %2638 = vmatpush1.bf16.msra.mxu0 %v1732
    %2639 = vmatprep.subr.bf16.mxu0 %v1727
    %2640 = vmatpush1.bf16.msra.mxu0 %v1726
    %2641 = vmatprep.subr.bf16.mxu0 %v1721
    %2642 = vmatpush1.bf16.msra.mxu0 %v1720
    %2643 = vmatprep.subr.bf16.mxu0 %v1715
    %2644 = vmatpush1.bf16.msra.mxu0 %v1714
    %2645 = vmatprep.subr.bf16.mxu0 %v1709
    %2646 = vmatpush1.bf16.msra.mxu0 %v1708
    %2647 = vmatprep.subr.bf16.mxu0 %v1703
    %2648 = vmatpush1.bf16.msra.mxu0 %v1702
    %2649 = vmatprep.subr.bf16.mxu0 %v1793
    %2650 = vmatpush2.bf16.msra.mxu0 %v1792
    %2651 = vmatprep.subr.bf16.mxu0 %v1787
    %2652 = vmatpush2.bf16.msra.mxu0 %v1786
    %2653 = vmatprep.subr.bf16.mxu0 %v1781
    %2654 = vmatpush2.bf16.msra.mxu0 %v1780
    %2655 = vmatprep.subr.bf16.mxu0 %v1775
    %2656 = vmatpush2.bf16.msra.mxu0 %v1774
    %2657 = vmatprep.subr.bf16.mxu0 %v1769
    %2658 = vmatpush2.bf16.msra.mxu0 %v1768
    %2659 = vmatprep.subr.bf16.mxu0 %v1763
    %2660 = vmatpush2.bf16.msra.mxu0 %v1762
    %2661 = vmatprep.subr.bf16.mxu0 %v1757
    %2662 = vmatpush2.bf16.msra.mxu0 %v1756
    %2663 = vmatprep.subr.bf16.mxu0 %v1751
    %2664 = vmatpush2.bf16.msra.mxu0 %v1750
    %2665 = vmatprep.mubr.bf16.mxu0 %v2546
    %2666 = vmatmul.mubr.bf16.gmra.mxu0 %v2545
    %v2667 = vpop.f32.mrf.mxu0
    %v2668 = vadd.f32 0.0, %v2667
    %v2669 = vpop.f32.mrf.mxu0
    %v2670 = vadd.f32 0.0, %v2669
    %v2671 = vpop.f32.mrf.mxu0
    %v2672 = vadd.f32 0.0, %v2671
    %v2673 = vpop.f32.mrf.mxu0
    %v2674 = vadd.f32 0.0, %v2673
    %2675 = vdwg.mxu0
    %v2676 = vadd.f32 %v1085, %v2582
    %v2677 = vadd.f32 %v1087, %v2584
    %v2678 = vadd.f32 %v1089, %v2586
    %v2679 = vadd.f32 %v1091, %v2588
    %v2680 = vxor.u32 %v2676, 2147483648
    %v2681 = vxor.u32 %v2677, 2147483648
    %v2682 = vxor.u32 %v2678, 2147483648
    %v2683 = vxor.u32 %v2679, 2147483648
    %v2684 = vmul.f32 %v2680, 1.442695
    %v2685 = vpow.pop %v2684
    %v2686 = vmul.f32 %v2681, 1.442695
    %v2687 = vpow.pop %v2686
    %v2688 = vmul.f32 %v2682, 1.442695
    %v2689 = vpow.pop %v2688
    %v2690 = vmul.f32 %v2683, 1.442695
    %v2691 = vpow.pop %v2690
    %v2692 = vadd.f32 %v2685, 1.0
    %v2693 = vadd.f32 %v2687, 1.0
    %v2694 = vadd.f32 %v2689, 1.0
    %v2695 = vadd.f32 %v2691, 1.0
    %v2696 = vrcp.pop %v2692
    %v2697 = vmul.f32 1.0, %v2696
    %v2698 = vrcp.pop %v2693
    %v2699 = vmul.f32 1.0, %v2698
    %v2700 = vrcp.pop %v2694
    %v2701 = vmul.f32 1.0, %v2700
    %v2702 = vrcp.pop %v2695
    %v2703 = vmul.f32 1.0, %v2702
    %v2704 = vadd.f32 %v1188, %v2625
    %v2705 = vadd.f32 %v1190, %v2627
    %v2706 = vadd.f32 %v1192, %v2629
    %v2707 = vadd.f32 %v1194, %v2631
    %v2708 = vxor.u32 %v2704, 2147483648
    %v2709 = vxor.u32 %v2705, 2147483648
    %v2710 = vxor.u32 %v2706, 2147483648
    %v2711 = vxor.u32 %v2707, 2147483648
    %v2712 = vmul.f32 %v2708, 1.442695
    %v2713 = vpow.pop %v2712
    %v2714 = vmul.f32 %v2709, 1.442695
    %v2715 = vpow.pop %v2714
    %v2716 = vmul.f32 %v2710, 1.442695
    %v2717 = vpow.pop %v2716
    %v2718 = vmul.f32 %v2711, 1.442695
    %v2719 = vpow.pop %v2718
    %v2720 = vadd.f32 %v2713, 1.0
    %v2721 = vadd.f32 %v2715, 1.0
    %v2722 = vadd.f32 %v2717, 1.0
    %v2723 = vadd.f32 %v2719, 1.0
    %v2724 = vrcp.pop %v2720
    %v2725 = vmul.f32 1.0, %v2724
    %v2726 = vrcp.pop %v2721
    %v2727 = vmul.f32 1.0, %v2726
    %v2728 = vrcp.pop %v2722
    %v2729 = vmul.f32 1.0, %v2728
    %v2730 = vrcp.pop %v2723
    %v2731 = vmul.f32 1.0, %v2730
    %v2732 = vadd.f32 %v2668, %v1381
    %v2733 = vadd.f32 %v2670, %v1385
    %v2734 = vadd.f32 %v2672, %v1381
    %v2735 = vadd.f32 %v2674, %v1385
    %v2736 = vmul.f32 %v2697, %v2732
    %v2737 = vmul.f32 %v2699, %v2733
    %v2738 = vmul.f32 %v2701, %v2734
    %v2739 = vmul.f32 %v2703, %v2735
    %v2740 = vadd.f32 %v1291, %v2736
    %v2741 = vadd.f32 %v1293, %v2737
    %v2742 = vadd.f32 %v1295, %v2738
    %v2743 = vadd.f32 %v1297, %v2739
    %v2744 = vtanh.pop %v2740
    %v2745 = vtanh.pop %v2741
    %v2746 = vtanh.pop %v2742
    %v2747 = vtanh.pop %v2743
    %v2748 = vsub.f32 1.0, %v2725
    %v2749 = vsub.f32 1.0, %v2727
    %v2750 = vsub.f32 1.0, %v2729
    %v2751 = vsub.f32 1.0, %v2731
    %v2752 = vmul.f32 %v2748, %v2744
    %v2753 = vmul.f32 %v2749, %v2745
    %v2754 = vmul.f32 %v2750, %v2746
    %v2755 = vmul.f32 %v2751, %v2747
    %v2756 = vmul.f32 %v2725, %v2541
    %v2757 = vmul.f32 %v2727, %v2542
    %v2758 = vmul.f32 %v2729, %v2543
    %v2759 = vmul.f32 %v2731, %v2544
    %v2760 = vadd.f32 %v2752, %v2756
    %v2761 = vadd.f32 %v2753, %v2757
    %v2762 = vadd.f32 %v2754, %v2758
    %v2763 = vadd.f32 %v2755, %v2759
    %v2764 = vpack.c.bf16 %v2762, %v2760
    %v2765 = vpack.c.bf16 %v2763, %v2761
    %2766 = vmatprep.subr.bf16.mxu0 %v1741
    %2767 = vmatpush1.bf16.msra.mxu0 %v1740
    %2768 = vmatprep.subr.bf16.mxu0 %v1735
    %2769 = vmatpush1.bf16.msra.mxu0 %v1734
    %2770 = vmatprep.subr.bf16.mxu0 %v1729
    %2771 = vmatpush1.bf16.msra.mxu0 %v1728
    %2772 = vmatprep.subr.bf16.mxu0 %v1723
    %2773 = vmatpush1.bf16.msra.mxu0 %v1722
    %2774 = vmatprep.subr.bf16.mxu0 %v1717
    %2775 = vmatpush1.bf16.msra.mxu0 %v1716
    %2776 = vmatprep.subr.bf16.mxu0 %v1711
    %2777 = vmatpush1.bf16.msra.mxu0 %v1710
    %2778 = vmatprep.subr.bf16.mxu0 %v1705
    %2779 = vmatpush1.bf16.msra.mxu0 %v1704
    %2780 = vmatprep.subr.bf16.mxu0 %v1699
    %2781 = vmatpush1.bf16.msra.mxu0 %v1698
    %2782 = vmatprep.subr.bf16.mxu0 %v1789
    %2783 = vmatpush2.bf16.msra.mxu0 %v1788
    %2784 = vmatprep.subr.bf16.mxu0 %v1783
    %2785 = vmatpush2.bf16.msra.mxu0 %v1782
    %2786 = vmatprep.subr.bf16.mxu0 %v1777
    %2787 = vmatpush2.bf16.msra.mxu0 %v1776
    %2788 = vmatprep.subr.bf16.mxu0 %v1771
    %2789 = vmatpush2.bf16.msra.mxu0 %v1770
    %2790 = vmatprep.subr.bf16.mxu0 %v1765
    %2791 = vmatpush2.bf16.msra.mxu0 %v1764
    %2792 = vmatprep.subr.bf16.mxu0 %v1759
    %2793 = vmatpush2.bf16.msra.mxu0 %v1758
    %2794 = vmatprep.subr.bf16.mxu0 %v1753
    %2795 = vmatpush2.bf16.msra.mxu0 %v1752
    %2796 = vmatprep.subr.bf16.mxu0 %v1747
    %2797 = vmatpush2.bf16.msra.mxu0 %v1746
    %2798 = vmatprep.mubr.bf16.mxu0 %v2765
    %2799 = vmatmul.mubr.bf16.gmra.mxu0 %v2764
    %v2800 = vpop.f32.mrf.mxu0
    %v2801 = vadd.f32 0.0, %v2800
    %v2802 = vpop.f32.mrf.mxu0
    %v2803 = vadd.f32 0.0, %v2802
    %v2804 = vpop.f32.mrf.mxu0
    %v2805 = vadd.f32 0.0, %v2804
    %v2806 = vpop.f32.mrf.mxu0
    %v2807 = vadd.f32 0.0, %v2806
    %2808 = vdwg.mxu0
    %2809 = vmatprep.subr.bf16.mxu0 %v1743
    %2810 = vmatpush1.bf16.msra.mxu0 %v1742
    %2811 = vmatprep.subr.bf16.mxu0 %v1737
    %2812 = vmatpush1.bf16.msra.mxu0 %v1736
    %2813 = vmatprep.subr.bf16.mxu0 %v1731
    %2814 = vmatpush1.bf16.msra.mxu0 %v1730
    %2815 = vmatprep.subr.bf16.mxu0 %v1725
    %2816 = vmatpush1.bf16.msra.mxu0 %v1724
    %2817 = vmatprep.subr.bf16.mxu0 %v1719
    %2818 = vmatpush1.bf16.msra.mxu0 %v1718
    %2819 = vmatprep.subr.bf16.mxu0 %v1713
    %2820 = vmatpush1.bf16.msra.mxu0 %v1712
    %2821 = vmatprep.subr.bf16.mxu0 %v1707
    %2822 = vmatpush1.bf16.msra.mxu0 %v1706
    %2823 = vmatprep.subr.bf16.mxu0 %v1701
    %2824 = vmatpush1.bf16.msra.mxu0 %v1700
    %2825 = vmatprep.subr.bf16.mxu0 %v1791
    %2826 = vmatpush2.bf16.msra.mxu0 %v1790
    %2827 = vmatprep.subr.bf16.mxu0 %v1785
    %2828 = vmatpush2.bf16.msra.mxu0 %v1784
    %2829 = vmatprep.subr.bf16.mxu0 %v1779
    %2830 = vmatpush2.bf16.msra.mxu0 %v1778
    %2831 = vmatprep.subr.bf16.mxu0 %v1773
    %2832 = vmatpush2.bf16.msra.mxu0 %v1772
    %2833 = vmatprep.subr.bf16.mxu0 %v1767
    %2834 = vmatpush2.bf16.msra.mxu0 %v1766
    %2835 = vmatprep.subr.bf16.mxu0 %v1761
    %2836 = vmatpush2.bf16.msra.mxu0 %v1760
    %2837 = vmatprep.subr.bf16.mxu0 %v1755
    %2838 = vmatpush2.bf16.msra.mxu0 %v1754
    %2839 = vmatprep.subr.bf16.mxu0 %v1749
    %2840 = vmatpush2.bf16.msra.mxu0 %v1748
    %2841 = vmatprep.mubr.bf16.mxu0 %v2765
    %2842 = vmatmul.mubr.bf16.gmra.mxu0 %v2764
    %v2843 = vpop.f32.mrf.mxu0
    %v2844 = vadd.f32 0.0, %v2843
    %v2845 = vpop.f32.mrf.mxu0
    %v2846 = vadd.f32 0.0, %v2845
    %v2847 = vpop.f32.mrf.mxu0
    %v2848 = vadd.f32 0.0, %v2847
    %v2849 = vpop.f32.mrf.mxu0
    %v2850 = vadd.f32 0.0, %v2849
    %2851 = vdwg.mxu0
    %2852 = vmatprep.subr.bf16.mxu0 %v1745
    %2853 = vmatpush1.bf16.msra.mxu0 %v1744
    %2854 = vmatprep.subr.bf16.mxu0 %v1739
    %2855 = vmatpush1.bf16.msra.mxu0 %v1738
    %2856 = vmatprep.subr.bf16.mxu0 %v1733
    %2857 = vmatpush1.bf16.msra.mxu0 %v1732
    %2858 = vmatprep.subr.bf16.mxu0 %v1727
    %2859 = vmatpush1.bf16.msra.mxu0 %v1726
    %2860 = vmatprep.subr.bf16.mxu0 %v1721
    %2861 = vmatpush1.bf16.msra.mxu0 %v1720
    %2862 = vmatprep.subr.bf16.mxu0 %v1715
    %2863 = vmatpush1.bf16.msra.mxu0 %v1714
    %2864 = vmatprep.subr.bf16.mxu0 %v1709
    %2865 = vmatpush1.bf16.msra.mxu0 %v1708
    %2866 = vmatprep.subr.bf16.mxu0 %v1703
    %2867 = vmatpush1.bf16.msra.mxu0 %v1702
    %2868 = vmatprep.subr.bf16.mxu0 %v1793
    %2869 = vmatpush2.bf16.msra.mxu0 %v1792
    %2870 = vmatprep.subr.bf16.mxu0 %v1787
    %2871 = vmatpush2.bf16.msra.mxu0 %v1786
    %2872 = vmatprep.subr.bf16.mxu0 %v1781
    %2873 = vmatpush2.bf16.msra.mxu0 %v1780
    %2874 = vmatprep.subr.bf16.mxu0 %v1775
    %2875 = vmatpush2.bf16.msra.mxu0 %v1774
    %2876 = vmatprep.subr.bf16.mxu0 %v1769
    %2877 = vmatpush2.bf16.msra.mxu0 %v1768
    %2878 = vmatprep.subr.bf16.mxu0 %v1763
    %2879 = vmatpush2.bf16.msra.mxu0 %v1762
    %2880 = vmatprep.subr.bf16.mxu0 %v1757
    %2881 = vmatpush2.bf16.msra.mxu0 %v1756
    %2882 = vmatprep.subr.bf16.mxu0 %v1751
    %2883 = vmatpush2.bf16.msra.mxu0 %v1750
    %2884 = vmatprep.mubr.bf16.mxu0 %v2765
    %2885 = vmatmul.mubr.bf16.gmra.mxu0 %v2764
    %v2886 = vpop.f32.mrf.mxu0
    %v2887 = vadd.f32 0.0, %v2886
    %v2888 = vpop.f32.mrf.mxu0
    %v2889 = vadd.f32 0.0, %v2888
    %v2890 = vpop.f32.mrf.mxu0
    %v2891 = vadd.f32 0.0, %v2890
    %v2892 = vpop.f32.mrf.mxu0
    %v2893 = vadd.f32 0.0, %v2892
    %2894 = vdwg.mxu0
    %v2895 = vadd.f32 %v1095, %v2801
    %v2896 = vadd.f32 %v1097, %v2803
    %v2897 = vadd.f32 %v1099, %v2805
    %v2898 = vadd.f32 %v1101, %v2807
    %v2899 = vxor.u32 %v2895, 2147483648
    %v2900 = vxor.u32 %v2896, 2147483648
    %v2901 = vxor.u32 %v2897, 2147483648
    %v2902 = vxor.u32 %v2898, 2147483648
    %v2903 = vmul.f32 %v2899, 1.442695
    %v2904 = vpow.pop %v2903
    %v2905 = vmul.f32 %v2900, 1.442695
    %v2906 = vpow.pop %v2905
    %v2907 = vmul.f32 %v2901, 1.442695
    %v2908 = vpow.pop %v2907
    %v2909 = vmul.f32 %v2902, 1.442695
    %v2910 = vpow.pop %v2909
    %v2911 = vadd.f32 %v2904, 1.0
    %v2912 = vadd.f32 %v2906, 1.0
    %v2913 = vadd.f32 %v2908, 1.0
    %v2914 = vadd.f32 %v2910, 1.0
    %v2915 = vrcp.pop %v2911
    %v2916 = vmul.f32 1.0, %v2915
    %v2917 = vrcp.pop %v2912
    %v2918 = vmul.f32 1.0, %v2917
    %v2919 = vrcp.pop %v2913
    %v2920 = vmul.f32 1.0, %v2919
    %v2921 = vrcp.pop %v2914
    %v2922 = vmul.f32 1.0, %v2921
    %v2923 = vadd.f32 %v1198, %v2844
    %v2924 = vadd.f32 %v1200, %v2846
    %v2925 = vadd.f32 %v1202, %v2848
    %v2926 = vadd.f32 %v1204, %v2850
    %v2927 = vxor.u32 %v2923, 2147483648
    %v2928 = vxor.u32 %v2924, 2147483648
    %v2929 = vxor.u32 %v2925, 2147483648
    %v2930 = vxor.u32 %v2926, 2147483648
    %v2931 = vmul.f32 %v2927, 1.442695
    %v2932 = vpow.pop %v2931
    %v2933 = vmul.f32 %v2928, 1.442695
    %v2934 = vpow.pop %v2933
    %v2935 = vmul.f32 %v2929, 1.442695
    %v2936 = vpow.pop %v2935
    %v2937 = vmul.f32 %v2930, 1.442695
    %v2938 = vpow.pop %v2937
    %v2939 = vadd.f32 %v2932, 1.0
    %v2940 = vadd.f32 %v2934, 1.0
    %v2941 = vadd.f32 %v2936, 1.0
    %v2942 = vadd.f32 %v2938, 1.0
    %v2943 = vrcp.pop %v2939
    %v2944 = vmul.f32 1.0, %v2943
    %v2945 = vrcp.pop %v2940
    %v2946 = vmul.f32 1.0, %v2945
    %v2947 = vrcp.pop %v2941
    %v2948 = vmul.f32 1.0, %v2947
    %v2949 = vrcp.pop %v2942
    %v2950 = vmul.f32 1.0, %v2949
    %v2951 = vadd.f32 %v2887, %v1381
    %v2952 = vadd.f32 %v2889, %v1385
    %v2953 = vadd.f32 %v2891, %v1381
    %v2954 = vadd.f32 %v2893, %v1385
    %v2955 = vmul.f32 %v2916, %v2951
    %v2956 = vmul.f32 %v2918, %v2952
    %v2957 = vmul.f32 %v2920, %v2953
    %v2958 = vmul.f32 %v2922, %v2954
    %v2959 = vadd.f32 %v1301, %v2955
    %v2960 = vadd.f32 %v1303, %v2956
    %v2961 = vadd.f32 %v1305, %v2957
    %v2962 = vadd.f32 %v1307, %v2958
    %v2963 = vtanh.pop %v2959
    %v2964 = vtanh.pop %v2960
    %v2965 = vtanh.pop %v2961
    %v2966 = vtanh.pop %v2962
    %v2967 = vsub.f32 1.0, %v2944
    %v2968 = vsub.f32 1.0, %v2946
    %v2969 = vsub.f32 1.0, %v2948
    %v2970 = vsub.f32 1.0, %v2950
    %v2971 = vmul.f32 %v2967, %v2963
    %v2972 = vmul.f32 %v2968, %v2964
    %v2973 = vmul.f32 %v2969, %v2965
    %v2974 = vmul.f32 %v2970, %v2966
    %v2975 = vmul.f32 %v2944, %v2760
    %v2976 = vmul.f32 %v2946, %v2761
    %v2977 = vmul.f32 %v2948, %v2762
    %v2978 = vmul.f32 %v2950, %v2763
    %v2979 = vadd.f32 %v2971, %v2975
    %v2980 = vadd.f32 %v2972, %v2976
    %v2981 = vadd.f32 %v2973, %v2977
    %v2982 = vadd.f32 %v2974, %v2978
    %v2983 = vpack.c.bf16 %v2981, %v2979
    %v2984 = vpack.c.bf16 %v2982, %v2980
    %2985 = vmatprep.subr.bf16.mxu0 %v1741
    %2986 = vmatpush1.bf16.msra.mxu0 %v1740
    %2987 = vmatprep.subr.bf16.mxu0 %v1735
    %2988 = vmatpush1.bf16.msra.mxu0 %v1734
    %2989 = vmatprep.subr.bf16.mxu0 %v1729
    %2990 = vmatpush1.bf16.msra.mxu0 %v1728
    %2991 = vmatprep.subr.bf16.mxu0 %v1723
    %2992 = vmatpush1.bf16.msra.mxu0 %v1722
    %2993 = vmatprep.subr.bf16.mxu0 %v1717
    %2994 = vmatpush1.bf16.msra.mxu0 %v1716
    %2995 = vmatprep.subr.bf16.mxu0 %v1711
    %2996 = vmatpush1.bf16.msra.mxu0 %v1710
    %2997 = vmatprep.subr.bf16.mxu0 %v1705
    %2998 = vmatpush1.bf16.msra.mxu0 %v1704
    %2999 = vmatprep.subr.bf16.mxu0 %v1699
    %3000 = vmatpush1.bf16.msra.mxu0 %v1698
    %3001 = vmatprep.subr.bf16.mxu0 %v1789
    %3002 = vmatpush2.bf16.msra.mxu0 %v1788
    %3003 = vmatprep.subr.bf16.mxu0 %v1783
    %3004 = vmatpush2.bf16.msra.mxu0 %v1782
    %3005 = vmatprep.subr.bf16.mxu0 %v1777
    %3006 = vmatpush2.bf16.msra.mxu0 %v1776
    %3007 = vmatprep.subr.bf16.mxu0 %v1771
    %3008 = vmatpush2.bf16.msra.mxu0 %v1770
    %3009 = vmatprep.subr.bf16.mxu0 %v1765
    %3010 = vmatpush2.bf16.msra.mxu0 %v1764
    %3011 = vmatprep.subr.bf16.mxu0 %v1759
    %3012 = vmatpush2.bf16.msra.mxu0 %v1758
    %3013 = vmatprep.subr.bf16.mxu0 %v1753
    %3014 = vmatpush2.bf16.msra.mxu0 %v1752
    %3015 = vmatprep.subr.bf16.mxu0 %v1747
    %3016 = vmatpush2.bf16.msra.mxu0 %v1746
    %3017 = vmatprep.mubr.bf16.mxu0 %v2984
    %3018 = vmatmul.mubr.bf16.gmra.mxu0 %v2983
    %v3019 = vpop.f32.mrf.mxu0
    %v3020 = vadd.f32 0.0, %v3019
    %v3021 = vpop.f32.mrf.mxu0
    %v3022 = vadd.f32 0.0, %v3021
    %v3023 = vpop.f32.mrf.mxu0
    %v3024 = vadd.f32 0.0, %v3023
    %v3025 = vpop.f32.mrf.mxu0
    %v3026 = vadd.f32 0.0, %v3025
    %3027 = vdwg.mxu0
    %3028 = vmatprep.subr.bf16.mxu0 %v1743
    %3029 = vmatpush1.bf16.msra.mxu0 %v1742
    %3030 = vmatprep.subr.bf16.mxu0 %v1737
    %3031 = vmatpush1.bf16.msra.mxu0 %v1736
    %3032 = vmatprep.subr.bf16.mxu0 %v1731
    %3033 = vmatpush1.bf16.msra.mxu0 %v1730
    %3034 = vmatprep.subr.bf16.mxu0 %v1725
    %3035 = vmatpush1.bf16.msra.mxu0 %v1724
    %3036 = vmatprep.subr.bf16.mxu0 %v1719
    %3037 = vmatpush1.bf16.msra.mxu0 %v1718
    %3038 = vmatprep.subr.bf16.mxu0 %v1713
    %3039 = vmatpush1.bf16.msra.mxu0 %v1712
    %3040 = vmatprep.subr.bf16.mxu0 %v1707
    %3041 = vmatpush1.bf16.msra.mxu0 %v1706
    %3042 = vmatprep.subr.bf16.mxu0 %v1701
    %3043 = vmatpush1.bf16.msra.mxu0 %v1700
    %3044 = vmatprep.subr.bf16.mxu0 %v1791
    %3045 = vmatpush2.bf16.msra.mxu0 %v1790
    %3046 = vmatprep.subr.bf16.mxu0 %v1785
    %3047 = vmatpush2.bf16.msra.mxu0 %v1784
    %3048 = vmatprep.subr.bf16.mxu0 %v1779
    %3049 = vmatpush2.bf16.msra.mxu0 %v1778
    %3050 = vmatprep.subr.bf16.mxu0 %v1773
    %3051 = vmatpush2.bf16.msra.mxu0 %v1772
    %3052 = vmatprep.subr.bf16.mxu0 %v1767
    %3053 = vmatpush2.bf16.msra.mxu0 %v1766
    %3054 = vmatprep.subr.bf16.mxu0 %v1761
    %3055 = vmatpush2.bf16.msra.mxu0 %v1760
    %3056 = vmatprep.subr.bf16.mxu0 %v1755
    %3057 = vmatpush2.bf16.msra.mxu0 %v1754
    %3058 = vmatprep.subr.bf16.mxu0 %v1749
    %3059 = vmatpush2.bf16.msra.mxu0 %v1748
    %3060 = vmatprep.mubr.bf16.mxu0 %v2984
    %3061 = vmatmul.mubr.bf16.gmra.mxu0 %v2983
    %v3062 = vpop.f32.mrf.mxu0
    %v3063 = vadd.f32 0.0, %v3062
    %v3064 = vpop.f32.mrf.mxu0
    %v3065 = vadd.f32 0.0, %v3064
    %v3066 = vpop.f32.mrf.mxu0
    %v3067 = vadd.f32 0.0, %v3066
    %v3068 = vpop.f32.mrf.mxu0
    %v3069 = vadd.f32 0.0, %v3068
    %3070 = vdwg.mxu0
    %3071 = vmatprep.subr.bf16.mxu0 %v1745
    %3072 = vmatpush1.bf16.msra.mxu0 %v1744
    %3073 = vmatprep.subr.bf16.mxu0 %v1739
    %3074 = vmatpush1.bf16.msra.mxu0 %v1738
    %3075 = vmatprep.subr.bf16.mxu0 %v1733
    %3076 = vmatpush1.bf16.msra.mxu0 %v1732
    %3077 = vmatprep.subr.bf16.mxu0 %v1727
    %3078 = vmatpush1.bf16.msra.mxu0 %v1726
    %3079 = vmatprep.subr.bf16.mxu0 %v1721
    %3080 = vmatpush1.bf16.msra.mxu0 %v1720
    %3081 = vmatprep.subr.bf16.mxu0 %v1715
    %3082 = vmatpush1.bf16.msra.mxu0 %v1714
    %3083 = vmatprep.subr.bf16.mxu0 %v1709
    %3084 = vmatpush1.bf16.msra.mxu0 %v1708
    %3085 = vmatprep.subr.bf16.mxu0 %v1703
    %3086 = vmatpush1.bf16.msra.mxu0 %v1702
    %3087 = vmatprep.subr.bf16.mxu0 %v1793
    %3088 = vmatpush2.bf16.msra.mxu0 %v1792
    %3089 = vmatprep.subr.bf16.mxu0 %v1787
    %3090 = vmatpush2.bf16.msra.mxu0 %v1786
    %3091 = vmatprep.subr.bf16.mxu0 %v1781
    %3092 = vmatpush2.bf16.msra.mxu0 %v1780
    %3093 = vmatprep.subr.bf16.mxu0 %v1775
    %3094 = vmatpush2.bf16.msra.mxu0 %v1774
    %3095 = vmatprep.subr.bf16.mxu0 %v1769
    %3096 = vmatpush2.bf16.msra.mxu0 %v1768
    %3097 = vmatprep.subr.bf16.mxu0 %v1763
    %3098 = vmatpush2.bf16.msra.mxu0 %v1762
    %3099 = vmatprep.subr.bf16.mxu0 %v1757
    %3100 = vmatpush2.bf16.msra.mxu0 %v1756
    %3101 = vmatprep.subr.bf16.mxu0 %v1751
    %3102 = vmatpush2.bf16.msra.mxu0 %v1750
    %3103 = vmatprep.mubr.bf16.mxu0 %v2984
    %3104 = vmatmul.mubr.bf16.gmra.mxu0 %v2983
    %v3105 = vpop.f32.mrf.mxu0
    %v3106 = vadd.f32 0.0, %v3105
    %v3107 = vpop.f32.mrf.mxu0
    %v3108 = vadd.f32 0.0, %v3107
    %v3109 = vpop.f32.mrf.mxu0
    %v3110 = vadd.f32 0.0, %v3109
    %v3111 = vpop.f32.mrf.mxu0
    %v3112 = vadd.f32 0.0, %v3111
    %3113 = vdwg.mxu0
    %v3114 = vadd.f32 %v1105, %v3020
    %v3115 = vadd.f32 %v1107, %v3022
    %v3116 = vadd.f32 %v1109, %v3024
    %v3117 = vadd.f32 %v1111, %v3026
    %v3118 = vxor.u32 %v3114, 2147483648
    %v3119 = vxor.u32 %v3115, 2147483648
    %v3120 = vxor.u32 %v3116, 2147483648
    %v3121 = vxor.u32 %v3117, 2147483648
    %v3122 = vmul.f32 %v3118, 1.442695
    %v3123 = vpow.pop %v3122
    %v3124 = vmul.f32 %v3119, 1.442695
    %v3125 = vpow.pop %v3124
    %v3126 = vmul.f32 %v3120, 1.442695
    %v3127 = vpow.pop %v3126
    %v3128 = vmul.f32 %v3121, 1.442695
    %v3129 = vpow.pop %v3128
    %v3130 = vadd.f32 %v3123, 1.0
    %v3131 = vadd.f32 %v3125, 1.0
    %v3132 = vadd.f32 %v3127, 1.0
    %v3133 = vadd.f32 %v3129, 1.0
    %v3134 = vrcp.pop %v3130
    %v3135 = vmul.f32 1.0, %v3134
    %v3136 = vrcp.pop %v3131
    %v3137 = vmul.f32 1.0, %v3136
    %v3138 = vrcp.pop %v3132
    %v3139 = vmul.f32 1.0, %v3138
    %v3140 = vrcp.pop %v3133
    %v3141 = vmul.f32 1.0, %v3140
    %v3142 = vadd.f32 %v1208, %v3063
    %v3143 = vadd.f32 %v1210, %v3065
    %v3144 = vadd.f32 %v1212, %v3067
    %v3145 = vadd.f32 %v1214, %v3069
    %v3146 = vxor.u32 %v3142, 2147483648
    %v3147 = vxor.u32 %v3143, 2147483648
    %v3148 = vxor.u32 %v3144, 2147483648
    %v3149 = vxor.u32 %v3145, 2147483648
    %v3150 = vmul.f32 %v3146, 1.442695
    %v3151 = vpow.pop %v3150
    %v3152 = vmul.f32 %v3147, 1.442695
    %v3153 = vpow.pop %v3152
    %v3154 = vmul.f32 %v3148, 1.442695
    %v3155 = vpow.pop %v3154
    %v3156 = vmul.f32 %v3149, 1.442695
    %v3157 = vpow.pop %v3156
    %v3158 = vadd.f32 %v3151, 1.0
    %v3159 = vadd.f32 %v3153, 1.0
    %v3160 = vadd.f32 %v3155, 1.0
    %v3161 = vadd.f32 %v3157, 1.0
    %v3162 = vrcp.pop %v3158
    %v3163 = vmul.f32 1.0, %v3162
    %v3164 = vrcp.pop %v3159
    %v3165 = vmul.f32 1.0, %v3164
    %v3166 = vrcp.pop %v3160
    %v3167 = vmul.f32 1.0, %v3166
    %v3168 = vrcp.pop %v3161
    %v3169 = vmul.f32 1.0, %v3168
    %v3170 = vadd.f32 %v3106, %v1381
    %v3171 = vadd.f32 %v3108, %v1385
    %v3172 = vadd.f32 %v3110, %v1381
    %v3173 = vadd.f32 %v3112, %v1385
    %v3174 = vmul.f32 %v3135, %v3170
    %v3175 = vmul.f32 %v3137, %v3171
    %v3176 = vmul.f32 %v3139, %v3172
    %v3177 = vmul.f32 %v3141, %v3173
    %v3178 = vadd.f32 %v1311, %v3174
    %v3179 = vadd.f32 %v1313, %v3175
    %v3180 = vadd.f32 %v1315, %v3176
    %v3181 = vadd.f32 %v1317, %v3177
    %v3182 = vtanh.pop %v3178
    %v3183 = vtanh.pop %v3179
    %v3184 = vtanh.pop %v3180
    %v3185 = vtanh.pop %v3181
    %v3186 = vsub.f32 1.0, %v3163
    %v3187 = vsub.f32 1.0, %v3165
    %v3188 = vsub.f32 1.0, %v3167
    %v3189 = vsub.f32 1.0, %v3169
    %v3190 = vmul.f32 %v3186, %v3182
    %v3191 = vmul.f32 %v3187, %v3183
    %v3192 = vmul.f32 %v3188, %v3184
    %v3193 = vmul.f32 %v3189, %v3185
    %v3194 = vmul.f32 %v3163, %v2979
    %v3195 = vmul.f32 %v3165, %v2980
    %v3196 = vmul.f32 %v3167, %v2981
    %v3197 = vmul.f32 %v3169, %v2982
    %v3198 = vadd.f32 %v3190, %v3194
    %v3199 = vadd.f32 %v3191, %v3195
    %v3200 = vadd.f32 %v3192, %v3196
    %v3201 = vadd.f32 %v3193, %v3197
    %v3202 = vpack.c.bf16 %v3200, %v3198
    %v3203 = vpack.c.bf16 %v3201, %v3199
    %3204 = vmatprep.subr.bf16.mxu0 %v1741
    %3205 = vmatpush1.bf16.msra.mxu0 %v1740
    %3206 = vmatprep.subr.bf16.mxu0 %v1735
    %3207 = vmatpush1.bf16.msra.mxu0 %v1734
    %3208 = vmatprep.subr.bf16.mxu0 %v1729
    %3209 = vmatpush1.bf16.msra.mxu0 %v1728
    %3210 = vmatprep.subr.bf16.mxu0 %v1723
    %3211 = vmatpush1.bf16.msra.mxu0 %v1722
    %3212 = vmatprep.subr.bf16.mxu0 %v1717
    %3213 = vmatpush1.bf16.msra.mxu0 %v1716
    %3214 = vmatprep.subr.bf16.mxu0 %v1711
    %3215 = vmatpush1.bf16.msra.mxu0 %v1710
    %3216 = vmatprep.subr.bf16.mxu0 %v1705
    %3217 = vmatpush1.bf16.msra.mxu0 %v1704
    %3218 = vmatprep.subr.bf16.mxu0 %v1699
    %3219 = vmatpush1.bf16.msra.mxu0 %v1698
    %3220 = vmatprep.subr.bf16.mxu0 %v1789
    %3221 = vmatpush2.bf16.msra.mxu0 %v1788
    %3222 = vmatprep.subr.bf16.mxu0 %v1783
    %3223 = vmatpush2.bf16.msra.mxu0 %v1782
    %3224 = vmatprep.subr.bf16.mxu0 %v1777
    %3225 = vmatpush2.bf16.msra.mxu0 %v1776
    %3226 = vmatprep.subr.bf16.mxu0 %v1771
    %3227 = vmatpush2.bf16.msra.mxu0 %v1770
    %3228 = vmatprep.subr.bf16.mxu0 %v1765
    %3229 = vmatpush2.bf16.msra.mxu0 %v1764
    %3230 = vmatprep.subr.bf16.mxu0 %v1759
    %3231 = vmatpush2.bf16.msra.mxu0 %v1758
    %3232 = vmatprep.subr.bf16.mxu0 %v1753
    %3233 = vmatpush2.bf16.msra.mxu0 %v1752
    %3234 = vmatprep.subr.bf16.mxu0 %v1747
    %3235 = vmatpush2.bf16.msra.mxu0 %v1746
    %3236 = vmatprep.mubr.bf16.mxu0 %v3203
    %3237 = vmatmul.mubr.bf16.gmra.mxu0 %v3202
    %v3238 = vpop.f32.mrf.mxu0
    %v3239 = vadd.f32 0.0, %v3238
    %v3240 = vpop.f32.mrf.mxu0
    %v3241 = vadd.f32 0.0, %v3240
    %v3242 = vpop.f32.mrf.mxu0
    %v3243 = vadd.f32 0.0, %v3242
    %v3244 = vpop.f32.mrf.mxu0
    %v3245 = vadd.f32 0.0, %v3244
    %3246 = vdwg.mxu0
    %3247 = vmatprep.subr.bf16.mxu0 %v1743
    %3248 = vmatpush1.bf16.msra.mxu0 %v1742
    %3249 = vmatprep.subr.bf16.mxu0 %v1737
    %3250 = vmatpush1.bf16.msra.mxu0 %v1736
    %3251 = vmatprep.subr.bf16.mxu0 %v1731
    %3252 = vmatpush1.bf16.msra.mxu0 %v1730
    %3253 = vmatprep.subr.bf16.mxu0 %v1725
    %3254 = vmatpush1.bf16.msra.mxu0 %v1724
    %3255 = vmatprep.subr.bf16.mxu0 %v1719
    %3256 = vmatpush1.bf16.msra.mxu0 %v1718
    %3257 = vmatprep.subr.bf16.mxu0 %v1713
    %3258 = vmatpush1.bf16.msra.mxu0 %v1712
    %3259 = vmatprep.subr.bf16.mxu0 %v1707
    %3260 = vmatpush1.bf16.msra.mxu0 %v1706
    %3261 = vmatprep.subr.bf16.mxu0 %v1701
    %3262 = vmatpush1.bf16.msra.mxu0 %v1700
    %3263 = vmatprep.subr.bf16.mxu0 %v1791
    %3264 = vmatpush2.bf16.msra.mxu0 %v1790
    %3265 = vmatprep.subr.bf16.mxu0 %v1785
    %3266 = vmatpush2.bf16.msra.mxu0 %v1784
    %3267 = vmatprep.subr.bf16.mxu0 %v1779
    %3268 = vmatpush2.bf16.msra.mxu0 %v1778
    %3269 = vmatprep.subr.bf16.mxu0 %v1773
    %3270 = vmatpush2.bf16.msra.mxu0 %v1772
    %3271 = vmatprep.subr.bf16.mxu0 %v1767
    %3272 = vmatpush2.bf16.msra.mxu0 %v1766
    %3273 = vmatprep.subr.bf16.mxu0 %v1761
    %3274 = vmatpush2.bf16.msra.mxu0 %v1760
    %3275 = vmatprep.subr.bf16.mxu0 %v1755
    %3276 = vmatpush2.bf16.msra.mxu0 %v1754
    %3277 = vmatprep.subr.bf16.mxu0 %v1749
    %3278 = vmatpush2.bf16.msra.mxu0 %v1748
    %3279 = vmatprep.mubr.bf16.mxu0 %v3203
    %3280 = vmatmul.mubr.bf16.gmra.mxu0 %v3202
    %v3281 = vpop.f32.mrf.mxu0
    %v3282 = vadd.f32 0.0, %v3281
    %v3283 = vpop.f32.mrf.mxu0
    %v3284 = vadd.f32 0.0, %v3283
    %v3285 = vpop.f32.mrf.mxu0
    %v3286 = vadd.f32 0.0, %v3285
    %v3287 = vpop.f32.mrf.mxu0
    %v3288 = vadd.f32 0.0, %v3287
    %3289 = vdwg.mxu0
    %3290 = vmatprep.subr.bf16.mxu0 %v1745
    %3291 = vmatpush1.bf16.msra.mxu0 %v1744
    %3292 = vmatprep.subr.bf16.mxu0 %v1739
    %3293 = vmatpush1.bf16.msra.mxu0 %v1738
    %3294 = vmatprep.subr.bf16.mxu0 %v1733
    %3295 = vmatpush1.bf16.msra.mxu0 %v1732
    %3296 = vmatprep.subr.bf16.mxu0 %v1727
    %3297 = vmatpush1.bf16.msra.mxu0 %v1726
    %3298 = vmatprep.subr.bf16.mxu0 %v1721
    %3299 = vmatpush1.bf16.msra.mxu0 %v1720
    %3300 = vmatprep.subr.bf16.mxu0 %v1715
    %3301 = vmatpush1.bf16.msra.mxu0 %v1714
    %3302 = vmatprep.subr.bf16.mxu0 %v1709
    %3303 = vmatpush1.bf16.msra.mxu0 %v1708
    %3304 = vmatprep.subr.bf16.mxu0 %v1703
    %3305 = vmatpush1.bf16.msra.mxu0 %v1702
    %3306 = vmatprep.subr.bf16.mxu0 %v1793
    %3307 = vmatpush2.bf16.msra.mxu0 %v1792
    %3308 = vmatprep.subr.bf16.mxu0 %v1787
    %3309 = vmatpush2.bf16.msra.mxu0 %v1786
    %3310 = vmatprep.subr.bf16.mxu0 %v1781
    %3311 = vmatpush2.bf16.msra.mxu0 %v1780
    %3312 = vmatprep.subr.bf16.mxu0 %v1775
    %3313 = vmatpush2.bf16.msra.mxu0 %v1774
    %3314 = vmatprep.subr.bf16.mxu0 %v1769
    %3315 = vmatpush2.bf16.msra.mxu0 %v1768
    %3316 = vmatprep.subr.bf16.mxu0 %v1763
    %3317 = vmatpush2.bf16.msra.mxu0 %v1762
    %3318 = vmatprep.subr.bf16.mxu0 %v1757
    %3319 = vmatpush2.bf16.msra.mxu0 %v1756
    %3320 = vmatprep.subr.bf16.mxu0 %v1751
    %3321 = vmatpush2.bf16.msra.mxu0 %v1750
    %3322 = vmatprep.mubr.bf16.mxu0 %v3203
    %3323 = vmatmul.mubr.bf16.gmra.mxu0 %v3202
    %v3324 = vpop.f32.mrf.mxu0
    %v3325 = vadd.f32 0.0, %v3324
    %v3326 = vpop.f32.mrf.mxu0
    %v3327 = vadd.f32 0.0, %v3326
    %v3328 = vpop.f32.mrf.mxu0
    %v3329 = vadd.f32 0.0, %v3328
    %v3330 = vpop.f32.mrf.mxu0
    %v3331 = vadd.f32 0.0, %v3330
    %3332 = vdwg.mxu0
    %v3333 = vadd.f32 %v1115, %v3239
    %v3334 = vadd.f32 %v1117, %v3241
    %v3335 = vadd.f32 %v1119, %v3243
    %v3336 = vadd.f32 %v1121, %v3245
    %v3337 = vxor.u32 %v3333, 2147483648
    %v3338 = vxor.u32 %v3334, 2147483648
    %v3339 = vxor.u32 %v3335, 2147483648
    %v3340 = vxor.u32 %v3336, 2147483648
    %v3341 = vmul.f32 %v3337, 1.442695
    %v3342 = vpow.pop %v3341
    %v3343 = vmul.f32 %v3338, 1.442695
    %v3344 = vpow.pop %v3343
    %v3345 = vmul.f32 %v3339, 1.442695
    %v3346 = vpow.pop %v3345
    %v3347 = vmul.f32 %v3340, 1.442695
    %v3348 = vpow.pop %v3347
    %v3349 = vadd.f32 %v3342, 1.0
    %v3350 = vadd.f32 %v3344, 1.0
    %v3351 = vadd.f32 %v3346, 1.0
    %v3352 = vadd.f32 %v3348, 1.0
    %v3353 = vrcp.pop %v3349
    %v3354 = vmul.f32 1.0, %v3353
    %v3355 = vrcp.pop %v3350
    %v3356 = vmul.f32 1.0, %v3355
    %v3357 = vrcp.pop %v3351
    %v3358 = vmul.f32 1.0, %v3357
    %v3359 = vrcp.pop %v3352
    %v3360 = vmul.f32 1.0, %v3359
    %v3361 = vadd.f32 %v1218, %v3282
    %v3362 = vadd.f32 %v1220, %v3284
    %v3363 = vadd.f32 %v1222, %v3286
    %v3364 = vadd.f32 %v1224, %v3288
    %v3365 = vxor.u32 %v3361, 2147483648
    %v3366 = vxor.u32 %v3362, 2147483648
    %v3367 = vxor.u32 %v3363, 2147483648
    %v3368 = vxor.u32 %v3364, 2147483648
    %v3369 = vmul.f32 %v3365, 1.442695
    %v3370 = vpow.pop %v3369
    %v3371 = vmul.f32 %v3366, 1.442695
    %v3372 = vpow.pop %v3371
    %v3373 = vmul.f32 %v3367, 1.442695
    %v3374 = vpow.pop %v3373
    %v3375 = vmul.f32 %v3368, 1.442695
    %v3376 = vpow.pop %v3375
    %v3377 = vadd.f32 %v3370, 1.0
    %v3378 = vadd.f32 %v3372, 1.0
    %v3379 = vadd.f32 %v3374, 1.0
    %v3380 = vadd.f32 %v3376, 1.0
    %v3381 = vrcp.pop %v3377
    %v3382 = vmul.f32 1.0, %v3381
    %v3383 = vrcp.pop %v3378
    %v3384 = vmul.f32 1.0, %v3383
    %v3385 = vrcp.pop %v3379
    %v3386 = vmul.f32 1.0, %v3385
    %v3387 = vrcp.pop %v3380
    %v3388 = vmul.f32 1.0, %v3387
    %v3389 = vadd.f32 %v3325, %v1381
    %v3390 = vadd.f32 %v3327, %v1385
    %v3391 = vadd.f32 %v3329, %v1381
    %v3392 = vadd.f32 %v3331, %v1385
    %v3393 = vmul.f32 %v3354, %v3389
    %v3394 = vmul.f32 %v3356, %v3390
    %v3395 = vmul.f32 %v3358, %v3391
    %v3396 = vmul.f32 %v3360, %v3392
    %v3397 = vadd.f32 %v1321, %v3393
    %v3398 = vadd.f32 %v1323, %v3394
    %v3399 = vadd.f32 %v1325, %v3395
    %v3400 = vadd.f32 %v1327, %v3396
    %v3401 = vtanh.pop %v3397
    %v3402 = vtanh.pop %v3398
    %v3403 = vtanh.pop %v3399
    %v3404 = vtanh.pop %v3400
    %v3405 = vsub.f32 1.0, %v3382
    %v3406 = vsub.f32 1.0, %v3384
    %v3407 = vsub.f32 1.0, %v3386
    %v3408 = vsub.f32 1.0, %v3388
    %v3409 = vmul.f32 %v3405, %v3401
    %v3410 = vmul.f32 %v3406, %v3402
    %v3411 = vmul.f32 %v3407, %v3403
    %v3412 = vmul.f32 %v3408, %v3404
    %v3413 = vmul.f32 %v3382, %v3198
    %v3414 = vmul.f32 %v3384, %v3199
    %v3415 = vmul.f32 %v3386, %v3200
    %v3416 = vmul.f32 %v3388, %v3201
    %v3417 = vadd.f32 %v3409, %v3413
    %v3418 = vadd.f32 %v3410, %v3414
    %v3419 = vadd.f32 %v3411, %v3415
    %v3420 = vadd.f32 %v3412, %v3416
    %v3421 = vpack.c.bf16 %v3419, %v3417
    %v3422 = vpack.c.bf16 %v3420, %v3418
    %v3423 = vld [vmem:[#allocation8] sm:$0xf]
    %v3424 = vld [vmem:[#allocation8 + $0x4] sm:$0xf]
    %v3425 = vld [vmem:[#allocation8 + $0x8] sm:$0xf]
    %v3426 = vld [vmem:[#allocation8 + $0xc] sm:$0xf]
    %v3427 = vld [vmem:[#allocation8 + $0x10] sm:$0xf]
    %v3428 = vld [vmem:[#allocation8 + $0x14] sm:$0xf]
    %v3429 = vld [vmem:[#allocation8 + $0x18] sm:$0xf]
    %v3430 = vld [vmem:[#allocation8 + $0x1c] sm:$0xf]
    %v3431 = vld [vmem:[#allocation8 + $0x20] sm:$0xf]
    %v3432 = vld [vmem:[#allocation8 + $0x24] sm:$0xf]
    %v3433 = vld [vmem:[#allocation8 + $0x28] sm:$0xf]
    %v3434 = vld [vmem:[#allocation8 + $0x2c] sm:$0xf]
    %v3435 = vld [vmem:[#allocation8 + $0x30] sm:$0xf]
    %v3436 = vld [vmem:[#allocation8 + $0x34] sm:$0xf]
    %v3437 = vld [vmem:[#allocation8 + $0x38] sm:$0xf]
    %v3438 = vld [vmem:[#allocation8 + $0x3c] sm:$0xf]
    %v3439 = vld [vmem:[#allocation8 + $0x40] sm:$0xf]
    %v3440 = vld [vmem:[#allocation8 + $0x44] sm:$0xf]
    %v3441 = vld [vmem:[#allocation8 + $0x48] sm:$0xf]
    %v3442 = vld [vmem:[#allocation8 + $0x4c] sm:$0xf]
    %v3443 = vld [vmem:[#allocation8 + $0x50] sm:$0xf]
    %v3444 = vld [vmem:[#allocation8 + $0x54] sm:$0xf]
    %v3445 = vld [vmem:[#allocation8 + $0x58] sm:$0xf]
    %v3446 = vld [vmem:[#allocation8 + $0x5c] sm:$0xf]
    %v3447 = vld [vmem:[#allocation8 + $0x60] sm:$0xf]
    %v3448 = vld [vmem:[#allocation8 + $0x64] sm:$0xf]
    %v3449 = vld [vmem:[#allocation8 + $0x68] sm:$0xf]
    %v3450 = vld [vmem:[#allocation8 + $0x6c] sm:$0xf]
    %v3451 = vld [vmem:[#allocation8 + $0x70] sm:$0xf]
    %v3452 = vld [vmem:[#allocation8 + $0x74] sm:$0xf]
    %v3453 = vld [vmem:[#allocation8 + $0x78] sm:$0xf]
    %v3454 = vld [vmem:[#allocation8 + $0x7c] sm:$0xf]
    %v3455 = vld [vmem:[%s6] sm:$0x1]
    %v3457 = vlaneseq
    %v3458 = vshrl.u32 %v3457, 7
    %v3459 = vsub.s32 0, %v3458
    %v3460 = vrot.slane %v3455, %v3459
    %v3494 = vunpack.c.l.b16 %v3423
    %v3495 = vunpack.c.l.b16 %v3424
    %v3496 = vunpack.c.l.b16 %v3425
    %v3497 = vunpack.c.l.b16 %v3426
    %v3498 = vunpack.c.l.b16 %v3427
    %v3499 = vunpack.c.l.b16 %v3428
    %v3500 = vunpack.c.l.b16 %v3429
    %v3501 = vunpack.c.l.b16 %v3430
    %v3502 = vunpack.c.l.b16 %v3431
    %v3503 = vunpack.c.l.b16 %v3432
    %v3504 = vunpack.c.l.b16 %v3433
    %v3505 = vunpack.c.l.b16 %v3434
    %v3506 = vunpack.c.l.b16 %v3435
    %v3507 = vunpack.c.l.b16 %v3436
    %v3508 = vunpack.c.l.b16 %v3437
    %v3509 = vunpack.c.l.b16 %v3438
    %v3510 = vunpack.c.l.b16 %v3439
    %v3511 = vunpack.c.l.b16 %v3440
    %v3512 = vunpack.c.l.b16 %v3441
    %v3513 = vunpack.c.l.b16 %v3442
    %v3514 = vunpack.c.l.b16 %v3443
    %v3515 = vunpack.c.l.b16 %v3444
    %v3516 = vunpack.c.l.b16 %v3445
    %v3517 = vunpack.c.l.b16 %v3446
    %v3518 = vunpack.c.l.b16 %v3447
    %v3519 = vunpack.c.l.b16 %v3448
    %v3520 = vunpack.c.l.b16 %v3449
    %v3521 = vunpack.c.l.b16 %v3450
    %v3522 = vunpack.c.l.b16 %v3451
    %v3523 = vunpack.c.l.b16 %v3452
    %v3524 = vunpack.c.l.b16 %v3453
    %v3525 = vunpack.c.l.b16 %v3454
    %v3526 = vpack.c.b16 %v3495, %v3494
    %v3527 = vpack.c.b16 %v3497, %v3496
    %v3528 = vpack.c.b16 %v3499, %v3498
    %v3529 = vpack.c.b16 %v3501, %v3500
    %v3530 = vpack.c.b16 %v3503, %v3502
    %v3531 = vpack.c.b16 %v3505, %v3504
    %v3532 = vpack.c.b16 %v3507, %v3506
    %v3533 = vpack.c.b16 %v3509, %v3508
    %v3534 = vpack.c.b16 %v3511, %v3510
    %v3535 = vpack.c.b16 %v3513, %v3512
    %v3536 = vpack.c.b16 %v3515, %v3514
    %v3537 = vpack.c.b16 %v3517, %v3516
    %v3538 = vpack.c.b16 %v3519, %v3518
    %v3539 = vpack.c.b16 %v3521, %v3520
    %v3540 = vpack.c.b16 %v3523, %v3522
    %v3541 = vpack.c.b16 %v3525, %v3524
    %3558 = vmatprep.subr.bf16.mxu0 0
    %3559 = vmatpush1.bf16.msra.mxu0 %v3533
    %3560 = vmatprep.subr.bf16.mxu0 0
    %3561 = vmatpush1.bf16.msra.mxu0 %v3532
    %3562 = vmatprep.subr.bf16.mxu0 0
    %3563 = vmatpush1.bf16.msra.mxu0 %v3531
    %3564 = vmatprep.subr.bf16.mxu0 0
    %3565 = vmatpush1.bf16.msra.mxu0 %v3530
    %3566 = vmatprep.subr.bf16.mxu0 0
    %3567 = vmatpush1.bf16.msra.mxu0 %v3529
    %3568 = vmatprep.subr.bf16.mxu0 0
    %3569 = vmatpush1.bf16.msra.mxu0 %v3528
    %3570 = vmatprep.subr.bf16.mxu0 0
    %3571 = vmatpush1.bf16.msra.mxu0 %v3527
    %3572 = vmatprep.subr.bf16.mxu0 0
    %3573 = vmatpush1.bf16.msra.mxu0 %v3526
    %3574 = vmatprep.subr.bf16.mxu0 0
    %3575 = vmatpush2.bf16.msra.mxu0 %v3541
    %3576 = vmatprep.subr.bf16.mxu0 0
    %3577 = vmatpush2.bf16.msra.mxu0 %v3540
    %3578 = vmatprep.subr.bf16.mxu0 0
    %3579 = vmatpush2.bf16.msra.mxu0 %v3539
    %3580 = vmatprep.subr.bf16.mxu0 0
    %3581 = vmatpush2.bf16.msra.mxu0 %v3538
    %3582 = vmatprep.subr.bf16.mxu0 0
    %3583 = vmatpush2.bf16.msra.mxu0 %v3537
    %3584 = vmatprep.subr.bf16.mxu0 0
    %3585 = vmatpush2.bf16.msra.mxu0 %v3536
    %3586 = vmatprep.subr.bf16.mxu0 0
    %3587 = vmatpush2.bf16.msra.mxu0 %v3535
    %3588 = vmatprep.subr.bf16.mxu0 0
    %3589 = vmatpush2.bf16.msra.mxu0 %v3534
    %3590 = vmatprep.mubr.bf16.mxu0 %v3422
    %3591 = vmatmul.mubr.bf16.gmra.mxu0 %v3421
    %v3592 = vpop.f32.mrf.mxu0
    %v3593 = vadd.f32 %v3460, %v3592
    %v3594 = vpop.f32.mrf.mxu0
    %v3595 = vpop.f32.mrf.mxu0
    %v3596 = vadd.f32 %v3460, %v3595
    %v3597 = vpop.f32.mrf.mxu0
    %3598 = vdwg.mxu0
    %v3599 = vmax.f32 %v3593, 0.0
    %v3600 = vmax.f32 %v3596, 0.0
    %v3601 = vld [vmem:[%s7] sm:$0x1]
    %v3603 = vlaneseq
    %v3604 = vshrl.u32 %v3603, 7
    %v3605 = vsub.s32 0, %v3604
    %v3606 = vrot.slane %v3601, %v3605
    %v3608 = vmul.f32 %v3599, %v3606
    %v3609 = vmul.f32 %v3600, %v3606
    %3610 = vadd.xlane.f32.xlu0 %v3608
    %v3611 = vpop.xlane.xlu0 %3610
    %3612 = vadd.xlane.f32.xlu0 %v3609
    %v3613 = vpop.xlane.xlu0 %3612
    %v3614 = vld [vmem:[#allocation2] sm:$0x1]
    %v3616 = vlaneseq
    %v3617 = vshrl.u32 %v3616, 7
    %v3618 = vsub.s32 0, %v3617
    %v3619 = vrot.slane %v3614, %v3618
    %v3621 = vadd.f32 %v3611, %v3619
    %v3622 = vadd.f32 %v3613, %v3619
    %vm3623 = vcmask 7168
    %3624 = vst.msk [vmem:[%s9] sm:$0xff] %vm3623, %v3621
    %3625 = vst.msk [vmem:[%s9 + $0x8] sm:$0xff] %vm3623, %v3622
    // Predicated region
    $region54: #{tpu_custom_call.1} parent=1 // pred_check
      _
    $region55: #{tpu_custom_call.1} parent=1 // pred_check_branch
      %3627 = sbr.rel (0) target = $region57
    $region56: #{tpu_custom_call.1} parent=1 // pred_region
      _
    $region57: #{tpu_custom_call.1} parent=1 // pred_fallthru
      _
    // Predicated region
    $region58: #{tpu_custom_call.1} parent=1 // pred_check
      _
    $region59: #{tpu_custom_call.1} parent=1 // pred_check_branch
      %3629 = sbr.rel (0) target = $region61
    $region60: #{tpu_custom_call.1} parent=1 // pred_region
      _
    $region61: #{tpu_custom_call.1} parent=1 // pred_fallthru
      _
    %3630 = vsyncpa [#allocation4], 1
    %3631 = vsyncpa [#allocation6], 1
    %3632 = vsyncpa [#allocation9], 1

</llo_original>
